<compile_context>
chip_gen: v7x
topology: tpu7x:2x2x1
jax: 0.10.0
libtpu: 0.0.40
codegen_flags: <defaults>
</compile_context>

<pallas_src>
import jax
import jax.numpy as jnp
import numpy as np
from jax import lax
from jax.experimental import pallas as pl
from jax.experimental.pallas import tpu as pltpu


def _full_spec(arr):
    zeros = (0,) * arr.ndim
    return pl.BlockSpec(arr.shape, lambda b, z=zeros: z)


def _make_kernel(n_layers, kernel_size, time_step, n_channel, out_dim,
                 layer_in_dims, batch_tile, dot_dtype):
    K, T, C, TB = kernel_size, time_step, n_channel, batch_tile
    rows = TB * T

    def kernel(*refs):
        noise_ref, wlin_ref, blin_ref = refs[:3]
        out_ref = refs[-1]
        p = list(refs[3:-1])

        # nn.Linear(1, T): x[b, t, d] = noise[b, d] * w[t] + bias[t]
        noise = noise_ref[...].astype(jnp.float32)                 # (TB, D)
        D = noise.shape[1]
        x3 = noise[:, None, :] * wlin_ref[...] + blin_ref[...]     # (TB, T, D)
        x = x3.reshape(rows, D)                                    # (TB*T, D)

        # per-row local time index (rows are (batch_tile, T)-flattened); hoisted once
        t_idx = lax.broadcasted_iota(jnp.int32, (TB, T, 1), 1).reshape(rows, 1)

        def causal_shift(v, lag):
            # y[b, t] = v[b, t - lag], zeros for t < lag.  Sublane roll + mask:
            # rows that would leak across batch elements / wrap around are exactly
            # the t < lag rows, which the mask zeroes.
            if lag == 0:
                return v
            if lag >= T:
                return jnp.zeros_like(v)
            rolled = pltpu.roll(v, shift=lag, axis=0)
            return jnp.where(t_idx >= lag, rolled, 0.0)

        def causal_conv(v, wf_ref, b_ref, dil):
            # im2col: K causally shifted copies along lanes -> ONE MXU matmul.
            taps = [causal_shift(v, (K - 1 - j) * dil) for j in range(K)]
            lhs = taps[0] if K == 1 else jnp.concatenate(taps, axis=1)
            acc = jnp.dot(lhs.astype(dot_dtype), wf_ref[...],
                          preferred_element_type=jnp.float32)
            return acc + b_ref[...]

        idx = 0
        for li in range(n_layers):
            cin = layer_in_dims[li]
            dil = 2 ** li
            w1_ref, b1_ref, w2_ref, b2_ref = p[idx:idx + 4]
            idx += 4

            h = jnp.maximum(causal_conv(x, w1_ref, b1_ref, dil), 0.0)
            g = jnp.maximum(causal_conv(h, w2_ref, b2_ref, dil), 0.0)   # dropout=0

            if cin != C:
                wd_ref, bd_ref = p[idx:idx + 2]
                idx += 2
                res = jnp.dot(x.astype(dot_dtype), wd_ref[...],
                              preferred_element_type=jnp.float32) + bd_ref[...]
            else:
                res = x
            x = jnp.maximum(g + res, 0.0)

        # TCN head Linear(C, out_dim), computed transposed so the output store is
        # lane-dense: yT is (out_dim, rows) with lane width rows (multiple of 128).
        woutT_ref, boutT_ref = p[idx], p[idx + 1]
        yT = lax.dot_general(woutT_ref[...], x.astype(dot_dtype),
                             dimension_numbers=(((1,), (1,)), ((), ())),
                             preferred_element_type=jnp.float32) + boutT_ref[...]
        out_ref[0] = yT.astype(out_ref.dtype)

    return kernel


def ts_generator_tcn_forward(noise, params, cfg, *, batch_tile=16, use_bf16=True):
    B = noise.shape[0]
    D = cfg["input_dim"] * cfg["label_dim"]
    T = cfg["time_step"]
    C = cfg["n_channel"]
    K = cfg["kernel_size"]
    n_layers = cfg["n_layers"]
    out_dim = cfg["output_dim"]
    layer_in_dims = [D] + [C] * (n_layers - 1)

    dot_dtype = jnp.bfloat16 if use_bf16 else jnp.float32

    TB = max(1, min(batch_tile, B))           # batch tile; rows per matmul = TB*T
    n_blk = pl.cdiv(B, TB)
    Bp = n_blk * TB
    rows = TB * T

    noise_p = noise.astype(jnp.float32)
    if Bp != B:
        noise_p = jnp.concatenate(
            [noise_p, jnp.zeros((Bp - B, D), jnp.float32)], axis=0)

    # Host-side parameter prep (pure layout plumbing: im2col weight reshape,
    # transposed head, bf16 cast of matmul operands).
    w_lin = params["w_lin"].reshape(1, T, 1).astype(jnp.float32)
    b_lin = params["b_lin"].reshape(1, T, 1).astype(jnp.float32)

    inputs = [noise_p, w_lin, b_lin]
    in_specs = [
        pl.BlockSpec((TB, D), lambda b: (b, 0)),
        _full_spec(w_lin),
        _full_spec(b_lin),
    ]
    for li in range(n_layers):
        lp = params["layers"][li]
        cin = layer_in_dims[li]
        w1f = lp["w1"].reshape(K * cin, C).astype(dot_dtype)   # (K*Cin, C) im2col weight
        w2f = lp["w2"].reshape(K * C, C).astype(dot_dtype)
        for arr in (w1f, lp["b1"].astype(jnp.float32),
                    w2f, lp["b2"].astype(jnp.float32)):
            inputs.append(arr)
            in_specs.append(_full_spec(arr))
        if cin != C:
            for arr in (lp["wd"].astype(dot_dtype), lp["bd"].astype(jnp.float32)):
                inputs.append(arr)
                in_specs.append(_full_spec(arr))
    w_outT = params["w_out"].T.astype(dot_dtype)               # (out_dim, C)
    b_outT = params["b_out"].reshape(out_dim, 1).astype(jnp.float32)
    inputs += [w_outT, b_outT]
    in_specs += [_full_spec(w_outT), _full_spec(b_outT)]

    kernel = _make_kernel(n_layers, K, T, C, out_dim, layer_in_dims, TB, dot_dtype)

    out = pl.pallas_call(
        kernel,
        out_shape=jax.ShapeDtypeStruct((n_blk, out_dim, rows), jnp.float32),
        grid_spec=pltpu.PrefetchScalarGridSpec(
            num_scalar_prefetch=0,
            grid=(n_blk,),
            in_specs=in_specs,
            out_specs=pl.BlockSpec((1, out_dim, rows), lambda b: (b, 0, 0)),
        ),
        compiler_params=pltpu.CompilerParams(
            dimension_semantics=("parallel",)),
    )(*inputs)

    # (n_blk, out_dim, TB*T) -> (B, T, out_dim)  (wrapper-side layout plumbing)
    out = out.reshape(n_blk, out_dim, TB, T)
    out = jnp.transpose(out, (0, 2, 3, 1)).reshape(Bp, T, out_dim)
    return out[:B]


def init_params(key, cfg):
    D = cfg["input_dim"] * cfg["label_dim"]
    T = cfg["time_step"]
    C = cfg["n_channel"]
    K = cfg["kernel_size"]
    n_layers = cfg["n_layers"]
    out_dim = cfg["output_dim"]
    layer_in_dims = [D] + [C] * (n_layers - 1)

    keys = iter(jax.random.split(key, 8 + 8 * n_layers))

    def nrm(shape, scale=0.1):
        return (scale * jax.random.normal(next(keys), shape)).astype(jnp.float32)

    # NOTE: weight_norm is a pure reparameterization (identity at init) and
    # dropout=0 is identity, so plain weights reproduce forward semantics.
    params = {
        "w_lin": nrm((T, 1)),            # nn.Linear(1, T).weight is (T, 1)
        "b_lin": nrm((T, 1)),            # nn.Linear(1, T).bias   is (T,)
        "layers": [],
        "w_out": nrm((C, out_dim)),      # TCN head Linear(C, out_dim), transposed
        "b_out": nrm((1, out_dim)),
    }
    for li in range(n_layers):
        cin = layer_in_dims[li]
        lp = {
            "w1": nrm((K, cin, C)),      # torch Conv1d weight (C, cin, K) -> (K, cin, C)
            "b1": nrm((1, C)),
            "w2": nrm((K, C, C)),
            "b2": nrm((1, C)),
        }
        if cin != C:
            lp["wd"] = nrm((cin, C))     # 1x1 downsample conv (C, cin, 1) -> (cin, C)
            lp["bd"] = nrm((1, C))
        params["layers"].append(lp)
    return params


def reference_forward(noise, params, cfg, dot_dtype=jnp.float32):
    """Pure-JAX reference with identical semantics (optionally bf16 matmul operands)."""
    B = noise.shape[0]
    T = cfg["time_step"]
    n_layers = cfg["n_layers"]
    wlin = params["w_lin"][:, 0]
    blin = params["b_lin"][:, 0]
    x = noise[:, None, :] * wlin[None, :, None] + blin[None, :, None]  # (B, T, D)

    def mm(a, w):
        return jnp.einsum("btc,cd->btd", a.astype(dot_dtype), w.astype(dot_dtype),
                          preferred_element_type=jnp.float32)

    def conv(inp, w, b, dil):
        K = w.shape[0]
        acc = jnp.zeros((B, T, w.shape[2]), jnp.float32) + b[None]
        for j in range(K):
            lag = (K - 1 - j) * dil
            if lag == 0:
                xs = inp
            elif lag >= T:
                xs = jnp.zeros_like(inp)
            else:
                xs = jnp.concatenate(
                    [jnp.zeros((B, lag, inp.shape[2]), inp.dtype),
                     inp[:, :T - lag, :]], axis=1)
            acc = acc + mm(xs, w[j])
        return acc

    for li in range(n_layers):
        lp = params["layers"][li]
        dil = 2 ** li
        res = x
        h = jax.nn.relu(conv(x, lp["w1"], lp["b1"], dil))
        g = jax.nn.relu(conv(h, lp["w2"], lp["b2"], dil))
        if "wd" in lp:
            res = mm(res, lp["wd"]) + lp["bd"][None]
        x = jax.nn.relu(g + res)
    return mm(x, params["w_out"]) + params["b_out"][None]


if __name__ == "__main__":
    cfg = dict(input_dim=4, label_dim=2, output_dim=1, time_step=16,
               n_layers=2, n_channel=32, kernel_size=3, dropout=0.0)
    key = jax.random.PRNGKey(0)
    pkey, nkey = jax.random.split(key)
    params = init_params(pkey, cfg)

    B = 32                                   # 2 batch tiles of 16 -> grid=(2,), both "parallel"
    D = cfg["input_dim"] * cfg["label_dim"]
    noise = jax.random.normal(nkey, (B, D), dtype=jnp.float32)

    fwd = jax.jit(lambda n: ts_generator_tcn_forward(n, params, cfg))
    out = jax.block_until_ready(fwd(noise))
    assert out.shape == (B, cfg["time_step"], cfg["output_dim"])

    # structural check: reference with matching bf16 matmul-operand rounding
    ref_bf16 = reference_forward(noise, params, cfg, dot_dtype=jnp.bfloat16)
    np.testing.assert_allclose(np.asarray(out), np.asarray(ref_bf16),
                               rtol=1e-3, atol=1e-4)
    # semantic check vs the pure-f32 PyTorch-equivalent forward (loose tol for bf16 dots)
    ref_f32 = reference_forward(noise, params, cfg)
    np.testing.assert_allclose(np.asarray(out), np.asarray(ref_f32),
                               rtol=3e-2, atol=3e-2)
    print("KERNEL_OK")
</pallas_src>

<mosaic_0001>
module attributes {stable_mosaic.version = 11 : i64} {
  func.func @kernel(%arg0: i32, %arg1: memref<16x8xf32, #tpu.memory_space<vmem>>, %arg2: memref<1x16x1xf32, #tpu.memory_space<vmem>>, %arg3: memref<1x16x1xf32, #tpu.memory_space<vmem>>, %arg4: memref<24x32xbf16, #tpu.memory_space<vmem>>, %arg5: memref<1x32xf32, #tpu.memory_space<vmem>>, %arg6: memref<96x32xbf16, #tpu.memory_space<vmem>>, %arg7: memref<1x32xf32, #tpu.memory_space<vmem>>, %arg8: memref<8x32xbf16, #tpu.memory_space<vmem>>, %arg9: memref<1x32xf32, #tpu.memory_space<vmem>>, %arg10: memref<96x32xbf16, #tpu.memory_space<vmem>>, %arg11: memref<1x32xf32, #tpu.memory_space<vmem>>, %arg12: memref<96x32xbf16, #tpu.memory_space<vmem>>, %arg13: memref<1x32xf32, #tpu.memory_space<vmem>>, %arg14: memref<1x32xbf16, #tpu.memory_space<vmem>>, %arg15: memref<1x1xf32, #tpu.memory_space<vmem>>, %arg16: memref<1x1x256xf32, #tpu.memory_space<vmem>>) attributes {dimension_semantics = [#tpu.dimension_semantics<parallel>], iteration_bounds = array<i64: 2>, scalar_prefetch = 0 : i64, scratch_operands = 0 : i64, tpu.core_type = #tpu.core_type<tc>, window_params = [{transform_indices = @transform_0, window_bounds = array<i64: 16, 8>}, {pipeline_mode = #tpu.pipeline_mode<synchronous>, transform_indices = @transform_1, window_bounds = array<i64: 1, 16, 1>}, {pipeline_mode = #tpu.pipeline_mode<synchronous>, transform_indices = @transform_2, window_bounds = array<i64: 1, 16, 1>}, {pipeline_mode = #tpu.pipeline_mode<synchronous>, transform_indices = @transform_3, window_bounds = array<i64: 24, 32>}, {pipeline_mode = #tpu.pipeline_mode<synchronous>, transform_indices = @transform_4, window_bounds = array<i64: 1, 32>}, {pipeline_mode = #tpu.pipeline_mode<synchronous>, transform_indices = @transform_5, window_bounds = array<i64: 96, 32>}, {pipeline_mode = #tpu.pipeline_mode<synchronous>, transform_indices = @transform_6, window_bounds = array<i64: 1, 32>}, {pipeline_mode = #tpu.pipeline_mode<synchronous>, transform_indices = @transform_7, window_bounds = array<i64: 8, 32>}, {pipeline_mode = #tpu.pipeline_mode<synchronous>, transform_indices = @transform_8, window_bounds = array<i64: 1, 32>}, {pipeline_mode = #tpu.pipeline_mode<synchronous>, transform_indices = @transform_9, window_bounds = array<i64: 96, 32>}, {pipeline_mode = #tpu.pipeline_mode<synchronous>, transform_indices = @transform_10, window_bounds = array<i64: 1, 32>}, {pipeline_mode = #tpu.pipeline_mode<synchronous>, transform_indices = @transform_11, window_bounds = array<i64: 96, 32>}, {pipeline_mode = #tpu.pipeline_mode<synchronous>, transform_indices = @transform_12, window_bounds = array<i64: 1, 32>}, {pipeline_mode = #tpu.pipeline_mode<synchronous>, transform_indices = @transform_13, window_bounds = array<i64: 1, 32>}, {pipeline_mode = #tpu.pipeline_mode<synchronous>, transform_indices = @transform_14, window_bounds = array<i64: 1, 1>}, {transform_indices = @transform_15, window_bounds = array<i64: 1, 1, 256>}]} {
    %c0 = arith.constant 0 : index
    %c0_0 = arith.constant 0 : index
    %0 = vector.load %arg1[%c0, %c0_0] : memref<16x8xf32, #tpu.memory_space<vmem>>, vector<16x8xf32>
    %1 = vector.shape_cast %0 : vector<16x8xf32> to vector<16x1x8xf32>
    %c0_1 = arith.constant 0 : index
    %c0_2 = arith.constant 0 : index
    %c0_3 = arith.constant 0 : index
    %2 = vector.load %arg2[%c0_1, %c0_2, %c0_3] : memref<1x16x1xf32, #tpu.memory_space<vmem>>, vector<1x16x1xf32>
    %3 = vector.broadcast %1 : vector<16x1x8xf32> to vector<16x16x8xf32>
    %4 = vector.broadcast %2 : vector<1x16x1xf32> to vector<16x16x8xf32>
    %5 = arith.mulf %3, %4 : vector<16x16x8xf32>
    %c0_4 = arith.constant 0 : index
    %c0_5 = arith.constant 0 : index
    %c0_6 = arith.constant 0 : index
    %6 = vector.load %arg3[%c0_4, %c0_5, %c0_6] : memref<1x16x1xf32, #tpu.memory_space<vmem>>, vector<1x16x1xf32>
    %7 = vector.broadcast %6 : vector<1x16x1xf32> to vector<16x16x8xf32>
    %8 = arith.addf %5, %7 : vector<16x16x8xf32>
    %9 = vector.shape_cast %8 : vector<16x16x8xf32> to vector<256x8xf32>
    %10 = tpu.iota {dimensions = array<i32: 1>} : vector<16x16x1xi32>
    %11 = vector.shape_cast %10 : vector<16x16x1xi32> to vector<256x1xi32>
    %c2_i32 = arith.constant 2 : i32
    %12 = tpu.dynamic_rotate %9 by %c2_i32 dim 0 : vector<256x8xf32>, i32 -> vector<256x8xf32>
    %c2_i32_7 = arith.constant 2 : i32
    %13 = vector.broadcast %c2_i32_7 : i32 to vector<256x1xi32>
    %14 = arith.cmpi sge, %11, %13 : vector<256x1xi32>
    %cst = arith.constant 0.000000e+00 : f32
    %15 = vector.shape_cast %14 : vector<256x1xi1> to vector<256x1xi1>
    %16 = vector.broadcast %15 : vector<256x1xi1> to vector<256x8xi1>
    %17 = vector.broadcast %cst : f32 to vector<256x8xf32>
    %18 = arith.select %16, %12, %17 : vector<256x8xi1>, vector<256x8xf32>
    %c1_i32 = arith.constant 1 : i32
    %19 = tpu.dynamic_rotate %9 by %c1_i32 dim 0 : vector<256x8xf32>, i32 -> vector<256x8xf32>
    %c1_i32_8 = arith.constant 1 : i32
    %20 = vector.broadcast %c1_i32_8 : i32 to vector<256x1xi32>
    %21 = arith.cmpi sge, %11, %20 : vector<256x1xi32>
    %cst_9 = arith.constant 0.000000e+00 : f32
    %22 = vector.shape_cast %21 : vector<256x1xi1> to vector<256x1xi1>
    %23 = vector.broadcast %22 : vector<256x1xi1> to vector<256x8xi1>
    %24 = vector.broadcast %cst_9 : f32 to vector<256x8xf32>
    %25 = arith.select %23, %19, %24 : vector<256x8xi1>, vector<256x8xf32>
    %26 = tpu.concatenate %18, %25, %9 in 1 : vector<256x8xf32>, vector<256x8xf32>, vector<256x8xf32> -> vector<256x24xf32>
    %27 = arith.truncf %26 : vector<256x24xf32> to vector<256x24xbf16>
    %c0_10 = arith.constant 0 : index
    %c0_11 = arith.constant 0 : index
    %28 = vector.load %arg4[%c0_10, %c0_11] : memref<24x32xbf16, #tpu.memory_space<vmem>>, vector<24x32xbf16>
    %cst_12 = arith.constant dense<0.000000e+00> : vector<256x32xf32>
    %29 = tpu.matmul %27, %28, %cst_12 {dimension_numbers = #tpu.dot_dimension_numbers<[1], [0], [0], [1], [0, 0, 1, 1], [], []>} : vector<256x24xbf16>, vector<24x32xbf16>, vector<256x32xf32> -> vector<256x32xf32>
    %c0_13 = arith.constant 0 : index
    %c0_14 = arith.constant 0 : index
    %30 = vector.load %arg5[%c0_13, %c0_14] : memref<1x32xf32, #tpu.memory_space<vmem>>, vector<1x32xf32>
    %31 = vector.broadcast %30 : vector<1x32xf32> to vector<256x32xf32>
    %32 = arith.addf %29, %31 : vector<256x32xf32>
    %cst_15 = arith.constant 0.000000e+00 : f32
    %33 = vector.broadcast %cst_15 : f32 to vector<256x32xf32>
    %34 = arith.maximumf %32, %33 : vector<256x32xf32>
    %c2_i32_16 = arith.constant 2 : i32
    %35 = tpu.dynamic_rotate %34 by %c2_i32_16 dim 0 : vector<256x32xf32>, i32 -> vector<256x32xf32>
    %c2_i32_17 = arith.constant 2 : i32
    %36 = vector.broadcast %c2_i32_17 : i32 to vector<256x1xi32>
    %37 = arith.cmpi sge, %11, %36 : vector<256x1xi32>
    %cst_18 = arith.constant 0.000000e+00 : f32
    %38 = vector.shape_cast %37 : vector<256x1xi1> to vector<256x1xi1>
    %39 = vector.broadcast %38 : vector<256x1xi1> to vector<256x32xi1>
    %40 = vector.broadcast %cst_18 : f32 to vector<256x32xf32>
    %41 = arith.select %39, %35, %40 : vector<256x32xi1>, vector<256x32xf32>
    %c1_i32_19 = arith.constant 1 : i32
    %42 = tpu.dynamic_rotate %34 by %c1_i32_19 dim 0 : vector<256x32xf32>, i32 -> vector<256x32xf32>
    %c1_i32_20 = arith.constant 1 : i32
    %43 = vector.broadcast %c1_i32_20 : i32 to vector<256x1xi32>
    %44 = arith.cmpi sge, %11, %43 : vector<256x1xi32>
    %cst_21 = arith.constant 0.000000e+00 : f32
    %45 = vector.shape_cast %44 : vector<256x1xi1> to vector<256x1xi1>
    %46 = vector.broadcast %45 : vector<256x1xi1> to vector<256x32xi1>
    %47 = vector.broadcast %cst_21 : f32 to vector<256x32xf32>
    %48 = arith.select %46, %42, %47 : vector<256x32xi1>, vector<256x32xf32>
    %49 = tpu.concatenate %41, %48, %34 in 1 : vector<256x32xf32>, vector<256x32xf32>, vector<256x32xf32> -> vector<256x96xf32>
    %50 = arith.truncf %49 : vector<256x96xf32> to vector<256x96xbf16>
    %c0_22 = arith.constant 0 : index
    %c0_23 = arith.constant 0 : index
    %51 = vector.load %arg6[%c0_22, %c0_23] : memref<96x32xbf16, #tpu.memory_space<vmem>>, vector<96x32xbf16>
    %cst_24 = arith.constant dense<0.000000e+00> : vector<256x32xf32>
    %52 = tpu.matmul %50, %51, %cst_24 {dimension_numbers = #tpu.dot_dimension_numbers<[1], [0], [0], [1], [0, 0, 1, 1], [], []>} : vector<256x96xbf16>, vector<96x32xbf16>, vector<256x32xf32> -> vector<256x32xf32>
    %c0_25 = arith.constant 0 : index
    %c0_26 = arith.constant 0 : index
    %53 = vector.load %arg7[%c0_25, %c0_26] : memref<1x32xf32, #tpu.memory_space<vmem>>, vector<1x32xf32>
    %54 = vector.broadcast %53 : vector<1x32xf32> to vector<256x32xf32>
    %55 = arith.addf %52, %54 : vector<256x32xf32>
    %cst_27 = arith.constant 0.000000e+00 : f32
    %56 = vector.broadcast %cst_27 : f32 to vector<256x32xf32>
    %57 = arith.maximumf %55, %56 : vector<256x32xf32>
    %58 = arith.truncf %9 : vector<256x8xf32> to vector<256x8xbf16>
    %c0_28 = arith.constant 0 : index
    %c0_29 = arith.constant 0 : index
    %59 = vector.load %arg8[%c0_28, %c0_29] : memref<8x32xbf16, #tpu.memory_space<vmem>>, vector<8x32xbf16>
    %cst_30 = arith.constant dense<0.000000e+00> : vector<256x32xf32>
    %60 = tpu.matmul %58, %59, %cst_30 {dimension_numbers = #tpu.dot_dimension_numbers<[1], [0], [0], [1], [0, 0, 1, 1], [], []>} : vector<256x8xbf16>, vector<8x32xbf16>, vector<256x32xf32> -> vector<256x32xf32>
    %c0_31 = arith.constant 0 : index
    %c0_32 = arith.constant 0 : index
    %61 = vector.load %arg9[%c0_31, %c0_32] : memref<1x32xf32, #tpu.memory_space<vmem>>, vector<1x32xf32>
    %62 = vector.broadcast %61 : vector<1x32xf32> to vector<256x32xf32>
    %63 = arith.addf %60, %62 : vector<256x32xf32>
    %64 = arith.addf %57, %63 : vector<256x32xf32>
    %cst_33 = arith.constant 0.000000e+00 : f32
    %65 = vector.broadcast %cst_33 : f32 to vector<256x32xf32>
    %66 = arith.maximumf %64, %65 : vector<256x32xf32>
    %c4_i32 = arith.constant 4 : i32
    %67 = tpu.dynamic_rotate %66 by %c4_i32 dim 0 : vector<256x32xf32>, i32 -> vector<256x32xf32>
    %c4_i32_34 = arith.constant 4 : i32
    %68 = vector.broadcast %c4_i32_34 : i32 to vector<256x1xi32>
    %69 = arith.cmpi sge, %11, %68 : vector<256x1xi32>
    %cst_35 = arith.constant 0.000000e+00 : f32
    %70 = vector.shape_cast %69 : vector<256x1xi1> to vector<256x1xi1>
    %71 = vector.broadcast %70 : vector<256x1xi1> to vector<256x32xi1>
    %72 = vector.broadcast %cst_35 : f32 to vector<256x32xf32>
    %73 = arith.select %71, %67, %72 : vector<256x32xi1>, vector<256x32xf32>
    %c2_i32_36 = arith.constant 2 : i32
    %74 = tpu.dynamic_rotate %66 by %c2_i32_36 dim 0 : vector<256x32xf32>, i32 -> vector<256x32xf32>
    %c2_i32_37 = arith.constant 2 : i32
    %75 = vector.broadcast %c2_i32_37 : i32 to vector<256x1xi32>
    %76 = arith.cmpi sge, %11, %75 : vector<256x1xi32>
    %cst_38 = arith.constant 0.000000e+00 : f32
    %77 = vector.shape_cast %76 : vector<256x1xi1> to vector<256x1xi1>
    %78 = vector.broadcast %77 : vector<256x1xi1> to vector<256x32xi1>
    %79 = vector.broadcast %cst_38 : f32 to vector<256x32xf32>
    %80 = arith.select %78, %74, %79 : vector<256x32xi1>, vector<256x32xf32>
    %81 = tpu.concatenate %73, %80, %66 in 1 : vector<256x32xf32>, vector<256x32xf32>, vector<256x32xf32> -> vector<256x96xf32>
    %82 = arith.truncf %81 : vector<256x96xf32> to vector<256x96xbf16>
    %c0_39 = arith.constant 0 : index
    %c0_40 = arith.constant 0 : index
    %83 = vector.load %arg10[%c0_39, %c0_40] : memref<96x32xbf16, #tpu.memory_space<vmem>>, vector<96x32xbf16>
    %cst_41 = arith.constant dense<0.000000e+00> : vector<256x32xf32>
    %84 = tpu.matmul %82, %83, %cst_41 {dimension_numbers = #tpu.dot_dimension_numbers<[1], [0], [0], [1], [0, 0, 1, 1], [], []>} : vector<256x96xbf16>, vector<96x32xbf16>, vector<256x32xf32> -> vector<256x32xf32>
    %c0_42 = arith.constant 0 : index
    %c0_43 = arith.constant 0 : index
    %85 = vector.load %arg11[%c0_42, %c0_43] : memref<1x32xf32, #tpu.memory_space<vmem>>, vector<1x32xf32>
    %86 = vector.broadcast %85 : vector<1x32xf32> to vector<256x32xf32>
    %87 = arith.addf %84, %86 : vector<256x32xf32>
    %cst_44 = arith.constant 0.000000e+00 : f32
    %88 = vector.broadcast %cst_44 : f32 to vector<256x32xf32>
    %89 = arith.maximumf %87, %88 : vector<256x32xf32>
    %c4_i32_45 = arith.constant 4 : i32
    %90 = tpu.dynamic_rotate %89 by %c4_i32_45 dim 0 : vector<256x32xf32>, i32 -> vector<256x32xf32>
    %c4_i32_46 = arith.constant 4 : i32
    %91 = vector.broadcast %c4_i32_46 : i32 to vector<256x1xi32>
    %92 = arith.cmpi sge, %11, %91 : vector<256x1xi32>
    %cst_47 = arith.constant 0.000000e+00 : f32
    %93 = vector.shape_cast %92 : vector<256x1xi1> to vector<256x1xi1>
    %94 = vector.broadcast %93 : vector<256x1xi1> to vector<256x32xi1>
    %95 = vector.broadcast %cst_47 : f32 to vector<256x32xf32>
    %96 = arith.select %94, %90, %95 : vector<256x32xi1>, vector<256x32xf32>
    %c2_i32_48 = arith.constant 2 : i32
    %97 = tpu.dynamic_rotate %89 by %c2_i32_48 dim 0 : vector<256x32xf32>, i32 -> vector<256x32xf32>
    %c2_i32_49 = arith.constant 2 : i32
    %98 = vector.broadcast %c2_i32_49 : i32 to vector<256x1xi32>
    %99 = arith.cmpi sge, %11, %98 : vector<256x1xi32>
    %cst_50 = arith.constant 0.000000e+00 : f32
    %100 = vector.shape_cast %99 : vector<256x1xi1> to vector<256x1xi1>
    %101 = vector.broadcast %100 : vector<256x1xi1> to vector<256x32xi1>
    %102 = vector.broadcast %cst_50 : f32 to vector<256x32xf32>
    %103 = arith.select %101, %97, %102 : vector<256x32xi1>, vector<256x32xf32>
    %104 = tpu.concatenate %96, %103, %89 in 1 : vector<256x32xf32>, vector<256x32xf32>, vector<256x32xf32> -> vector<256x96xf32>
    %105 = arith.truncf %104 : vector<256x96xf32> to vector<256x96xbf16>
    %c0_51 = arith.constant 0 : index
    %c0_52 = arith.constant 0 : index
    %106 = vector.load %arg12[%c0_51, %c0_52] : memref<96x32xbf16, #tpu.memory_space<vmem>>, vector<96x32xbf16>
    %cst_53 = arith.constant dense<0.000000e+00> : vector<256x32xf32>
    %107 = tpu.matmul %105, %106, %cst_53 {dimension_numbers = #tpu.dot_dimension_numbers<[1], [0], [0], [1], [0, 0, 1, 1], [], []>} : vector<256x96xbf16>, vector<96x32xbf16>, vector<256x32xf32> -> vector<256x32xf32>
    %c0_54 = arith.constant 0 : index
    %c0_55 = arith.constant 0 : index
    %108 = vector.load %arg13[%c0_54, %c0_55] : memref<1x32xf32, #tpu.memory_space<vmem>>, vector<1x32xf32>
    %109 = vector.broadcast %108 : vector<1x32xf32> to vector<256x32xf32>
    %110 = arith.addf %107, %109 : vector<256x32xf32>
    %cst_56 = arith.constant 0.000000e+00 : f32
    %111 = vector.broadcast %cst_56 : f32 to vector<256x32xf32>
    %112 = arith.maximumf %110, %111 : vector<256x32xf32>
    %113 = arith.addf %112, %66 : vector<256x32xf32>
    %cst_57 = arith.constant 0.000000e+00 : f32
    %114 = vector.broadcast %cst_57 : f32 to vector<256x32xf32>
    %115 = arith.maximumf %113, %114 : vector<256x32xf32>
    %c0_58 = arith.constant 0 : index
    %c0_59 = arith.constant 0 : index
    %116 = vector.load %arg14[%c0_58, %c0_59] : memref<1x32xbf16, #tpu.memory_space<vmem>>, vector<1x32xbf16>
    %117 = arith.truncf %115 : vector<256x32xf32> to vector<256x32xbf16>
    %cst_60 = arith.constant dense<0.000000e+00> : vector<1x256xf32>
    %118 = tpu.matmul %116, %117, %cst_60 {dimension_numbers = #tpu.dot_dimension_numbers<[1], [1], [0], [0], [0, 0, 1, 0], [], []>} : vector<1x32xbf16>, vector<256x32xbf16>, vector<1x256xf32> -> vector<1x256xf32>
    %c0_61 = arith.constant 0 : index
    %c0_62 = arith.constant 0 : index
    %119 = vector.load %arg15[%c0_61, %c0_62] : memref<1x1xf32, #tpu.memory_space<vmem>>, vector<1x1xf32>
    %120 = vector.broadcast %119 : vector<1x1xf32> to vector<1x256xf32>
    %121 = arith.addf %118, %120 : vector<1x256xf32>
    %c0_63 = arith.constant 0 : index
    %c0_64 = arith.constant 0 : index
    %c0_65 = arith.constant 0 : index
    %122 = vector.load %arg16[%c0_63, %c0_64, %c0_65] : memref<1x1x256xf32, #tpu.memory_space<vmem>>, vector<1x1x256xf32>
    %123 = vector.shape_cast %122 : vector<1x1x256xf32> to vector<1x256xf32>
    %124 = vector.shape_cast %121 : vector<1x256xf32> to vector<1x1x256xf32>
    tpu.vector_store %arg16[%c0_63, %c0_64, %c0_65], %124 {strides = array<i32>} : memref<1x1x256xf32, #tpu.memory_space<vmem>>, vector<1x1x256xf32>,
    return
  }
  func.func @transform_0(%arg0: i32) -> (i32, i32) {
    %c0_i32 = arith.constant 0 : i32
    %c0_i32_0 = arith.constant 0 : i32
    return %arg0, %c0_i32 : i32, i32
  }
  func.func @transform_1(%arg0: i32) -> (i32, i32, i32) {
    %c0_i32 = arith.constant 0 : i32
    %c0_i32_0 = arith.constant 0 : i32
    %c0_i32_1 = arith.constant 0 : i32
    %c0_i32_2 = arith.constant 0 : i32
    return %c0_i32, %c0_i32_0, %c0_i32_1 : i32, i32, i32
  }
  func.func @transform_2(%arg0: i32) -> (i32, i32, i32) {
    %c0_i32 = arith.constant 0 : i32
    %c0_i32_0 = arith.constant 0 : i32
    %c0_i32_1 = arith.constant 0 : i32
    %c0_i32_2 = arith.constant 0 : i32
    return %c0_i32, %c0_i32_0, %c0_i32_1 : i32, i32, i32
  }
  func.func @transform_3(%arg0: i32) -> (i32, i32) {
    %c0_i32 = arith.constant 0 : i32
    %c0_i32_0 = arith.constant 0 : i32
    %c0_i32_1 = arith.constant 0 : i32
    return %c0_i32, %c0_i32_0 : i32, i32
  }
  func.func @transform_4(%arg0: i32) -> (i32, i32) {
    %c0_i32 = arith.constant 0 : i32
    %c0_i32_0 = arith.constant 0 : i32
    %c0_i32_1 = arith.constant 0 : i32
    return %c0_i32, %c0_i32_0 : i32, i32
  }
  func.func @transform_5(%arg0: i32) -> (i32, i32) {
    %c0_i32 = arith.constant 0 : i32
    %c0_i32_0 = arith.constant 0 : i32
    %c0_i32_1 = arith.constant 0 : i32
    return %c0_i32, %c0_i32_0 : i32, i32
  }
  func.func @transform_6(%arg0: i32) -> (i32, i32) {
    %c0_i32 = arith.constant 0 : i32
    %c0_i32_0 = arith.constant 0 : i32
    %c0_i32_1 = arith.constant 0 : i32
    return %c0_i32, %c0_i32_0 : i32, i32
  }
  func.func @transform_7(%arg0: i32) -> (i32, i32) {
    %c0_i32 = arith.constant 0 : i32
    %c0_i32_0 = arith.constant 0 : i32
    %c0_i32_1 = arith.constant 0 : i32
    return %c0_i32, %c0_i32_0 : i32, i32
  }
  func.func @transform_8(%arg0: i32) -> (i32, i32) {
    %c0_i32 = arith.constant 0 : i32
    %c0_i32_0 = arith.constant 0 : i32
    %c0_i32_1 = arith.constant 0 : i32
    return %c0_i32, %c0_i32_0 : i32, i32
  }
  func.func @transform_9(%arg0: i32) -> (i32, i32) {
    %c0_i32 = arith.constant 0 : i32
    %c0_i32_0 = arith.constant 0 : i32
    %c0_i32_1 = arith.constant 0 : i32
    return %c0_i32, %c0_i32_0 : i32, i32
  }
  func.func @transform_10(%arg0: i32) -> (i32, i32) {
    %c0_i32 = arith.constant 0 : i32
    %c0_i32_0 = arith.constant 0 : i32
    %c0_i32_1 = arith.constant 0 : i32
    return %c0_i32, %c0_i32_0 : i32, i32
  }
  func.func @transform_11(%arg0: i32) -> (i32, i32) {
    %c0_i32 = arith.constant 0 : i32
    %c0_i32_0 = arith.constant 0 : i32
    %c0_i32_1 = arith.constant 0 : i32
    return %c0_i32, %c0_i32_0 : i32, i32
  }
  func.func @transform_12(%arg0: i32) -> (i32, i32) {
    %c0_i32 = arith.constant 0 : i32
    %c0_i32_0 = arith.constant 0 : i32
    %c0_i32_1 = arith.constant 0 : i32
    return %c0_i32, %c0_i32_0 : i32, i32
  }
  func.func @transform_13(%arg0: i32) -> (i32, i32) {
    %c0_i32 = arith.constant 0 : i32
    %c0_i32_0 = arith.constant 0 : i32
    %c0_i32_1 = arith.constant 0 : i32
    return %c0_i32, %c0_i32_0 : i32, i32
  }
  func.func @transform_14(%arg0: i32) -> (i32, i32) {
    %c0_i32 = arith.constant 0 : i32
    %c0_i32_0 = arith.constant 0 : i32
    %c0_i32_1 = arith.constant 0 : i32
    return %c0_i32, %c0_i32_0 : i32, i32
  }
  func.func @transform_15(%arg0: i32) -> (i32, i32, i32) {
    %c0_i32 = arith.constant 0 : i32
    %c0_i32_0 = arith.constant 0 : i32
    %c0_i32_1 = arith.constant 0 : i32
    return %arg0, %c0_i32, %c0_i32_0 : i32, i32, i32
  }
}

</mosaic_0001>

<llo_original>
// kernel: _lambda_.1
$region0: #{_lambda_.1}
  #allocation0 [shape = 'u32[]', space=smem, size = 0x4, offset = 0x4, fixed_abs, tag = 'smem constant byte address 0x4 - core index']
  #allocation1 [shape = 'u32[144,128]{1,0:T(1,128)}', space=vmem, size = 0x12000, scoped, tag = 'internal scratch']
  #allocation2 [shape = 'f32[1,1]{1,0:T(1,128)S(1)}', space=vmem, size = 0x200, scoped, tag = 'scoped memory for _lambda_.1']
  %s0 = inlined_call_operand.vmem [shape: f32[32,8], index: 0, kind: input, shape index: {}]
  %s1 = inlined_call_operand.hbm [shape: f32[1,16,1], index: 1, kind: input, shape index: {}]
  %s2 = inlined_call_operand.hbm [shape: f32[1,16,1], index: 2, kind: input, shape index: {}]
  %s3 = inlined_call_operand.hbm [shape: bf16[24,32], index: 3, kind: input, shape index: {}]
  %s4 = inlined_call_operand.hbm [shape: f32[1,32], index: 4, kind: input, shape index: {}]
  %s5 = inlined_call_operand.hbm [shape: bf16[96,32], index: 5, kind: input, shape index: {}]
  %s6 = inlined_call_operand.hbm [shape: f32[1,32], index: 6, kind: input, shape index: {}]
  %s7 = inlined_call_operand.hbm [shape: bf16[8,32], index: 7, kind: input, shape index: {}]
  %s8 = inlined_call_operand.hbm [shape: f32[1,32], index: 8, kind: input, shape index: {}]
  %s9 = inlined_call_operand.vmem [shape: bf16[96,32], index: 9, kind: input, shape index: {}]
  %s10 = inlined_call_operand.hbm [shape: f32[1,32], index: 10, kind: input, shape index: {}]
  %s11 = inlined_call_operand.vmem [shape: bf16[96,32], index: 11, kind: input, shape index: {}]
  %s12 = inlined_call_operand.hbm [shape: f32[1,32], index: 12, kind: input, shape index: {}]
  %s13 = inlined_call_operand.hbm [shape: bf16[1,32], index: 13, kind: input, shape index: {}]
  %s14 = inlined_call_operand.<no memory space> [shape: f32[1,1], index: 14, kind: input, shape index: {}]
  %s15 = inlined_call_operand.vmem [shape: f32[2,1,256], index: 15, kind: output, shape index: {}]
  %s16 = sld [smem:[#allocation0]]
  $region137: #{_lambda_.1} parent=0
    _
  %s18 = ssub.s32 1, %s16
  %s19 = scalar_select 0, %s18, %s16
  %v20 = vstv %s14
  %21 = vst [vmem:[#allocation2] sm:$0x1] %v20
  $region1: #{_lambda_.1} parent=0
    #allocation3 [shape = 'u8[8192]{0}', space=vmem, size = 0x2000, scoped, tag = 'input window, operand 1, single buffered']
    #allocation4 [shape = 's32[2]{0}', space=sflag, size = 0x8, scoped, tag = 'scoped memory for _lambda_.1']
    #allocation5 [shape = 'u8[8192]{0}', space=vmem, size = 0x2000, scoped, tag = 'input window, operand 2, single buffered']
    #allocation6 [shape = 's32[1]{0}', space=sflag, size = 0x4, scoped, tag = 'scoped memory for _lambda_.1']
    #allocation7 [shape = 'u8[6144]{0}', space=vmem, size = 0x1800, scoped, tag = 'input window, operand 3, single buffered']
    #allocation8 [shape = 'u8[512]{0}', space=vmem, size = 0x400, scoped, tag = 'input window, operand 4, single buffered']
    #allocation9 [shape = 's32[1]{0}', space=sflag, size = 0x4, scoped, tag = 'scoped memory for _lambda_.1']
    #allocation10 [shape = 'u8[24576]{0}', space=vmem, size = 0x6000, scoped, tag = 'input window, operand 5, single buffered']
    #allocation11 [shape = 'u8[512]{0}', space=vmem, size = 0x400, scoped, tag = 'input window, operand 6, single buffered']
    #allocation12 [shape = 's32[1]{0}', space=sflag, size = 0x4, scoped, tag = 'scoped memory for _lambda_.1']
    #allocation13 [shape = 'u8[2048]{0}', space=vmem, size = 0x800, scoped, tag = 'input window, operand 7, single buffered']
    #allocation14 [shape = 'u8[512]{0}', space=vmem, size = 0x400, scoped, tag = 'input window, operand 8, single buffered']
    #allocation15 [shape = 's32[1]{0}', space=sflag, size = 0x4, scoped, tag = 'scoped memory for _lambda_.1']
    #allocation16 [shape = 'u8[512]{0}', space=vmem, size = 0x400, scoped, tag = 'input window, operand 10, single buffered']
    #allocation17 [shape = 'u8[512]{0}', space=vmem, size = 0x400, scoped, tag = 'input window, operand 12, single buffered']
    #allocation18 [shape = 's32[1]{0}', space=sflag, size = 0x4, scoped, tag = 'scoped memory for _lambda_.1']
    #allocation19 [shape = 'u8[512]{0}', space=vmem, size = 0x400, scoped, tag = 'input window, operand 13, single buffered']
    %22 = vsyncpa [#allocation4], 0
    %23 = vsyncpa [#allocation6], 0
    %24 = vsyncpa [#allocation9], 0
    %25 = vsyncpa [#allocation12], 0
    %26 = vsyncpa [#allocation15], 0
    %27 = vsyncpa [#allocation18], 0
    loop: start=0, step=1, limit=4
    $region2: #{_lambda_.1} parent=1 // loop_pre_header
      _
    $region3: #{_lambda_.1} parent=1 // loop_header
      %s29 = sphi 0, %s33
      %p30 = scmp.ge.s32.totalorder %s29, 4
      %s39 = sphi 0, %s41
      %s42 = sphi 0, %s39
      %s43 = sphi 0, %s42
      %s59 = sphi 0, %s43
      %s63 = sphi 0, %s63
      %s65 = sphi 0, %s63
      %s66 = sphi 0, %s65
      %s80 = sphi 0, %s66
      %s84 = sphi 0, %s84
      %s86 = sphi 0, %s84
      %s87 = sphi 0, %s86
      %s101 = sphi 0, %s87
      %s105 = sphi 0, %s105
      %s107 = sphi 0, %s105
      %s108 = sphi 0, %s107
      %s122 = sphi 0, %s108
      %s126 = sphi 0, %s126
      %s128 = sphi 0, %s126
      %s129 = sphi 0, %s128
      %s143 = sphi 0, %s129
      %s147 = sphi 0, %s147
      %s149 = sphi 0, %s147
      %s150 = sphi 0, %s149
      %s164 = sphi 0, %s150
      %s168 = sphi 0, %s168
      %s170 = sphi 0, %s168
      %s171 = sphi 0, %s170
      %s185 = sphi 0, %s171
      %s189 = sphi 0, %s189
      %s191 = sphi 0, %s189
      %s192 = sphi 0, %s191
      %s206 = sphi 0, %s192
      %s210 = sphi 0, %s210
      %s212 = sphi 0, %s210
      %s213 = sphi 0, %s212
      %s227 = sphi 0, %s213
      %s231 = sphi 0, %s231
      %s233 = sphi 0, %s231
      %s234 = sphi 0, %s233
      %s248 = sphi 0, %s234
      %s252 = sphi 0, %s252
      %s254 = sphi 0, %s252
      %s255 = sphi 0, %s254
      %s269 = sphi 0, %s255
      %s273 = sphi 0, %s273
      %s275 = sphi 0, %s273
      %s276 = sphi 0, %s275
      %s290 = sphi 0, %s276
      %s294 = sphi 0, %s294
      %s296 = sphi 0, %s294
      %s297 = sphi 0, %s296
      %s311 = sphi 0, %s297
      %s315 = sphi 0, %s315
      %s317 = sphi 0, %s315
      %s318 = sphi 0, %s317
      %s332 = sphi 0, %s318
      %s336 = sphi 0, %s336
      %s338 = sphi 0, %s336
      %s339 = sphi 0, %s338
      %s353 = sphi 0, %s339
      %s359 = sphi 0, %s361
      %s362 = sphi 0, %s359
      %s363 = sphi 0, %s362
      %s379 = sphi 0, %s363
    $region4: #{_lambda_.1} parent=1 // loop_header_branch
      %32 = sbr.rel (%p30) target = $region8
    $region5: #{_lambda_.1} parent=1 // loop_body
      %s34 = ssub.s32 %s29, 1
      %s35 = ssub.s32 %s29, 2
      %s36 = sadd.s32 %s29, 1
      %s37 = ssub.s32 %s29, %s36
      %p38 = scmp.eq.s32.totalorder %s37, 0
      %s40 = sadd.s32 %s39, 1
      %s41 = scalar_select %p38, %s39, %s40
      %p44 = pneg %p38
      %p45 = scmp.eq.s32.totalorder %s29, 1
      %p46 = por %p44, %p45
      %p47 = scmp.ne.s32.totalorder %s39, %s42
      %p48 = scmp.eq.s32.totalorder %s29, 0
      %p49 = por %p47, %p48
      %p50 = scmp.ne.s32.totalorder %s39, %s42
      %p51 = scmp.eq.s32.totalorder %s34, 1
      %p52 = por %p50, %p51
      %p53 = scmp.ne.s32.totalorder %s42, %s43
      %p54 = scmp.eq.s32.totalorder %s34, 0
      %p55 = por %p53, %p54
      %p56 = scmp.ne.s32.totalorder %s42, %s43
      %p57 = scmp.eq.s32.totalorder %s35, 1
      %p58 = por %p56, %p57
      %p60 = scmp.ne.s32.totalorder %s43, %s59
      %p61 = scmp.eq.s32.totalorder %s35, 0
      %p62 = por %p60, %p61
      %s64 = sadd.s32 %s63, 1
      %p67 = scmp.eq.s32.totalorder %s29, 1
      %p68 = scmp.ne.s32.totalorder %s63, %s65
      %p69 = scmp.eq.s32.totalorder %s29, 0
      %p70 = por %p68, %p69
      %p71 = scmp.ne.s32.totalorder %s63, %s65
      %p72 = scmp.eq.s32.totalorder %s34, 1
      %p73 = por %p71, %p72
      %p74 = scmp.ne.s32.totalorder %s65, %s66
      %p75 = scmp.eq.s32.totalorder %s34, 0
      %p76 = por %p74, %p75
      %p77 = scmp.ne.s32.totalorder %s65, %s66
      %p78 = scmp.eq.s32.totalorder %s35, 1
      %p79 = por %p77, %p78
      %p81 = scmp.ne.s32.totalorder %s66, %s80
      %p82 = scmp.eq.s32.totalorder %s35, 0
      %p83 = por %p81, %p82
      %s85 = sadd.s32 %s84, 1
      %p88 = scmp.eq.s32.totalorder %s29, 1
      %p89 = scmp.ne.s32.totalorder %s84, %s86
      %p90 = scmp.eq.s32.totalorder %s29, 0
      %p91 = por %p89, %p90
      %p92 = scmp.ne.s32.totalorder %s84, %s86
      %p93 = scmp.eq.s32.totalorder %s34, 1
      %p94 = por %p92, %p93
      %p95 = scmp.ne.s32.totalorder %s86, %s87
      %p96 = scmp.eq.s32.totalorder %s34, 0
      %p97 = por %p95, %p96
      %p98 = scmp.ne.s32.totalorder %s86, %s87
      %p99 = scmp.eq.s32.totalorder %s35, 1
      %p100 = por %p98, %p99
      %p102 = scmp.ne.s32.totalorder %s87, %s101
      %p103 = scmp.eq.s32.totalorder %s35, 0
      %p104 = por %p102, %p103
      %s106 = sadd.s32 %s105, 1
      %p109 = scmp.eq.s32.totalorder %s29, 1
      %p110 = scmp.ne.s32.totalorder %s105, %s107
      %p111 = scmp.eq.s32.totalorder %s29, 0
      %p112 = por %p110, %p111
      %p113 = scmp.ne.s32.totalorder %s105, %s107
      %p114 = scmp.eq.s32.totalorder %s34, 1
      %p115 = por %p113, %p114
      %p116 = scmp.ne.s32.totalorder %s107, %s108
      %p117 = scmp.eq.s32.totalorder %s34, 0
      %p118 = por %p116, %p117
      %p119 = scmp.ne.s32.totalorder %s107, %s108
      %p120 = scmp.eq.s32.totalorder %s35, 1
      %p121 = por %p119, %p120
      %p123 = scmp.ne.s32.totalorder %s108, %s122
      %p124 = scmp.eq.s32.totalorder %s35, 0
      %p125 = por %p123, %p124
      %s127 = sadd.s32 %s126, 1
      %p130 = scmp.eq.s32.totalorder %s29, 1
      %p131 = scmp.ne.s32.totalorder %s126, %s128
      %p132 = scmp.eq.s32.totalorder %s29, 0
      %p133 = por %p131, %p132
      %p134 = scmp.ne.s32.totalorder %s126, %s128
      %p135 = scmp.eq.s32.totalorder %s34, 1
      %p136 = por %p134, %p135
      %p137 = scmp.ne.s32.totalorder %s128, %s129
      %p138 = scmp.eq.s32.totalorder %s34, 0
      %p139 = por %p137, %p138
      %p140 = scmp.ne.s32.totalorder %s128, %s129
      %p141 = scmp.eq.s32.totalorder %s35, 1
      %p142 = por %p140, %p141
      %p144 = scmp.ne.s32.totalorder %s129, %s143
      %p145 = scmp.eq.s32.totalorder %s35, 0
      %p146 = por %p144, %p145
      %s148 = sadd.s32 %s147, 1
      %p151 = scmp.eq.s32.totalorder %s29, 1
      %p152 = scmp.ne.s32.totalorder %s147, %s149
      %p153 = scmp.eq.s32.totalorder %s29, 0
      %p154 = por %p152, %p153
      %p155 = scmp.ne.s32.totalorder %s147, %s149
      %p156 = scmp.eq.s32.totalorder %s34, 1
      %p157 = por %p155, %p156
      %p158 = scmp.ne.s32.totalorder %s149, %s150
      %p159 = scmp.eq.s32.totalorder %s34, 0
      %p160 = por %p158, %p159
      %p161 = scmp.ne.s32.totalorder %s149, %s150
      %p162 = scmp.eq.s32.totalorder %s35, 1
      %p163 = por %p161, %p162
      %p165 = scmp.ne.s32.totalorder %s150, %s164
      %p166 = scmp.eq.s32.totalorder %s35, 0
      %p167 = por %p165, %p166
      %s169 = sadd.s32 %s168, 1
      %p172 = scmp.eq.s32.totalorder %s29, 1
      %p173 = scmp.ne.s32.totalorder %s168, %s170
      %p174 = scmp.eq.s32.totalorder %s29, 0
      %p175 = por %p173, %p174
      %p176 = scmp.ne.s32.totalorder %s168, %s170
      %p177 = scmp.eq.s32.totalorder %s34, 1
      %p178 = por %p176, %p177
      %p179 = scmp.ne.s32.totalorder %s170, %s171
      %p180 = scmp.eq.s32.totalorder %s34, 0
      %p181 = por %p179, %p180
      %p182 = scmp.ne.s32.totalorder %s170, %s171
      %p183 = scmp.eq.s32.totalorder %s35, 1
      %p184 = por %p182, %p183
      %p186 = scmp.ne.s32.totalorder %s171, %s185
      %p187 = scmp.eq.s32.totalorder %s35, 0
      %p188 = por %p186, %p187
      %s190 = sadd.s32 %s189, 1
      %p193 = scmp.eq.s32.totalorder %s29, 1
      %p194 = scmp.ne.s32.totalorder %s189, %s191
      %p195 = scmp.eq.s32.totalorder %s29, 0
      %p196 = por %p194, %p195
      %p197 = scmp.ne.s32.totalorder %s189, %s191
      %p198 = scmp.eq.s32.totalorder %s34, 1
      %p199 = por %p197, %p198
      %p200 = scmp.ne.s32.totalorder %s191, %s192
      %p201 = scmp.eq.s32.totalorder %s34, 0
      %p202 = por %p200, %p201
      %p203 = scmp.ne.s32.totalorder %s191, %s192
      %p204 = scmp.eq.s32.totalorder %s35, 1
      %p205 = por %p203, %p204
      %p207 = scmp.ne.s32.totalorder %s192, %s206
      %p208 = scmp.eq.s32.totalorder %s35, 0
      %p209 = por %p207, %p208
      %s211 = sadd.s32 %s210, 1
      %p214 = scmp.eq.s32.totalorder %s29, 1
      %p215 = scmp.ne.s32.totalorder %s210, %s212
      %p216 = scmp.eq.s32.totalorder %s29, 0
      %p217 = por %p215, %p216
      %p218 = scmp.ne.s32.totalorder %s210, %s212
      %p219 = scmp.eq.s32.totalorder %s34, 1
      %p220 = por %p218, %p219
      %p221 = scmp.ne.s32.totalorder %s212, %s213
      %p222 = scmp.eq.s32.totalorder %s34, 0
      %p223 = por %p221, %p222
      %p224 = scmp.ne.s32.totalorder %s212, %s213
      %p225 = scmp.eq.s32.totalorder %s35, 1
      %p226 = por %p224, %p225
      %p228 = scmp.ne.s32.totalorder %s213, %s227
      %p229 = scmp.eq.s32.totalorder %s35, 0
      %p230 = por %p228, %p229
      %s232 = sadd.s32 %s231, 1
      %p235 = scmp.eq.s32.totalorder %s29, 1
      %p236 = scmp.ne.s32.totalorder %s231, %s233
      %p237 = scmp.eq.s32.totalorder %s29, 0
      %p238 = por %p236, %p237
      %p239 = scmp.ne.s32.totalorder %s231, %s233
      %p240 = scmp.eq.s32.totalorder %s34, 1
      %p241 = por %p239, %p240
      %p242 = scmp.ne.s32.totalorder %s233, %s234
      %p243 = scmp.eq.s32.totalorder %s34, 0
      %p244 = por %p242, %p243
      %p245 = scmp.ne.s32.totalorder %s233, %s234
      %p246 = scmp.eq.s32.totalorder %s35, 1
      %p247 = por %p245, %p246
      %p249 = scmp.ne.s32.totalorder %s234, %s248
      %p250 = scmp.eq.s32.totalorder %s35, 0
      %p251 = por %p249, %p250
      %s253 = sadd.s32 %s252, 1
      %p256 = scmp.eq.s32.totalorder %s29, 1
      %p257 = scmp.ne.s32.totalorder %s252, %s254
      %p258 = scmp.eq.s32.totalorder %s29, 0
      %p259 = por %p257, %p258
      %p260 = scmp.ne.s32.totalorder %s252, %s254
      %p261 = scmp.eq.s32.totalorder %s34, 1
      %p262 = por %p260, %p261
      %p263 = scmp.ne.s32.totalorder %s254, %s255
      %p264 = scmp.eq.s32.totalorder %s34, 0
      %p265 = por %p263, %p264
      %p266 = scmp.ne.s32.totalorder %s254, %s255
      %p267 = scmp.eq.s32.totalorder %s35, 1
      %p268 = por %p266, %p267
      %p270 = scmp.ne.s32.totalorder %s255, %s269
      %p271 = scmp.eq.s32.totalorder %s35, 0
      %p272 = por %p270, %p271
      %s274 = sadd.s32 %s273, 1
      %p277 = scmp.eq.s32.totalorder %s29, 1
      %p278 = scmp.ne.s32.totalorder %s273, %s275
      %p279 = scmp.eq.s32.totalorder %s29, 0
      %p280 = por %p278, %p279
      %p281 = scmp.ne.s32.totalorder %s273, %s275
      %p282 = scmp.eq.s32.totalorder %s34, 1
      %p283 = por %p281, %p282
      %p284 = scmp.ne.s32.totalorder %s275, %s276
      %p285 = scmp.eq.s32.totalorder %s34, 0
      %p286 = por %p284, %p285
      %p287 = scmp.ne.s32.totalorder %s275, %s276
      %p288 = scmp.eq.s32.totalorder %s35, 1
      %p289 = por %p287, %p288
      %p291 = scmp.ne.s32.totalorder %s276, %s290
      %p292 = scmp.eq.s32.totalorder %s35, 0
      %p293 = por %p291, %p292
      %s295 = sadd.s32 %s294, 1
      %p298 = scmp.eq.s32.totalorder %s29, 1
      %p299 = scmp.ne.s32.totalorder %s294, %s296
      %p300 = scmp.eq.s32.totalorder %s29, 0
      %p301 = por %p299, %p300
      %p302 = scmp.ne.s32.totalorder %s294, %s296
      %p303 = scmp.eq.s32.totalorder %s34, 1
      %p304 = por %p302, %p303
      %p305 = scmp.ne.s32.totalorder %s296, %s297
      %p306 = scmp.eq.s32.totalorder %s34, 0
      %p307 = por %p305, %p306
      %p308 = scmp.ne.s32.totalorder %s296, %s297
      %p309 = scmp.eq.s32.totalorder %s35, 1
      %p310 = por %p308, %p309
      %p312 = scmp.ne.s32.totalorder %s297, %s311
      %p313 = scmp.eq.s32.totalorder %s35, 0
      %p314 = por %p312, %p313
      %s316 = sadd.s32 %s315, 1
      %p319 = scmp.eq.s32.totalorder %s29, 1
      %p320 = scmp.ne.s32.totalorder %s315, %s317
      %p321 = scmp.eq.s32.totalorder %s29, 0
      %p322 = por %p320, %p321
      %p323 = scmp.ne.s32.totalorder %s315, %s317
      %p324 = scmp.eq.s32.totalorder %s34, 1
      %p325 = por %p323, %p324
      %p326 = scmp.ne.s32.totalorder %s317, %s318
      %p327 = scmp.eq.s32.totalorder %s34, 0
      %p328 = por %p326, %p327
      %p329 = scmp.ne.s32.totalorder %s317, %s318
      %p330 = scmp.eq.s32.totalorder %s35, 1
      %p331 = por %p329, %p330
      %p333 = scmp.ne.s32.totalorder %s318, %s332
      %p334 = scmp.eq.s32.totalorder %s35, 0
      %p335 = por %p333, %p334
      %s337 = sadd.s32 %s336, 1
      %p340 = scmp.eq.s32.totalorder %s29, 1
      %p341 = scmp.ne.s32.totalorder %s336, %s338
      %p342 = scmp.eq.s32.totalorder %s29, 0
      %p343 = por %p341, %p342
      %p344 = scmp.ne.s32.totalorder %s336, %s338
      %p345 = scmp.eq.s32.totalorder %s34, 1
      %p346 = por %p344, %p345
      %p347 = scmp.ne.s32.totalorder %s338, %s339
      %p348 = scmp.eq.s32.totalorder %s34, 0
      %p349 = por %p347, %p348
      %p350 = scmp.ne.s32.totalorder %s338, %s339
      %p351 = scmp.eq.s32.totalorder %s35, 1
      %p352 = por %p350, %p351
      %p354 = scmp.ne.s32.totalorder %s339, %s353
      %p355 = scmp.eq.s32.totalorder %s35, 0
      %p356 = por %p354, %p355
      %s357 = ssub.s32 %s29, %s36
      %p358 = scmp.eq.s32.totalorder %s357, 0
      %s360 = sadd.s32 %s359, 1
      %s361 = scalar_select %p358, %s359, %s360
      %p364 = pneg %p358
      %p365 = scmp.eq.s32.totalorder %s29, 1
      %p366 = por %p364, %p365
      %p367 = scmp.ne.s32.totalorder %s359, %s362
      %p368 = scmp.eq.s32.totalorder %s29, 0
      %p369 = por %p367, %p368
      %p370 = scmp.ne.s32.totalorder %s359, %s362
      %p371 = scmp.eq.s32.totalorder %s34, 1
      %p372 = por %p370, %p371
      %p373 = scmp.ne.s32.totalorder %s362, %s363
      %p374 = scmp.eq.s32.totalorder %s34, 0
      %p375 = por %p373, %p374
      %p376 = scmp.ne.s32.totalorder %s362, %s363
      %p377 = scmp.eq.s32.totalorder %s35, 1
      %p378 = por %p376, %p377
      %p380 = scmp.ne.s32.totalorder %s363, %s379
      %p381 = scmp.eq.s32.totalorder %s35, 0
      %p382 = por %p380, %p381
      %p383 = scmp.le.s32.totalorder 1, %s29
      %p384 = scmp.lt.s32.totalorder %s29, 3
      %p385 = pnand %p383, %p384
      %p386 = pneg %p385
      // Predicated region
      $region9: #{_lambda_.1} parent=5 // pred_check
        _
      $region10: #{_lambda_.1} parent=5 // pred_check_branch
        %388 = sbr.rel (%p385) target = $region12
      $region11: #{_lambda_.1} parent=5 // pred_region
        %s389 = ssub.s32 %s29, 1
        // Predicated region
        $region13: #{_lambda_.1} parent=11 // pred_check
          %p390 = pneg %p76
        $region14: #{_lambda_.1} parent=11 // pred_check_branch
          %392 = sbr.rel (%p390) target = $region16
        $region15: #{_lambda_.1} parent=11 // pred_region
          %s394 = ssub.s32 256, 256
          %395 = vsyncadd [#allocation4], %s394
          %s396 = sshll.u32 [#allocation3], 4
          %s397 = int_to_ptr.vmem [resolvable:$true] %s396
          %402 = dma.hbm_to_vmem [thread:$0]  %s1, 256, %s397, [#allocation4], 128, 128, 8
        $region16: #{_lambda_.1} parent=11 // pred_fallthru
          _
        // Predicated region
        $region17: #{_lambda_.1} parent=11 // pred_check
          %p403 = pneg %p97
        $region18: #{_lambda_.1} parent=11 // pred_check_branch
          %405 = sbr.rel (%p403) target = $region20
        $region19: #{_lambda_.1} parent=11 // pred_region
          %s407 = ssub.s32 256, 256
          %408 = vsyncadd [#allocation6], %s407
          %s409 = sshll.u32 [#allocation5], 4
          %s410 = int_to_ptr.vmem [resolvable:$true] %s409
          %415 = dma.hbm_to_vmem [thread:$0]  %s2, 256, %s410, [#allocation6], 128, 128, 8
        $region20: #{_lambda_.1} parent=11 // pred_fallthru
          _
        // Predicated region
        $region21: #{_lambda_.1} parent=11 // pred_check
          %p416 = pneg %p118
        $region22: #{_lambda_.1} parent=11 // pred_check_branch
          %418 = sbr.rel (%p416) target = $region24
        $region23: #{_lambda_.1} parent=11 // pred_region
          %s420 = ssub.s32 192, 192
          %421 = vsyncadd [#allocation6], %s420
          %s422 = sshll.u32 [#allocation7], 4
          %s423 = int_to_ptr.vmem [resolvable:$true] %s422
          %428 = dma.hbm_to_vmem [thread:$0]  %s3, 192, %s423, [#allocation6], 64, 64, 4
        $region24: #{_lambda_.1} parent=11 // pred_fallthru
          _
        // Predicated region
        $region25: #{_lambda_.1} parent=11 // pred_check
          %p429 = pneg %p139
        $region26: #{_lambda_.1} parent=11 // pred_check_branch
          %431 = sbr.rel (%p429) target = $region28
        $region27: #{_lambda_.1} parent=11 // pred_region
          %s433 = ssub.s32 16, 16
          %434 = vsyncadd [#allocation9], %s433
          %s436 = sshll.u32 [#allocation8], 4
          %s437 = int_to_ptr.vmem [resolvable:$true] %s436
          %439 = dma.hbm_to_vmem [thread:$0]  %s4, 16, %s437, [#allocation9]
        $region28: #{_lambda_.1} parent=11 // pred_fallthru
          _
        // Predicated region
        $region29: #{_lambda_.1} parent=11 // pred_check
          %p440 = pneg %p160
        $region30: #{_lambda_.1} parent=11 // pred_check_branch
          %442 = sbr.rel (%p440) target = $region32
        $region31: #{_lambda_.1} parent=11 // pred_region
          %s444 = ssub.s32 768, 768
          %445 = vsyncadd [#allocation9], %s444
          %s446 = sshll.u32 [#allocation10], 4
          %s447 = int_to_ptr.vmem [resolvable:$true] %s446
          %452 = dma.hbm_to_vmem [thread:$0]  %s5, 768, %s447, [#allocation9], 64, 64, 4
        $region32: #{_lambda_.1} parent=11 // pred_fallthru
          _
        // Predicated region
        $region33: #{_lambda_.1} parent=11 // pred_check
          %p453 = pneg %p181
        $region34: #{_lambda_.1} parent=11 // pred_check_branch
          %455 = sbr.rel (%p453) target = $region36
        $region35: #{_lambda_.1} parent=11 // pred_region
          %s457 = ssub.s32 16, 16
          %458 = vsyncadd [#allocation12], %s457
          %s460 = sshll.u32 [#allocation11], 4
          %s461 = int_to_ptr.vmem [resolvable:$true] %s460
          %463 = dma.hbm_to_vmem [thread:$0]  %s6, 16, %s461, [#allocation12]
        $region36: #{_lambda_.1} parent=11 // pred_fallthru
          _
        // Predicated region
        $region37: #{_lambda_.1} parent=11 // pred_check
          %p464 = pneg %p202
        $region38: #{_lambda_.1} parent=11 // pred_check_branch
          %466 = sbr.rel (%p464) target = $region40
        $region39: #{_lambda_.1} parent=11 // pred_region
          %s468 = ssub.s32 64, 64
          %469 = vsyncadd [#allocation12], %s468
          %s471 = sshll.u32 [#allocation13], 4
          %s472 = int_to_ptr.vmem [resolvable:$true] %s471
          %474 = dma.hbm_to_vmem [thread:$0]  %s7, 64, %s472, [#allocation12]
        $region40: #{_lambda_.1} parent=11 // pred_fallthru
          _
        // Predicated region
        $region41: #{_lambda_.1} parent=11 // pred_check
          %p475 = pneg %p223
        $region42: #{_lambda_.1} parent=11 // pred_check_branch
          %477 = sbr.rel (%p475) target = $region44
        $region43: #{_lambda_.1} parent=11 // pred_region
          %s479 = ssub.s32 16, 16
          %480 = vsyncadd [#allocation15], %s479
          %s482 = sshll.u32 [#allocation14], 4
          %s483 = int_to_ptr.vmem [resolvable:$true] %s482
          %485 = dma.hbm_to_vmem [thread:$0]  %s8, 16, %s483, [#allocation15]
        $region44: #{_lambda_.1} parent=11 // pred_fallthru
          _
        // Predicated region
        $region45: #{_lambda_.1} parent=11 // pred_check
          %p486 = pneg %p244
        $region46: #{_lambda_.1} parent=11 // pred_check_branch
          %488 = sbr.rel (%p486) target = $region48
        $region47: #{_lambda_.1} parent=11 // pred_region
          _
        $region48: #{_lambda_.1} parent=11 // pred_fallthru
          _
        // Predicated region
        $region49: #{_lambda_.1} parent=11 // pred_check
          %p489 = pneg %p265
        $region50: #{_lambda_.1} parent=11 // pred_check_branch
          %491 = sbr.rel (%p489) target = $region52
        $region51: #{_lambda_.1} parent=11 // pred_region
          %s493 = ssub.s32 16, 16
          %494 = vsyncadd [#allocation15], %s493
          %s496 = sshll.u32 [#allocation16], 4
          %s497 = int_to_ptr.vmem [resolvable:$true] %s496
          %499 = dma.hbm_to_vmem [thread:$0]  %s10, 16, %s497, [#allocation15]
        $region52: #{_lambda_.1} parent=11 // pred_fallthru
          _
        // Predicated region
        $region53: #{_lambda_.1} parent=11 // pred_check
          %p500 = pneg %p286
        $region54: #{_lambda_.1} parent=11 // pred_check_branch
          %502 = sbr.rel (%p500) target = $region56
        $region55: #{_lambda_.1} parent=11 // pred_region
          _
        $region56: #{_lambda_.1} parent=11 // pred_fallthru
          _
        // Predicated region
        $region57: #{_lambda_.1} parent=11 // pred_check
          %p503 = pneg %p307
        $region58: #{_lambda_.1} parent=11 // pred_check_branch
          %505 = sbr.rel (%p503) target = $region60
        $region59: #{_lambda_.1} parent=11 // pred_region
          %s507 = ssub.s32 16, 16
          %508 = vsyncadd [#allocation18], %s507
          %s510 = sshll.u32 [#allocation17], 4
          %s511 = int_to_ptr.vmem [resolvable:$true] %s510
          %513 = dma.hbm_to_vmem [thread:$0]  %s12, 16, %s511, [#allocation18]
        $region60: #{_lambda_.1} parent=11 // pred_fallthru
          _
        // Predicated region
        $region61: #{_lambda_.1} parent=11 // pred_check
          %p514 = pneg %p328
        $region62: #{_lambda_.1} parent=11 // pred_check_branch
          %516 = sbr.rel (%p514) target = $region64
        $region63: #{_lambda_.1} parent=11 // pred_region
          %s518 = ssub.s32 16, 16
          %519 = vsyncadd [#allocation18], %s518
          %s521 = sshll.u32 [#allocation19], 4
          %s522 = int_to_ptr.vmem [resolvable:$true] %s521
          %524 = dma.hbm_to_vmem [thread:$0]  %s13, 16, %s522, [#allocation18]
        $region64: #{_lambda_.1} parent=11 // pred_fallthru
          _
        // Predicated region
        $region65: #{_lambda_.1} parent=11 // pred_check
          %p525 = pneg %p349
        $region66: #{_lambda_.1} parent=11 // pred_check_branch
          %527 = sbr.rel (%p525) target = $region68
        $region67: #{_lambda_.1} parent=11 // pred_region
          _
        $region68: #{_lambda_.1} parent=11 // pred_fallthru
          _
      $region12: #{_lambda_.1} parent=5 // pred_fallthru
        _
      %p528 = scmp.lt.s32.totalorder %s29, 2
      // Predicated region
      $region69: #{_lambda_.1} parent=5 // pred_check
        %p529 = pneg %p528
      $region70: #{_lambda_.1} parent=5 // pred_check_branch
        %531 = sbr.rel (%p529) target = $region72
      $region71: #{_lambda_.1} parent=5 // pred_region
        // Predicated region
        $region73: #{_lambda_.1} parent=71 // pred_check
          %p532 = pneg %p49
        $region74: #{_lambda_.1} parent=71 // pred_check_branch
          %534 = sbr.rel (%p532) target = $region76
        $region75: #{_lambda_.1} parent=71 // pred_region
          %s535 = smul.u32 2, %s29
          %p536 = scmp.lt.s32.totalorder %s535, 3
          %s537 = scalar_select %p536, %s535, 3
          %s538 = smul.addr %s537, 8
          %s539 = scalar_lea.vmem %s0, %s538
          %s540 = smul.u32 2, %s29
        $region76: #{_lambda_.1} parent=71 // pred_fallthru
          _
      $region72: #{_lambda_.1} parent=5 // pred_fallthru
        _
      %p541 = scmp.le.s32.totalorder 1, %s29
      %p542 = scmp.lt.s32.totalorder %s29, 3
      %p543 = pnand %p541, %p542
      %p544 = pneg %p543
      // Predicated region
      $region77: #{_lambda_.1} parent=5 // pred_check
        _
      $region78: #{_lambda_.1} parent=5 // pred_check_branch
        %546 = sbr.rel (%p543) target = $region80
      $region79: #{_lambda_.1} parent=5 // pred_region
        %s547 = ssub.s32 %s29, 1
        // Predicated region
        $region81: #{_lambda_.1} parent=79 // pred_check
          %p548 = pneg %p76
        $region82: #{_lambda_.1} parent=79 // pred_check_branch
          %550 = sbr.rel (%p548) target = $region84
        $region83: #{_lambda_.1} parent=79 // pred_region
          %551 = dma.done [#allocation4], 256
        $region84: #{_lambda_.1} parent=79 // pred_fallthru
          _
        // Predicated region
        $region85: #{_lambda_.1} parent=79 // pred_check
          %p552 = pneg %p97
        $region86: #{_lambda_.1} parent=79 // pred_check_branch
          %554 = sbr.rel (%p552) target = $region88
        $region87: #{_lambda_.1} parent=79 // pred_region
          %555 = dma.done [#allocation6], 256
        $region88: #{_lambda_.1} parent=79 // pred_fallthru
          _
        // Predicated region
        $region89: #{_lambda_.1} parent=79 // pred_check
          %p556 = pneg %p118
        $region90: #{_lambda_.1} parent=79 // pred_check_branch
          %558 = sbr.rel (%p556) target = $region92
        $region91: #{_lambda_.1} parent=79 // pred_region
          %559 = dma.done [#allocation6], 192
        $region92: #{_lambda_.1} parent=79 // pred_fallthru
          _
        // Predicated region
        $region93: #{_lambda_.1} parent=79 // pred_check
          %p560 = pneg %p139
        $region94: #{_lambda_.1} parent=79 // pred_check_branch
          %562 = sbr.rel (%p560) target = $region96
        $region95: #{_lambda_.1} parent=79 // pred_region
          %563 = dma.done [#allocation9], 16
        $region96: #{_lambda_.1} parent=79 // pred_fallthru
          _
        // Predicated region
        $region97: #{_lambda_.1} parent=79 // pred_check
          %p564 = pneg %p160
        $region98: #{_lambda_.1} parent=79 // pred_check_branch
          %566 = sbr.rel (%p564) target = $region100
        $region99: #{_lambda_.1} parent=79 // pred_region
          %567 = dma.done [#allocation9], 768
        $region100: #{_lambda_.1} parent=79 // pred_fallthru
          _
        // Predicated region
        $region101: #{_lambda_.1} parent=79 // pred_check
          %p568 = pneg %p181
        $region102: #{_lambda_.1} parent=79 // pred_check_branch
          %570 = sbr.rel (%p568) target = $region104
        $region103: #{_lambda_.1} parent=79 // pred_region
          %571 = dma.done [#allocation12], 16
        $region104: #{_lambda_.1} parent=79 // pred_fallthru
          _
        // Predicated region
        $region105: #{_lambda_.1} parent=79 // pred_check
          %p572 = pneg %p202
        $region106: #{_lambda_.1} parent=79 // pred_check_branch
          %574 = sbr.rel (%p572) target = $region108
        $region107: #{_lambda_.1} parent=79 // pred_region
          %575 = dma.done [#allocation12], 64
        $region108: #{_lambda_.1} parent=79 // pred_fallthru
          _
        // Predicated region
        $region109: #{_lambda_.1} parent=79 // pred_check
          %p576 = pneg %p223
        $region110: #{_lambda_.1} parent=79 // pred_check_branch
          %578 = sbr.rel (%p576) target = $region112
        $region111: #{_lambda_.1} parent=79 // pred_region
          %579 = dma.done [#allocation15], 16
        $region112: #{_lambda_.1} parent=79 // pred_fallthru
          _
        // Predicated region
        $region113: #{_lambda_.1} parent=79 // pred_check
          %p580 = pneg %p265
        $region114: #{_lambda_.1} parent=79 // pred_check_branch
          %582 = sbr.rel (%p580) target = $region116
        $region115: #{_lambda_.1} parent=79 // pred_region
          %583 = dma.done [#allocation15], 16
        $region116: #{_lambda_.1} parent=79 // pred_fallthru
          _
        // Predicated region
        $region117: #{_lambda_.1} parent=79 // pred_check
          %p584 = pneg %p307
        $region118: #{_lambda_.1} parent=79 // pred_check_branch
          %586 = sbr.rel (%p584) target = $region120
        $region119: #{_lambda_.1} parent=79 // pred_region
          %587 = dma.done [#allocation18], 16
        $region120: #{_lambda_.1} parent=79 // pred_fallthru
          _
        // Predicated region
        $region121: #{_lambda_.1} parent=79 // pred_check
          %p588 = pneg %p328
        $region122: #{_lambda_.1} parent=79 // pred_check_branch
          %590 = sbr.rel (%p588) target = $region124
        $region123: #{_lambda_.1} parent=79 // pred_region
          %591 = dma.done [#allocation18], 16
        $region124: #{_lambda_.1} parent=79 // pred_fallthru
          _
        %s592 = smul.u32 2, %s34
        %p593 = scmp.lt.s32.totalorder %s592, 3
        %s594 = scalar_select %p593, %s592, 3
        %s595 = smul.addr %s594, 8
        %s596 = scalar_lea.vmem %s0, %s595
        %p597 = pneg %p55
        %p598 = pneg %p52
        %p599 = pneg %p76
        %p600 = pneg %p73
        %p601 = pneg %p97
        %p602 = pneg %p94
        %p603 = pneg %p118
        %p604 = pneg %p115
        %p605 = pneg %p139
        %p606 = pneg %p136
        %p607 = pneg %p160
        %p608 = pneg %p157
        %p609 = pneg %p181
        %p610 = pneg %p178
        %p611 = pneg %p202
        %p612 = pneg %p199
        %p613 = pneg %p223
        %p614 = pneg %p220
        %p615 = pneg %p244
        %p616 = pneg %p241
        %p617 = pneg %p265
        %p618 = pneg %p262
        %p619 = pneg %p286
        %p620 = pneg %p283
        %p621 = pneg %p307
        %p622 = pneg %p304
        %p623 = pneg %p328
        %p624 = pneg %p325
        %p625 = pneg %p349
        %p626 = pneg %p346
        %p627 = pneg %p375
        %p628 = pneg %p372
        %p629 = scmp.lt.s32.totalorder %s34, 1
        %s630 = scalar_select %p629, %s34, 1
        %s631 = smul.addr %s630, 2
        %s632 = scalar_lea.vmem %s15, %s631
        %s633 = smul.u32 2, %s34
        %p634 = scmp.lt.s32.totalorder %s633, 3
        %s635 = scalar_select %p634, %s633, 3
        %s636 = smul.addr %s635, 8
        %s637 = scalar_lea.vmem %s0, %s636
        %s638 = smul.u32 2, %s34
        %p639 = scmp.lt.s32.totalorder %s34, 1
        %s640 = scalar_select %p639, %s34, 1
        %s641 = smul.addr %s640, 2
        %s642 = scalar_lea.vmem %s15, %s641
        %v644 = vld [vmem:[%s637] sm:$0xff]
        %v645 = vld [vmem:[%s637 + $0x8] sm:$0xff]
        %v648 = vcombine.high %v644, %v644
        %v650 = vunpack.c.l.s4 1966171168
        %v651 = vunpack.c.0.s8 %v650
        %v652 = vlaneseq
        %v653 = vshrl.u32 %v652, 7
        %v654 = vsub.s32 %v651, %v653
        %v655 = vrot.slane %v644, %v654
        %v657 = vunpack.c.l.s4 1966171168
        %v658 = vunpack.c.0.s8 %v657
        %v659 = vlaneseq
        %v660 = vshrl.u32 %v659, 7
        %v661 = vsub.s32 %v658, %v660
        %v662 = vrot.slane %v648, %v661
        %v663 = vcombine.high %v655, %v655
        %v664 = vcombine.high %v662, %v662
        %v666 = vunpack.c.l.s4 1966171168
        %v667 = vunpack.c.0.s8 %v666
        %v668 = vlaneseq
        %v669 = vshrl.u32 %v668, 7
        %v670 = vsub.s32 %v667, %v669
        %v671 = vrot.slane %v655, %v670
        %v673 = vunpack.c.l.s4 1966171168
        %v674 = vunpack.c.0.s8 %v673
        %v675 = vlaneseq
        %v676 = vshrl.u32 %v675, 7
        %v677 = vsub.s32 %v674, %v676
        %v678 = vrot.slane %v662, %v677
        %v680 = vunpack.c.l.s4 1966171168
        %v681 = vunpack.c.0.s8 %v680
        %v682 = vlaneseq
        %v683 = vshrl.u32 %v682, 7
        %v684 = vsub.s32 %v681, %v683
        %v685 = vrot.slane %v663, %v684
        %v687 = vunpack.c.l.s4 1966171168
        %v688 = vunpack.c.0.s8 %v687
        %v689 = vlaneseq
        %v690 = vshrl.u32 %v689, 7
        %v691 = vsub.s32 %v688, %v690
        %v692 = vrot.slane %v664, %v691
        %v693 = vcombine.high %v671, %v671
        %v694 = vcombine.high %v678, %v678
        %v695 = vcombine.high %v685, %v685
        %v696 = vcombine.high %v692, %v692
        %v697 = vcombine.high %v645, %v645
        %v699 = vunpack.c.l.s4 1966171168
        %v700 = vunpack.c.0.s8 %v699
        %v701 = vlaneseq
        %v702 = vshrl.u32 %v701, 7
        %v703 = vsub.s32 %v700, %v702
        %v704 = vrot.slane %v645, %v703
        %v706 = vunpack.c.l.s4 1966171168
        %v707 = vunpack.c.0.s8 %v706
        %v708 = vlaneseq
        %v709 = vshrl.u32 %v708, 7
        %v710 = vsub.s32 %v707, %v709
        %v711 = vrot.slane %v697, %v710
        %v712 = vcombine.high %v704, %v704
        %v713 = vcombine.high %v711, %v711
        %v715 = vunpack.c.l.s4 1966171168
        %v716 = vunpack.c.0.s8 %v715
        %v717 = vlaneseq
        %v718 = vshrl.u32 %v717, 7
        %v719 = vsub.s32 %v716, %v718
        %v720 = vrot.slane %v704, %v719
        %v722 = vunpack.c.l.s4 1966171168
        %v723 = vunpack.c.0.s8 %v722
        %v724 = vlaneseq
        %v725 = vshrl.u32 %v724, 7
        %v726 = vsub.s32 %v723, %v725
        %v727 = vrot.slane %v711, %v726
        %v729 = vunpack.c.l.s4 1966171168
        %v730 = vunpack.c.0.s8 %v729
        %v731 = vlaneseq
        %v732 = vshrl.u32 %v731, 7
        %v733 = vsub.s32 %v730, %v732
        %v734 = vrot.slane %v712, %v733
        %v736 = vunpack.c.l.s4 1966171168
        %v737 = vunpack.c.0.s8 %v736
        %v738 = vlaneseq
        %v739 = vshrl.u32 %v738, 7
        %v740 = vsub.s32 %v737, %v739
        %v741 = vrot.slane %v713, %v740
        %v742 = vcombine.high %v720, %v720
        %v743 = vcombine.high %v727, %v727
        %v744 = vcombine.high %v734, %v734
        %v745 = vcombine.high %v741, %v741
        %v746 = vld [vmem:[#allocation3] sm:$0xff]
        %v747 = vld [vmem:[#allocation3 + $0x8] sm:$0xff]
        %v748 = vlaneseq
        %v749 = vshrl.u32 %v748, 7
        %v750 = vsub.s32 0, %v749
        %v751 = vrot.slane %v671, %v750
        %v752 = vlaneseq
        %v753 = vshrl.u32 %v752, 7
        %v754 = vsub.s32 0, %v753
        %v755 = vrot.slane %v685, %v754
        %v756 = vlaneseq
        %v757 = vshrl.u32 %v756, 7
        %v758 = vsub.s32 0, %v757
        %v759 = vrot.slane %v693, %v758
        %v760 = vlaneseq
        %v761 = vshrl.u32 %v760, 7
        %v762 = vsub.s32 0, %v761
        %v763 = vrot.slane %v695, %v762
        %v764 = vlaneseq
        %v765 = vshrl.u32 %v764, 7
        %v766 = vsub.s32 0, %v765
        %v767 = vrot.slane %v678, %v766
        %v768 = vlaneseq
        %v769 = vshrl.u32 %v768, 7
        %v770 = vsub.s32 0, %v769
        %v771 = vrot.slane %v692, %v770
        %v772 = vlaneseq
        %v773 = vshrl.u32 %v772, 7
        %v774 = vsub.s32 0, %v773
        %v775 = vrot.slane %v694, %v774
        %v776 = vlaneseq
        %v777 = vshrl.u32 %v776, 7
        %v778 = vsub.s32 0, %v777
        %v779 = vrot.slane %v696, %v778
        %v780 = vlaneseq
        %v781 = vshrl.u32 %v780, 7
        %v782 = vsub.s32 0, %v781
        %v783 = vrot.slane %v720, %v782
        %v784 = vlaneseq
        %v785 = vshrl.u32 %v784, 7
        %v786 = vsub.s32 0, %v785
        %v787 = vrot.slane %v734, %v786
        %v788 = vlaneseq
        %v789 = vshrl.u32 %v788, 7
        %v790 = vsub.s32 0, %v789
        %v791 = vrot.slane %v742, %v790
        %v792 = vlaneseq
        %v793 = vshrl.u32 %v792, 7
        %v794 = vsub.s32 0, %v793
        %v795 = vrot.slane %v744, %v794
        %v796 = vlaneseq
        %v797 = vshrl.u32 %v796, 7
        %v798 = vsub.s32 0, %v797
        %v799 = vrot.slane %v727, %v798
        %v800 = vlaneseq
        %v801 = vshrl.u32 %v800, 7
        %v802 = vsub.s32 0, %v801
        %v803 = vrot.slane %v741, %v802
        %v804 = vlaneseq
        %v805 = vshrl.u32 %v804, 7
        %v806 = vsub.s32 0, %v805
        %v807 = vrot.slane %v743, %v806
        %v808 = vlaneseq
        %v809 = vshrl.u32 %v808, 7
        %v810 = vsub.s32 0, %v809
        %v811 = vrot.slane %v745, %v810
        %829 = vset.pattern.permute.xlu0 0
        %830 = vperm.xlu0 %829, %v746
        %v831 = vpop.permute.xlu0 %830
        %834 = vset.pattern.permute.xlu0 0
        %835 = vperm.xlu0 %834, %v747
        %v836 = vpop.permute.xlu0 %835
        %v838 = vmul.f32 %v751, %v831
        %v839 = vmul.f32 %v751, %v836
        %v840 = vmul.f32 %v755, %v831
        %v841 = vmul.f32 %v755, %v836
        %v842 = vmul.f32 %v759, %v831
        %v843 = vmul.f32 %v759, %v836
        %v844 = vmul.f32 %v763, %v831
        %v845 = vmul.f32 %v763, %v836
        %v846 = vmul.f32 %v767, %v831
        %v847 = vmul.f32 %v767, %v836
        %v848 = vmul.f32 %v771, %v831
        %v849 = vmul.f32 %v771, %v836
        %v850 = vmul.f32 %v775, %v831
        %v851 = vmul.f32 %v775, %v836
        %v852 = vmul.f32 %v779, %v831
        %v853 = vmul.f32 %v779, %v836
        %v854 = vmul.f32 %v783, %v831
        %v855 = vmul.f32 %v783, %v836
        %v856 = vmul.f32 %v787, %v831
        %v857 = vmul.f32 %v787, %v836
        %v858 = vmul.f32 %v791, %v831
        %v859 = vmul.f32 %v791, %v836
        %v860 = vmul.f32 %v795, %v831
        %v861 = vmul.f32 %v795, %v836
        %v862 = vmul.f32 %v799, %v831
        %v863 = vmul.f32 %v799, %v836
        %v864 = vmul.f32 %v803, %v831
        %v865 = vmul.f32 %v803, %v836
        %v866 = vmul.f32 %v807, %v831
        %v867 = vmul.f32 %v807, %v836
        %v868 = vmul.f32 %v811, %v831
        %v869 = vmul.f32 %v811, %v836
        %v870 = vld [vmem:[#allocation5] sm:$0xff]
        %v871 = vld [vmem:[#allocation5 + $0x8] sm:$0xff]
        %873 = vset.pattern.permute.xlu0 0
        %874 = vperm.xlu0 %873, %v870
        %v875 = vpop.permute.xlu0 %874
        %878 = vset.pattern.permute.xlu0 0
        %879 = vperm.xlu0 %878, %v871
        %v880 = vpop.permute.xlu0 %879
        %v882 = vadd.f32 %v838, %v875
        %v883 = vadd.f32 %v839, %v880
        %v884 = vadd.f32 %v840, %v875
        %v885 = vadd.f32 %v841, %v880
        %v886 = vadd.f32 %v842, %v875
        %v887 = vadd.f32 %v843, %v880
        %v888 = vadd.f32 %v844, %v875
        %v889 = vadd.f32 %v845, %v880
        %v890 = vadd.f32 %v846, %v875
        %v891 = vadd.f32 %v847, %v880
        %v892 = vadd.f32 %v848, %v875
        %v893 = vadd.f32 %v849, %v880
        %v894 = vadd.f32 %v850, %v875
        %v895 = vadd.f32 %v851, %v880
        %v896 = vadd.f32 %v852, %v875
        %v897 = vadd.f32 %v853, %v880
        %v898 = vadd.f32 %v854, %v875
        %v899 = vadd.f32 %v855, %v880
        %v900 = vadd.f32 %v856, %v875
        %v901 = vadd.f32 %v857, %v880
        %v902 = vadd.f32 %v858, %v875
        %v903 = vadd.f32 %v859, %v880
        %v904 = vadd.f32 %v860, %v875
        %v905 = vadd.f32 %v861, %v880
        %v906 = vadd.f32 %v862, %v875
        %v907 = vadd.f32 %v863, %v880
        %v908 = vadd.f32 %v864, %v875
        %v909 = vadd.f32 %v865, %v880
        %v910 = vadd.f32 %v866, %v875
        %v911 = vadd.f32 %v867, %v880
        %v912 = vadd.f32 %v868, %v875
        %v913 = vadd.f32 %v869, %v880
        %v914 = vlaneseq
        %v915 = vshrl.u32 %v914, 7
        %v916 = vadd.s32 %v915, 8
        %v917 = vrot.slane %v882, 6
        %v918 = vrot.slane %v883, 6
        %v919 = vrot.slane %v884, 6
        %v920 = vrot.slane %v885, 6
        %v921 = vrot.slane %v886, 6
        %v922 = vrot.slane %v887, 6
        %v923 = vrot.slane %v888, 6
        %v924 = vrot.slane %v889, 6
        %v925 = vrot.slane %v890, 6
        %v926 = vrot.slane %v891, 6
        %v927 = vrot.slane %v892, 6
        %v928 = vrot.slane %v893, 6
        %v929 = vrot.slane %v894, 6
        %v930 = vrot.slane %v895, 6
        %v931 = vrot.slane %v896, 6
        %v932 = vrot.slane %v897, 6
        %v933 = vrot.slane %v898, 6
        %v934 = vrot.slane %v899, 6
        %v935 = vrot.slane %v900, 6
        %v936 = vrot.slane %v901, 6
        %v937 = vrot.slane %v902, 6
        %v938 = vrot.slane %v903, 6
        %v939 = vrot.slane %v904, 6
        %v940 = vrot.slane %v905, 6
        %v941 = vrot.slane %v906, 6
        %v942 = vrot.slane %v907, 6
        %v943 = vrot.slane %v908, 6
        %v944 = vrot.slane %v909, 6
        %v945 = vrot.slane %v910, 6
        %v946 = vrot.slane %v911, 6
        %v947 = vrot.slane %v912, 6
        %v948 = vrot.slane %v913, 6
        %vm949 = vcmp.lt.s32.totalorder %v915, 2
        %v950 = vsel %vm949, %v947, %v948
        %v951 = vsel %vm949, %v946, %v947
        %v952 = vsel %vm949, %v945, %v946
        %v953 = vsel %vm949, %v944, %v945
        %v954 = vsel %vm949, %v943, %v944
        %v955 = vsel %vm949, %v942, %v943
        %v956 = vsel %vm949, %v941, %v942
        %v957 = vsel %vm949, %v940, %v941
        %v958 = vsel %vm949, %v939, %v940
        %v959 = vsel %vm949, %v938, %v939
        %v960 = vsel %vm949, %v937, %v938
        %v961 = vsel %vm949, %v936, %v937
        %v962 = vsel %vm949, %v935, %v936
        %v963 = vsel %vm949, %v934, %v935
        %v964 = vsel %vm949, %v933, %v934
        %v965 = vsel %vm949, %v932, %v933
        %v966 = vsel %vm949, %v931, %v932
        %v967 = vsel %vm949, %v930, %v931
        %v968 = vsel %vm949, %v929, %v930
        %v969 = vsel %vm949, %v928, %v929
        %v970 = vsel %vm949, %v927, %v928
        %v971 = vsel %vm949, %v926, %v927
        %v972 = vsel %vm949, %v925, %v926
        %v973 = vsel %vm949, %v924, %v925
        %v974 = vsel %vm949, %v923, %v924
        %v975 = vsel %vm949, %v922, %v923
        %v976 = vsel %vm949, %v921, %v922
        %v977 = vsel %vm949, %v920, %v921
        %v978 = vsel %vm949, %v919, %v920
        %v979 = vsel %vm949, %v918, %v919
        %v980 = vsel %vm949, %v917, %v918
        %v981 = vsel %vm949, %v948, %v917
        %vm982 = vcmp.ge.s32.totalorder %v915, 2
        %vm983 = vcmp.ge.s32.totalorder %v916, 2
        %v984 = vsel %vm982, 1, 0
        %v985 = vsel %vm983, 1, 0
        %vm986 = vcmp.eq.s32.totalorder %v984, 1
        %vm987 = vcmp.eq.s32.totalorder %v985, 1
        %v988 = vsel %vm986, %v981, 0.0
        %v989 = vsel %vm987, %v980, 0.0
        %v990 = vsel %vm986, %v979, 0.0
        %v991 = vsel %vm987, %v978, 0.0
        %v992 = vsel %vm986, %v977, 0.0
        %v993 = vsel %vm987, %v976, 0.0
        %v994 = vsel %vm986, %v975, 0.0
        %v995 = vsel %vm987, %v974, 0.0
        %v996 = vsel %vm986, %v973, 0.0
        %v997 = vsel %vm987, %v972, 0.0
        %v998 = vsel %vm986, %v971, 0.0
        %v999 = vsel %vm987, %v970, 0.0
        %v1000 = vsel %vm986, %v969, 0.0
        %v1001 = vsel %vm987, %v968, 0.0
        %v1002 = vsel %vm986, %v967, 0.0
        %v1003 = vsel %vm987, %v966, 0.0
        %v1004 = vsel %vm986, %v965, 0.0
        %v1005 = vsel %vm987, %v964, 0.0
        %v1006 = vsel %vm986, %v963, 0.0
        %v1007 = vsel %vm987, %v962, 0.0
        %v1008 = vsel %vm986, %v961, 0.0
        %v1009 = vsel %vm987, %v960, 0.0
        %v1010 = vsel %vm986, %v959, 0.0
        %v1011 = vsel %vm987, %v958, 0.0
        %v1012 = vsel %vm986, %v957, 0.0
        %v1013 = vsel %vm987, %v956, 0.0
        %v1014 = vsel %vm986, %v955, 0.0
        %v1015 = vsel %vm987, %v954, 0.0
        %v1016 = vsel %vm986, %v953, 0.0
        %v1017 = vsel %vm987, %v952, 0.0
        %v1018 = vsel %vm986, %v951, 0.0
        %v1019 = vsel %vm987, %v950, 0.0
        %v1020 = vrot.slane %v882, 7
        %v1021 = vrot.slane %v883, 7
        %v1022 = vrot.slane %v884, 7
        %v1023 = vrot.slane %v885, 7
        %v1024 = vrot.slane %v886, 7
        %v1025 = vrot.slane %v887, 7
        %v1026 = vrot.slane %v888, 7
        %v1027 = vrot.slane %v889, 7
        %v1028 = vrot.slane %v890, 7
        %v1029 = vrot.slane %v891, 7
        %v1030 = vrot.slane %v892, 7
        %v1031 = vrot.slane %v893, 7
        %v1032 = vrot.slane %v894, 7
        %v1033 = vrot.slane %v895, 7
        %v1034 = vrot.slane %v896, 7
        %v1035 = vrot.slane %v897, 7
        %v1036 = vrot.slane %v898, 7
        %v1037 = vrot.slane %v899, 7
        %v1038 = vrot.slane %v900, 7
        %v1039 = vrot.slane %v901, 7
        %v1040 = vrot.slane %v902, 7
        %v1041 = vrot.slane %v903, 7
        %v1042 = vrot.slane %v904, 7
        %v1043 = vrot.slane %v905, 7
        %v1044 = vrot.slane %v906, 7
        %v1045 = vrot.slane %v907, 7
        %v1046 = vrot.slane %v908, 7
        %v1047 = vrot.slane %v909, 7
        %v1048 = vrot.slane %v910, 7
        %v1049 = vrot.slane %v911, 7
        %v1050 = vrot.slane %v912, 7
        %v1051 = vrot.slane %v913, 7
        %vm1052 = vcmp.lt.s32.totalorder %v915, 1
        %v1053 = vsel %vm1052, %v1050, %v1051
        %v1054 = vsel %vm1052, %v1049, %v1050
        %v1055 = vsel %vm1052, %v1048, %v1049
        %v1056 = vsel %vm1052, %v1047, %v1048
        %v1057 = vsel %vm1052, %v1046, %v1047
        %v1058 = vsel %vm1052, %v1045, %v1046
        %v1059 = vsel %vm1052, %v1044, %v1045
        %v1060 = vsel %vm1052, %v1043, %v1044
        %v1061 = vsel %vm1052, %v1042, %v1043
        %v1062 = vsel %vm1052, %v1041, %v1042
        %v1063 = vsel %vm1052, %v1040, %v1041
        %v1064 = vsel %vm1052, %v1039, %v1040
        %v1065 = vsel %vm1052, %v1038, %v1039
        %v1066 = vsel %vm1052, %v1037, %v1038
        %v1067 = vsel %vm1052, %v1036, %v1037
        %v1068 = vsel %vm1052, %v1035, %v1036
        %v1069 = vsel %vm1052, %v1034, %v1035
        %v1070 = vsel %vm1052, %v1033, %v1034
        %v1071 = vsel %vm1052, %v1032, %v1033
        %v1072 = vsel %vm1052, %v1031, %v1032
        %v1073 = vsel %vm1052, %v1030, %v1031
        %v1074 = vsel %vm1052, %v1029, %v1030
        %v1075 = vsel %vm1052, %v1028, %v1029
        %v1076 = vsel %vm1052, %v1027, %v1028
        %v1077 = vsel %vm1052, %v1026, %v1027
        %v1078 = vsel %vm1052, %v1025, %v1026
        %v1079 = vsel %vm1052, %v1024, %v1025
        %v1080 = vsel %vm1052, %v1023, %v1024
        %v1081 = vsel %vm1052, %v1022, %v1023
        %v1082 = vsel %vm1052, %v1021, %v1022
        %v1083 = vsel %vm1052, %v1020, %v1021
        %v1084 = vsel %vm1052, %v1051, %v1020
        %vm1085 = vcmp.ge.s32.totalorder %v915, 1
        %vm1086 = vcmp.ge.s32.totalorder %v916, 1
        %v1087 = vsel %vm1085, 1, 0
        %v1088 = vsel %vm1086, 1, 0
        %vm1089 = vcmp.eq.s32.totalorder %v1087, 1
        %vm1090 = vcmp.eq.s32.totalorder %v1088, 1
        %v1091 = vsel %vm1089, %v1084, 0.0
        %v1092 = vsel %vm1090, %v1083, 0.0
        %v1093 = vsel %vm1089, %v1082, 0.0
        %v1094 = vsel %vm1090, %v1081, 0.0
        %v1095 = vsel %vm1089, %v1080, 0.0
        %v1096 = vsel %vm1090, %v1079, 0.0
        %v1097 = vsel %vm1089, %v1078, 0.0
        %v1098 = vsel %vm1090, %v1077, 0.0
        %v1099 = vsel %vm1089, %v1076, 0.0
        %v1100 = vsel %vm1090, %v1075, 0.0
        %v1101 = vsel %vm1089, %v1074, 0.0
        %v1102 = vsel %vm1090, %v1073, 0.0
        %v1103 = vsel %vm1089, %v1072, 0.0
        %v1104 = vsel %vm1090, %v1071, 0.0
        %v1105 = vsel %vm1089, %v1070, 0.0
        %v1106 = vsel %vm1090, %v1069, 0.0
        %v1107 = vsel %vm1089, %v1068, 0.0
        %v1108 = vsel %vm1090, %v1067, 0.0
        %v1109 = vsel %vm1089, %v1066, 0.0
        %v1110 = vsel %vm1090, %v1065, 0.0
        %v1111 = vsel %vm1089, %v1064, 0.0
        %v1112 = vsel %vm1090, %v1063, 0.0
        %v1113 = vsel %vm1089, %v1062, 0.0
        %v1114 = vsel %vm1090, %v1061, 0.0
        %v1115 = vsel %vm1089, %v1060, 0.0
        %v1116 = vsel %vm1090, %v1059, 0.0
        %v1117 = vsel %vm1089, %v1058, 0.0
        %v1118 = vsel %vm1090, %v1057, 0.0
        %v1119 = vsel %vm1089, %v1056, 0.0
        %v1120 = vsel %vm1090, %v1055, 0.0
        %v1121 = vsel %vm1089, %v1054, 0.0
        %v1122 = vsel %vm1090, %v1053, 0.0
        %1155 = vrot.lane.b32.xlu0 %v1091, 8
        %v1156 = vpop.permute.xlu0 %1155
        %1157 = vrot.lane.b32.xlu0 %v1092, 8
        %v1158 = vpop.permute.xlu0 %1157
        %1159 = vrot.lane.b32.xlu0 %v1093, 8
        %v1160 = vpop.permute.xlu0 %1159
        %1161 = vrot.lane.b32.xlu0 %v1094, 8
        %v1162 = vpop.permute.xlu0 %1161
        %1163 = vrot.lane.b32.xlu0 %v1095, 8
        %v1164 = vpop.permute.xlu0 %1163
        %1165 = vrot.lane.b32.xlu0 %v1096, 8
        %v1166 = vpop.permute.xlu0 %1165
        %1167 = vrot.lane.b32.xlu0 %v1097, 8
        %v1168 = vpop.permute.xlu0 %1167
        %1169 = vrot.lane.b32.xlu0 %v1098, 8
        %v1170 = vpop.permute.xlu0 %1169
        %1171 = vrot.lane.b32.xlu0 %v1099, 8
        %v1172 = vpop.permute.xlu0 %1171
        %1173 = vrot.lane.b32.xlu0 %v1100, 8
        %v1174 = vpop.permute.xlu0 %1173
        %1175 = vrot.lane.b32.xlu0 %v1101, 8
        %v1176 = vpop.permute.xlu0 %1175
        %1177 = vrot.lane.b32.xlu0 %v1102, 8
        %v1178 = vpop.permute.xlu0 %1177
        %1179 = vrot.lane.b32.xlu0 %v1103, 8
        %v1180 = vpop.permute.xlu0 %1179
        %1181 = vrot.lane.b32.xlu0 %v1104, 8
        %v1182 = vpop.permute.xlu0 %1181
        %1183 = vrot.lane.b32.xlu0 %v1105, 8
        %v1184 = vpop.permute.xlu0 %1183
        %1185 = vrot.lane.b32.xlu0 %v1106, 8
        %v1186 = vpop.permute.xlu0 %1185
        %1187 = vrot.lane.b32.xlu0 %v1107, 8
        %v1188 = vpop.permute.xlu0 %1187
        %1189 = vrot.lane.b32.xlu0 %v1108, 8
        %v1190 = vpop.permute.xlu0 %1189
        %1191 = vrot.lane.b32.xlu0 %v1109, 8
        %v1192 = vpop.permute.xlu0 %1191
        %1193 = vrot.lane.b32.xlu0 %v1110, 8
        %v1194 = vpop.permute.xlu0 %1193
        %1195 = vrot.lane.b32.xlu0 %v1111, 8
        %v1196 = vpop.permute.xlu0 %1195
        %1197 = vrot.lane.b32.xlu0 %v1112, 8
        %v1198 = vpop.permute.xlu0 %1197
        %1199 = vrot.lane.b32.xlu0 %v1113, 8
        %v1200 = vpop.permute.xlu0 %1199
        %1201 = vrot.lane.b32.xlu0 %v1114, 8
        %v1202 = vpop.permute.xlu0 %1201
        %1203 = vrot.lane.b32.xlu0 %v1115, 8
        %v1204 = vpop.permute.xlu0 %1203
        %1205 = vrot.lane.b32.xlu0 %v1116, 8
        %v1206 = vpop.permute.xlu0 %1205
        %1207 = vrot.lane.b32.xlu0 %v1117, 8
        %v1208 = vpop.permute.xlu0 %1207
        %1209 = vrot.lane.b32.xlu0 %v1118, 8
        %v1210 = vpop.permute.xlu0 %1209
        %1211 = vrot.lane.b32.xlu0 %v1119, 8
        %v1212 = vpop.permute.xlu0 %1211
        %1213 = vrot.lane.b32.xlu0 %v1120, 8
        %v1214 = vpop.permute.xlu0 %1213
        %1215 = vrot.lane.b32.xlu0 %v1121, 8
        %v1216 = vpop.permute.xlu0 %1215
        %1217 = vrot.lane.b32.xlu0 %v1122, 8
        %v1218 = vpop.permute.xlu0 %1217
        %1283 = vrot.lane.b32.xlu0 %v882, 16
        %v1284 = vpop.permute.xlu0 %1283
        %1285 = vrot.lane.b32.xlu0 %v883, 16
        %v1286 = vpop.permute.xlu0 %1285
        %1287 = vrot.lane.b32.xlu0 %v884, 16
        %v1288 = vpop.permute.xlu0 %1287
        %1289 = vrot.lane.b32.xlu0 %v885, 16
        %v1290 = vpop.permute.xlu0 %1289
        %1291 = vrot.lane.b32.xlu0 %v886, 16
        %v1292 = vpop.permute.xlu0 %1291
        %1293 = vrot.lane.b32.xlu0 %v887, 16
        %v1294 = vpop.permute.xlu0 %1293
        %1295 = vrot.lane.b32.xlu0 %v888, 16
        %v1296 = vpop.permute.xlu0 %1295
        %1297 = vrot.lane.b32.xlu0 %v889, 16
        %v1298 = vpop.permute.xlu0 %1297
        %1299 = vrot.lane.b32.xlu0 %v890, 16
        %v1300 = vpop.permute.xlu0 %1299
        %1301 = vrot.lane.b32.xlu0 %v891, 16
        %v1302 = vpop.permute.xlu0 %1301
        %1303 = vrot.lane.b32.xlu0 %v892, 16
        %v1304 = vpop.permute.xlu0 %1303
        %1305 = vrot.lane.b32.xlu0 %v893, 16
        %v1306 = vpop.permute.xlu0 %1305
        %1307 = vrot.lane.b32.xlu0 %v894, 16
        %v1308 = vpop.permute.xlu0 %1307
        %1309 = vrot.lane.b32.xlu0 %v895, 16
        %v1310 = vpop.permute.xlu0 %1309
        %1311 = vrot.lane.b32.xlu0 %v896, 16
        %v1312 = vpop.permute.xlu0 %1311
        %1313 = vrot.lane.b32.xlu0 %v897, 16
        %v1314 = vpop.permute.xlu0 %1313
        %1315 = vrot.lane.b32.xlu0 %v898, 16
        %v1316 = vpop.permute.xlu0 %1315
        %1317 = vrot.lane.b32.xlu0 %v899, 16
        %v1318 = vpop.permute.xlu0 %1317
        %1319 = vrot.lane.b32.xlu0 %v900, 16
        %v1320 = vpop.permute.xlu0 %1319
        %1321 = vrot.lane.b32.xlu0 %v901, 16
        %v1322 = vpop.permute.xlu0 %1321
        %1323 = vrot.lane.b32.xlu0 %v902, 16
        %v1324 = vpop.permute.xlu0 %1323
        %1325 = vrot.lane.b32.xlu0 %v903, 16
        %v1326 = vpop.permute.xlu0 %1325
        %1327 = vrot.lane.b32.xlu0 %v904, 16
        %v1328 = vpop.permute.xlu0 %1327
        %1329 = vrot.lane.b32.xlu0 %v905, 16
        %v1330 = vpop.permute.xlu0 %1329
        %1331 = vrot.lane.b32.xlu0 %v906, 16
        %v1332 = vpop.permute.xlu0 %1331
        %1333 = vrot.lane.b32.xlu0 %v907, 16
        %v1334 = vpop.permute.xlu0 %1333
        %1335 = vrot.lane.b32.xlu0 %v908, 16
        %v1336 = vpop.permute.xlu0 %1335
        %1337 = vrot.lane.b32.xlu0 %v909, 16
        %v1338 = vpop.permute.xlu0 %1337
        %1339 = vrot.lane.b32.xlu0 %v910, 16
        %v1340 = vpop.permute.xlu0 %1339
        %1341 = vrot.lane.b32.xlu0 %v911, 16
        %v1342 = vpop.permute.xlu0 %1341
        %1343 = vrot.lane.b32.xlu0 %v912, 16
        %v1344 = vpop.permute.xlu0 %1343
        %1345 = vrot.lane.b32.xlu0 %v913, 16
        %v1346 = vpop.permute.xlu0 %1345
        %vm1379 = vcmask 64512
        %v1380 = vsel %vm1379, %v988, %v1156
        %v1381 = vsel %vm1379, %v989, %v1158
        %v1382 = vsel %vm1379, %v990, %v1160
        %v1383 = vsel %vm1379, %v991, %v1162
        %v1384 = vsel %vm1379, %v992, %v1164
        %v1385 = vsel %vm1379, %v993, %v1166
        %v1386 = vsel %vm1379, %v994, %v1168
        %v1387 = vsel %vm1379, %v995, %v1170
        %v1388 = vsel %vm1379, %v996, %v1172
        %v1389 = vsel %vm1379, %v997, %v1174
        %v1390 = vsel %vm1379, %v998, %v1176
        %v1391 = vsel %vm1379, %v999, %v1178
        %v1392 = vsel %vm1379, %v1000, %v1180
        %v1393 = vsel %vm1379, %v1001, %v1182
        %v1394 = vsel %vm1379, %v1002, %v1184
        %v1395 = vsel %vm1379, %v1003, %v1186
        %v1396 = vsel %vm1379, %v1004, %v1188
        %v1397 = vsel %vm1379, %v1005, %v1190
        %v1398 = vsel %vm1379, %v1006, %v1192
        %v1399 = vsel %vm1379, %v1007, %v1194
        %v1400 = vsel %vm1379, %v1008, %v1196
        %v1401 = vsel %vm1379, %v1009, %v1198
        %v1402 = vsel %vm1379, %v1010, %v1200
        %v1403 = vsel %vm1379, %v1011, %v1202
        %v1404 = vsel %vm1379, %v1012, %v1204
        %v1405 = vsel %vm1379, %v1013, %v1206
        %v1406 = vsel %vm1379, %v1014, %v1208
        %v1407 = vsel %vm1379, %v1015, %v1210
        %v1408 = vsel %vm1379, %v1016, %v1212
        %v1409 = vsel %vm1379, %v1017, %v1214
        %v1410 = vsel %vm1379, %v1018, %v1216
        %v1411 = vsel %vm1379, %v1019, %v1218
        %vm1412 = vcmask 130048
        %v1413 = vsel %vm1412, %v1380, %v1284
        %v1414 = vsel %vm1412, %v1381, %v1286
        %v1415 = vsel %vm1412, %v1382, %v1288
        %v1416 = vsel %vm1412, %v1383, %v1290
        %v1417 = vsel %vm1412, %v1384, %v1292
        %v1418 = vsel %vm1412, %v1385, %v1294
        %v1419 = vsel %vm1412, %v1386, %v1296
        %v1420 = vsel %vm1412, %v1387, %v1298
        %v1421 = vsel %vm1412, %v1388, %v1300
        %v1422 = vsel %vm1412, %v1389, %v1302
        %v1423 = vsel %vm1412, %v1390, %v1304
        %v1424 = vsel %vm1412, %v1391, %v1306
        %v1425 = vsel %vm1412, %v1392, %v1308
        %v1426 = vsel %vm1412, %v1393, %v1310
        %v1427 = vsel %vm1412, %v1394, %v1312
        %v1428 = vsel %vm1412, %v1395, %v1314
        %v1429 = vsel %vm1412, %v1396, %v1316
        %v1430 = vsel %vm1412, %v1397, %v1318
        %v1431 = vsel %vm1412, %v1398, %v1320
        %v1432 = vsel %vm1412, %v1399, %v1322
        %v1433 = vsel %vm1412, %v1400, %v1324
        %v1434 = vsel %vm1412, %v1401, %v1326
        %v1435 = vsel %vm1412, %v1402, %v1328
        %v1436 = vsel %vm1412, %v1403, %v1330
        %v1437 = vsel %vm1412, %v1404, %v1332
        %v1438 = vsel %vm1412, %v1405, %v1334
        %v1439 = vsel %vm1412, %v1406, %v1336
        %v1440 = vsel %vm1412, %v1407, %v1338
        %v1441 = vsel %vm1412, %v1408, %v1340
        %v1442 = vsel %vm1412, %v1409, %v1342
        %v1443 = vsel %vm1412, %v1410, %v1344
        %v1444 = vsel %vm1412, %v1411, %v1346
        %v1445 = vpack.c.bf16 %v1414, %v1413
        %v1446 = vpack.c.bf16 %v1416, %v1415
        %v1447 = vpack.c.bf16 %v1418, %v1417
        %v1448 = vpack.c.bf16 %v1420, %v1419
        %v1449 = vpack.c.bf16 %v1422, %v1421
        %v1450 = vpack.c.bf16 %v1424, %v1423
        %v1451 = vpack.c.bf16 %v1426, %v1425
        %v1452 = vpack.c.bf16 %v1428, %v1427
        %v1453 = vpack.c.bf16 %v1430, %v1429
        %v1454 = vpack.c.bf16 %v1432, %v1431
        %v1455 = vpack.c.bf16 %v1434, %v1433
        %v1456 = vpack.c.bf16 %v1436, %v1435
        %v1457 = vpack.c.bf16 %v1438, %v1437
        %v1458 = vpack.c.bf16 %v1440, %v1439
        %v1459 = vpack.c.bf16 %v1442, %v1441
        %v1460 = vpack.c.bf16 %v1444, %v1443
        %v1461 = vld [vmem:[#allocation7] sm:$0xf]
        %v1462 = vld [vmem:[#allocation7 + $0x4] sm:$0xf]
        %v1463 = vld [vmem:[#allocation7 + $0x8] sm:$0xf]
        %v1464 = vld [vmem:[#allocation8] sm:$0x1]
        %v1466 = vlaneseq
        %v1467 = vshrl.u32 %v1466, 7
        %v1468 = vsub.s32 0, %v1467
        %v1469 = vrot.slane %v1464, %v1468
        %v1474 = vunpack.c.l.b16 %v1461
        %v1475 = vunpack.c.l.b16 %v1462
        %v1476 = vunpack.c.l.b16 %v1463
        %v1477 = vpack.c.b16 %v1475, %v1474
        %v1478 = vpack.c.b16 %v1476, %v1476
        %vm1480 = vcmask 195584
        %v1482 = vsel %vm1480, %v1445, 0
        %v1485 = vsel %vm1480, %v1446, 0
        %v1488 = vsel %vm1480, %v1447, 0
        %v1491 = vsel %vm1480, %v1448, 0
        %v1494 = vsel %vm1480, %v1449, 0
        %v1497 = vsel %vm1480, %v1450, 0
        %v1500 = vsel %vm1480, %v1451, 0
        %v1503 = vsel %vm1480, %v1452, 0
        %v1506 = vsel %vm1480, %v1453, 0
        %v1509 = vsel %vm1480, %v1454, 0
        %v1512 = vsel %vm1480, %v1455, 0
        %v1515 = vsel %vm1480, %v1456, 0
        %v1518 = vsel %vm1480, %v1457, 0
        %v1521 = vsel %vm1480, %v1458, 0
        %v1524 = vsel %vm1480, %v1459, 0
        %v1527 = vsel %vm1480, %v1460, 0
        %vm1529 = vcmask 1043456
        %v1531 = vsel %vm1529, %v1478, 0
        %1533 = vmatprep.subr.bf16.mxu0 0
        %1534 = vmatpush1.bf16.msra.mxu0 %v1477
        %1535 = vmatprep.subr.bf16.mxu0 0
        %1536 = vmatpush1.bf16.msra.mxu0 %v1531
        %1537 = vmatprep.subr.bf16.mxu0 0
        %1538 = vmatpush1.bf16.msra.mxu0 0
        %1539 = vmatprep.subr.bf16.mxu0 0
        %1540 = vmatpush1.bf16.msra.mxu0 0
        %1541 = vmatprep.subr.bf16.mxu0 0
        %1542 = vmatpush1.bf16.msra.mxu0 0
        %1543 = vmatprep.subr.bf16.mxu0 0
        %1544 = vmatpush1.bf16.msra.mxu0 0
        %1545 = vmatprep.subr.bf16.mxu0 0
        %1546 = vmatpush1.bf16.msra.mxu0 0
        %1547 = vmatprep.subr.bf16.mxu0 0
        %1548 = vmatpush1.bf16.msra.mxu0 0
        %1549 = vmatprep.subr.bf16.mxu0 0
        %1550 = vmatpush1.bf16.msra.mxu0 0
        %1551 = vmatprep.subr.bf16.mxu0 0
        %1552 = vmatpush1.bf16.msra.mxu0 0
        %1553 = vmatprep.subr.bf16.mxu0 0
        %1554 = vmatpush1.bf16.msra.mxu0 0
        %1555 = vmatprep.subr.bf16.mxu0 0
        %1556 = vmatpush1.bf16.msra.mxu0 0
        %1557 = vmatprep.subr.bf16.mxu0 0
        %1558 = vmatpush1.bf16.msra.mxu0 0
        %1559 = vmatprep.subr.bf16.mxu0 0
        %1560 = vmatpush1.bf16.msra.mxu0 0
        %1561 = vmatprep.subr.bf16.mxu0 0
        %1562 = vmatpush1.bf16.msra.mxu0 0
        %1563 = vmatprep.subr.bf16.mxu0 0
        %1564 = vmatpush1.bf16.msra.mxu0 0
        %1565 = vmatprep.mubr.bf16.mxu0 0
        %1566 = vmatmul.mubr.bf16.gmra.mrb[0].mxu0 %v1482
        %v1567 = vpop.f32.mrb[0].mxu0
        %v1568 = vadd.f32 %v1469, %v1567
        %v1569 = vpop.f32.mrb[0].mxu0
        %v1570 = vpop.f32.mrb[0].mxu0
        %v1571 = vadd.f32 %v1469, %v1570
        %v1572 = vpop.f32.mrb[0].mxu0
        %1573 = vmatprep.mubr.bf16.mxu0 0
        %1574 = vmatmul.mubr.bf16.gmra.mrb[0].mxu0 %v1485
        %v1575 = vpop.f32.mrb[0].mxu0
        %v1576 = vadd.f32 %v1469, %v1575
        %v1577 = vpop.f32.mrb[0].mxu0
        %v1578 = vpop.f32.mrb[0].mxu0
        %v1579 = vadd.f32 %v1469, %v1578
        %v1580 = vpop.f32.mrb[0].mxu0
        %1581 = vmatprep.mubr.bf16.mxu0 0
        %1582 = vmatmul.mubr.bf16.gmra.mrb[0].mxu0 %v1488
        %v1583 = vpop.f32.mrb[0].mxu0
        %v1584 = vadd.f32 %v1469, %v1583
        %v1585 = vpop.f32.mrb[0].mxu0
        %v1586 = vpop.f32.mrb[0].mxu0
        %v1587 = vadd.f32 %v1469, %v1586
        %v1588 = vpop.f32.mrb[0].mxu0
        %1589 = vmatprep.mubr.bf16.mxu0 0
        %1590 = vmatmul.mubr.bf16.gmra.mrb[0].mxu0 %v1491
        %v1591 = vpop.f32.mrb[0].mxu0
        %v1592 = vadd.f32 %v1469, %v1591
        %v1593 = vpop.f32.mrb[0].mxu0
        %v1594 = vpop.f32.mrb[0].mxu0
        %v1595 = vadd.f32 %v1469, %v1594
        %v1596 = vpop.f32.mrb[0].mxu0
        %1597 = vmatprep.mubr.bf16.mxu0 0
        %1598 = vmatmul.mubr.bf16.gmra.mrb[0].mxu0 %v1494
        %v1599 = vpop.f32.mrb[0].mxu0
        %v1600 = vadd.f32 %v1469, %v1599
        %v1601 = vpop.f32.mrb[0].mxu0
        %v1602 = vpop.f32.mrb[0].mxu0
        %v1603 = vadd.f32 %v1469, %v1602
        %v1604 = vpop.f32.mrb[0].mxu0
        %1605 = vmatprep.mubr.bf16.mxu0 0
        %1606 = vmatmul.mubr.bf16.gmra.mrb[0].mxu0 %v1497
        %v1607 = vpop.f32.mrb[0].mxu0
        %v1608 = vadd.f32 %v1469, %v1607
        %v1609 = vpop.f32.mrb[0].mxu0
        %v1610 = vpop.f32.mrb[0].mxu0
        %v1611 = vadd.f32 %v1469, %v1610
        %v1612 = vpop.f32.mrb[0].mxu0
        %1613 = vmatprep.mubr.bf16.mxu0 0
        %1614 = vmatmul.mubr.bf16.gmra.mrb[0].mxu0 %v1500
        %v1615 = vpop.f32.mrb[0].mxu0
        %v1616 = vadd.f32 %v1469, %v1615
        %v1617 = vpop.f32.mrb[0].mxu0
        %v1618 = vpop.f32.mrb[0].mxu0
        %v1619 = vadd.f32 %v1469, %v1618
        %v1620 = vpop.f32.mrb[0].mxu0
        %1621 = vmatprep.mubr.bf16.mxu0 0
        %1622 = vmatmul.mubr.bf16.gmra.mrb[0].mxu0 %v1503
        %v1623 = vpop.f32.mrb[0].mxu0
        %v1624 = vadd.f32 %v1469, %v1623
        %v1625 = vpop.f32.mrb[0].mxu0
        %v1626 = vpop.f32.mrb[0].mxu0
        %v1627 = vadd.f32 %v1469, %v1626
        %v1628 = vpop.f32.mrb[0].mxu0
        %1629 = vmatprep.mubr.bf16.mxu0 0
        %1630 = vmatmul.mubr.bf16.gmra.mrb[0].mxu0 %v1506
        %v1631 = vpop.f32.mrb[0].mxu0
        %v1632 = vadd.f32 %v1469, %v1631
        %v1633 = vpop.f32.mrb[0].mxu0
        %v1634 = vpop.f32.mrb[0].mxu0
        %v1635 = vadd.f32 %v1469, %v1634
        %v1636 = vpop.f32.mrb[0].mxu0
        %1637 = vmatprep.mubr.bf16.mxu0 0
        %1638 = vmatmul.mubr.bf16.gmra.mrb[0].mxu0 %v1509
        %v1639 = vpop.f32.mrb[0].mxu0
        %v1640 = vadd.f32 %v1469, %v1639
        %v1641 = vpop.f32.mrb[0].mxu0
        %v1642 = vpop.f32.mrb[0].mxu0
        %v1643 = vadd.f32 %v1469, %v1642
        %v1644 = vpop.f32.mrb[0].mxu0
        %1645 = vmatprep.mubr.bf16.mxu0 0
        %1646 = vmatmul.mubr.bf16.gmra.mrb[0].mxu0 %v1512
        %v1647 = vpop.f32.mrb[0].mxu0
        %v1648 = vadd.f32 %v1469, %v1647
        %v1649 = vpop.f32.mrb[0].mxu0
        %v1650 = vpop.f32.mrb[0].mxu0
        %v1651 = vadd.f32 %v1469, %v1650
        %v1652 = vpop.f32.mrb[0].mxu0
        %1653 = vmatprep.mubr.bf16.mxu0 0
        %1654 = vmatmul.mubr.bf16.gmra.mrb[0].mxu0 %v1515
        %v1655 = vpop.f32.mrb[0].mxu0
        %v1656 = vadd.f32 %v1469, %v1655
        %v1657 = vpop.f32.mrb[0].mxu0
        %v1658 = vpop.f32.mrb[0].mxu0
        %v1659 = vadd.f32 %v1469, %v1658
        %v1660 = vpop.f32.mrb[0].mxu0
        %1661 = vmatprep.mubr.bf16.mxu0 0
        %1662 = vmatmul.mubr.bf16.gmra.mrb[0].mxu0 %v1518
        %v1663 = vpop.f32.mrb[0].mxu0
        %v1664 = vadd.f32 %v1469, %v1663
        %v1665 = vpop.f32.mrb[0].mxu0
        %v1666 = vpop.f32.mrb[0].mxu0
        %v1667 = vadd.f32 %v1469, %v1666
        %v1668 = vpop.f32.mrb[0].mxu0
        %1669 = vmatprep.mubr.bf16.mxu0 0
        %1670 = vmatmul.mubr.bf16.gmra.mrb[0].mxu0 %v1521
        %v1671 = vpop.f32.mrb[0].mxu0
        %v1672 = vadd.f32 %v1469, %v1671
        %v1673 = vpop.f32.mrb[0].mxu0
        %v1674 = vpop.f32.mrb[0].mxu0
        %v1675 = vadd.f32 %v1469, %v1674
        %v1676 = vpop.f32.mrb[0].mxu0
        %1677 = vmatprep.mubr.bf16.mxu0 0
        %1678 = vmatmul.mubr.bf16.gmra.mrb[0].mxu0 %v1524
        %v1679 = vpop.f32.mrb[0].mxu0
        %v1680 = vadd.f32 %v1469, %v1679
        %v1681 = vpop.f32.mrb[0].mxu0
        %v1682 = vpop.f32.mrb[0].mxu0
        %v1683 = vadd.f32 %v1469, %v1682
        %v1684 = vpop.f32.mrb[0].mxu0
        %1685 = vmatprep.mubr.bf16.mxu0 0
        %1686 = vmatmul.mubr.bf16.gmra.mrb[0].mxu0 %v1527
        %v1687 = vpop.f32.mrb[0].mxu0
        %v1688 = vadd.f32 %v1469, %v1687
        %v1689 = vpop.f32.mrb[0].mxu0
        %v1690 = vpop.f32.mrb[0].mxu0
        %v1691 = vadd.f32 %v1469, %v1690
        %v1692 = vpop.f32.mrb[0].mxu0
        %1693 = vdwg.mxu0
        %v1694 = vmax.f32 %v1568, 0.0
        %v1695 = vmax.f32 %v1571, 0.0
        %v1696 = vmax.f32 %v1576, 0.0
        %v1697 = vmax.f32 %v1579, 0.0
        %v1698 = vmax.f32 %v1584, 0.0
        %v1699 = vmax.f32 %v1587, 0.0
        %v1700 = vmax.f32 %v1592, 0.0
        %v1701 = vmax.f32 %v1595, 0.0
        %v1702 = vmax.f32 %v1600, 0.0
        %v1703 = vmax.f32 %v1603, 0.0
        %v1704 = vmax.f32 %v1608, 0.0
        %v1705 = vmax.f32 %v1611, 0.0
        %v1706 = vmax.f32 %v1616, 0.0
        %v1707 = vmax.f32 %v1619, 0.0
        %v1708 = vmax.f32 %v1624, 0.0
        %v1709 = vmax.f32 %v1627, 0.0
        %v1710 = vmax.f32 %v1632, 0.0
        %v1711 = vmax.f32 %v1635, 0.0
        %v1712 = vmax.f32 %v1640, 0.0
        %v1713 = vmax.f32 %v1643, 0.0
        %v1714 = vmax.f32 %v1648, 0.0
        %v1715 = vmax.f32 %v1651, 0.0
        %v1716 = vmax.f32 %v1656, 0.0
        %v1717 = vmax.f32 %v1659, 0.0
        %v1718 = vmax.f32 %v1664, 0.0
        %v1719 = vmax.f32 %v1667, 0.0
        %v1720 = vmax.f32 %v1672, 0.0
        %v1721 = vmax.f32 %v1675, 0.0
        %v1722 = vmax.f32 %v1680, 0.0
        %v1723 = vmax.f32 %v1683, 0.0
        %v1724 = vmax.f32 %v1688, 0.0
        %v1725 = vmax.f32 %v1691, 0.0
        %v1726 = vrot.slane %v1694, 6
        %v1727 = vrot.slane %v1695, 6
        %v1728 = vrot.slane %v1696, 6
        %v1729 = vrot.slane %v1697, 6
        %v1730 = vrot.slane %v1698, 6
        %v1731 = vrot.slane %v1699, 6
        %v1732 = vrot.slane %v1700, 6
        %v1733 = vrot.slane %v1701, 6
        %v1734 = vrot.slane %v1702, 6
        %v1735 = vrot.slane %v1703, 6
        %v1736 = vrot.slane %v1704, 6
        %v1737 = vrot.slane %v1705, 6
        %v1738 = vrot.slane %v1706, 6
        %v1739 = vrot.slane %v1707, 6
        %v1740 = vrot.slane %v1708, 6
        %v1741 = vrot.slane %v1709, 6
        %v1742 = vrot.slane %v1710, 6
        %v1743 = vrot.slane %v1711, 6
        %v1744 = vrot.slane %v1712, 6
        %v1745 = vrot.slane %v1713, 6
        %v1746 = vrot.slane %v1714, 6
        %v1747 = vrot.slane %v1715, 6
        %v1748 = vrot.slane %v1716, 6
        %v1749 = vrot.slane %v1717, 6
        %v1750 = vrot.slane %v1718, 6
        %v1751 = vrot.slane %v1719, 6
        %v1752 = vrot.slane %v1720, 6
        %v1753 = vrot.slane %v1721, 6
        %v1754 = vrot.slane %v1722, 6
        %v1755 = vrot.slane %v1723, 6
        %v1756 = vrot.slane %v1724, 6
        %v1757 = vrot.slane %v1725, 6
        %v1758 = vsel %vm949, %v1756, %v1757
        %v1759 = vsel %vm949, %v1755, %v1756
        %v1760 = vsel %vm949, %v1754, %v1755
        %v1761 = vsel %vm949, %v1753, %v1754
        %v1762 = vsel %vm949, %v1752, %v1753
        %v1763 = vsel %vm949, %v1751, %v1752
        %v1764 = vsel %vm949, %v1750, %v1751
        %v1765 = vsel %vm949, %v1749, %v1750
        %v1766 = vsel %vm949, %v1748, %v1749
        %v1767 = vsel %vm949, %v1747, %v1748
        %v1768 = vsel %vm949, %v1746, %v1747
        %v1769 = vsel %vm949, %v1745, %v1746
        %v1770 = vsel %vm949, %v1744, %v1745
        %v1771 = vsel %vm949, %v1743, %v1744
        %v1772 = vsel %vm949, %v1742, %v1743
        %v1773 = vsel %vm949, %v1741, %v1742
        %v1774 = vsel %vm949, %v1740, %v1741
        %v1775 = vsel %vm949, %v1739, %v1740
        %v1776 = vsel %vm949, %v1738, %v1739
        %v1777 = vsel %vm949, %v1737, %v1738
        %v1778 = vsel %vm949, %v1736, %v1737
        %v1779 = vsel %vm949, %v1735, %v1736
        %v1780 = vsel %vm949, %v1734, %v1735
        %v1781 = vsel %vm949, %v1733, %v1734
        %v1782 = vsel %vm949, %v1732, %v1733
        %v1783 = vsel %vm949, %v1731, %v1732
        %v1784 = vsel %vm949, %v1730, %v1731
        %v1785 = vsel %vm949, %v1729, %v1730
        %v1786 = vsel %vm949, %v1728, %v1729
        %v1787 = vsel %vm949, %v1727, %v1728
        %v1788 = vsel %vm949, %v1726, %v1727
        %v1789 = vsel %vm949, %v1757, %v1726
        %v1790 = vsel %vm986, %v1789, 0.0
        %v1791 = vsel %vm987, %v1788, 0.0
        %v1792 = vsel %vm986, %v1787, 0.0
        %v1793 = vsel %vm987, %v1786, 0.0
        %v1794 = vsel %vm986, %v1785, 0.0
        %v1795 = vsel %vm987, %v1784, 0.0
        %v1796 = vsel %vm986, %v1783, 0.0
        %v1797 = vsel %vm987, %v1782, 0.0
        %v1798 = vsel %vm986, %v1781, 0.0
        %v1799 = vsel %vm987, %v1780, 0.0
        %v1800 = vsel %vm986, %v1779, 0.0
        %v1801 = vsel %vm987, %v1778, 0.0
        %v1802 = vsel %vm986, %v1777, 0.0
        %v1803 = vsel %vm987, %v1776, 0.0
        %v1804 = vsel %vm986, %v1775, 0.0
        %v1805 = vsel %vm987, %v1774, 0.0
        %v1806 = vsel %vm986, %v1773, 0.0
        %v1807 = vsel %vm987, %v1772, 0.0
        %v1808 = vsel %vm986, %v1771, 0.0
        %v1809 = vsel %vm987, %v1770, 0.0
        %v1810 = vsel %vm986, %v1769, 0.0
        %v1811 = vsel %vm987, %v1768, 0.0
        %v1812 = vsel %vm986, %v1767, 0.0
        %v1813 = vsel %vm987, %v1766, 0.0
        %v1814 = vsel %vm986, %v1765, 0.0
        %v1815 = vsel %vm987, %v1764, 0.0
        %v1816 = vsel %vm986, %v1763, 0.0
        %v1817 = vsel %vm987, %v1762, 0.0
        %v1818 = vsel %vm986, %v1761, 0.0
        %v1819 = vsel %vm987, %v1760, 0.0
        %v1820 = vsel %vm986, %v1759, 0.0
        %v1821 = vsel %vm987, %v1758, 0.0
        %v1822 = vrot.slane %v1694, 7
        %v1823 = vrot.slane %v1695, 7
        %v1824 = vrot.slane %v1696, 7
        %v1825 = vrot.slane %v1697, 7
        %v1826 = vrot.slane %v1698, 7
        %v1827 = vrot.slane %v1699, 7
        %v1828 = vrot.slane %v1700, 7
        %v1829 = vrot.slane %v1701, 7
        %v1830 = vrot.slane %v1702, 7
        %v1831 = vrot.slane %v1703, 7
        %v1832 = vrot.slane %v1704, 7
        %v1833 = vrot.slane %v1705, 7
        %v1834 = vrot.slane %v1706, 7
        %v1835 = vrot.slane %v1707, 7
        %v1836 = vrot.slane %v1708, 7
        %v1837 = vrot.slane %v1709, 7
        %v1838 = vrot.slane %v1710, 7
        %v1839 = vrot.slane %v1711, 7
        %v1840 = vrot.slane %v1712, 7
        %v1841 = vrot.slane %v1713, 7
        %v1842 = vrot.slane %v1714, 7
        %v1843 = vrot.slane %v1715, 7
        %v1844 = vrot.slane %v1716, 7
        %v1845 = vrot.slane %v1717, 7
        %v1846 = vrot.slane %v1718, 7
        %v1847 = vrot.slane %v1719, 7
        %v1848 = vrot.slane %v1720, 7
        %v1849 = vrot.slane %v1721, 7
        %v1850 = vrot.slane %v1722, 7
        %v1851 = vrot.slane %v1723, 7
        %v1852 = vrot.slane %v1724, 7
        %v1853 = vrot.slane %v1725, 7
        %v1854 = vsel %vm1052, %v1852, %v1853
        %v1855 = vsel %vm1052, %v1851, %v1852
        %v1856 = vsel %vm1052, %v1850, %v1851
        %v1857 = vsel %vm1052, %v1849, %v1850
        %v1858 = vsel %vm1052, %v1848, %v1849
        %v1859 = vsel %vm1052, %v1847, %v1848
        %v1860 = vsel %vm1052, %v1846, %v1847
        %v1861 = vsel %vm1052, %v1845, %v1846
        %v1862 = vsel %vm1052, %v1844, %v1845
        %v1863 = vsel %vm1052, %v1843, %v1844
        %v1864 = vsel %vm1052, %v1842, %v1843
        %v1865 = vsel %vm1052, %v1841, %v1842
        %v1866 = vsel %vm1052, %v1840, %v1841
        %v1867 = vsel %vm1052, %v1839, %v1840
        %v1868 = vsel %vm1052, %v1838, %v1839
        %v1869 = vsel %vm1052, %v1837, %v1838
        %v1870 = vsel %vm1052, %v1836, %v1837
        %v1871 = vsel %vm1052, %v1835, %v1836
        %v1872 = vsel %vm1052, %v1834, %v1835
        %v1873 = vsel %vm1052, %v1833, %v1834
        %v1874 = vsel %vm1052, %v1832, %v1833
        %v1875 = vsel %vm1052, %v1831, %v1832
        %v1876 = vsel %vm1052, %v1830, %v1831
        %v1877 = vsel %vm1052, %v1829, %v1830
        %v1878 = vsel %vm1052, %v1828, %v1829
        %v1879 = vsel %vm1052, %v1827, %v1828
        %v1880 = vsel %vm1052, %v1826, %v1827
        %v1881 = vsel %vm1052, %v1825, %v1826
        %v1882 = vsel %vm1052, %v1824, %v1825
        %v1883 = vsel %vm1052, %v1823, %v1824
        %v1884 = vsel %vm1052, %v1822, %v1823
        %v1885 = vsel %vm1052, %v1853, %v1822
        %v1886 = vsel %vm1089, %v1885, 0.0
        %v1887 = vsel %vm1090, %v1884, 0.0
        %v1888 = vsel %vm1089, %v1883, 0.0
        %v1889 = vsel %vm1090, %v1882, 0.0
        %v1890 = vsel %vm1089, %v1881, 0.0
        %v1891 = vsel %vm1090, %v1880, 0.0
        %v1892 = vsel %vm1089, %v1879, 0.0
        %v1893 = vsel %vm1090, %v1878, 0.0
        %v1894 = vsel %vm1089, %v1877, 0.0
        %v1895 = vsel %vm1090, %v1876, 0.0
        %v1896 = vsel %vm1089, %v1875, 0.0
        %v1897 = vsel %vm1090, %v1874, 0.0
        %v1898 = vsel %vm1089, %v1873, 0.0
        %v1899 = vsel %vm1090, %v1872, 0.0
        %v1900 = vsel %vm1089, %v1871, 0.0
        %v1901 = vsel %vm1090, %v1870, 0.0
        %v1902 = vsel %vm1089, %v1869, 0.0
        %v1903 = vsel %vm1090, %v1868, 0.0
        %v1904 = vsel %vm1089, %v1867, 0.0
        %v1905 = vsel %vm1090, %v1866, 0.0
        %v1906 = vsel %vm1089, %v1865, 0.0
        %v1907 = vsel %vm1090, %v1864, 0.0
        %v1908 = vsel %vm1089, %v1863, 0.0
        %v1909 = vsel %vm1090, %v1862, 0.0
        %v1910 = vsel %vm1089, %v1861, 0.0
        %v1911 = vsel %vm1090, %v1860, 0.0
        %v1912 = vsel %vm1089, %v1859, 0.0
        %v1913 = vsel %vm1090, %v1858, 0.0
        %v1914 = vsel %vm1089, %v1857, 0.0
        %v1915 = vsel %vm1090, %v1856, 0.0
        %v1916 = vsel %vm1089, %v1855, 0.0
        %v1917 = vsel %vm1090, %v1854, 0.0
        %1950 = vrot.lane.b32.xlu0 %v1886, 32
        %v1951 = vpop.permute.xlu0 %1950
        %1952 = vrot.lane.b32.xlu0 %v1887, 32
        %v1953 = vpop.permute.xlu0 %1952
        %1954 = vrot.lane.b32.xlu0 %v1888, 32
        %v1955 = vpop.permute.xlu0 %1954
        %1956 = vrot.lane.b32.xlu0 %v1889, 32
        %v1957 = vpop.permute.xlu0 %1956
        %1958 = vrot.lane.b32.xlu0 %v1890, 32
        %v1959 = vpop.permute.xlu0 %1958
        %1960 = vrot.lane.b32.xlu0 %v1891, 32
        %v1961 = vpop.permute.xlu0 %1960
        %1962 = vrot.lane.b32.xlu0 %v1892, 32
        %v1963 = vpop.permute.xlu0 %1962
        %1964 = vrot.lane.b32.xlu0 %v1893, 32
        %v1965 = vpop.permute.xlu0 %1964
        %1966 = vrot.lane.b32.xlu0 %v1894, 32
        %v1967 = vpop.permute.xlu0 %1966
        %1968 = vrot.lane.b32.xlu0 %v1895, 32
        %v1969 = vpop.permute.xlu0 %1968
        %1970 = vrot.lane.b32.xlu0 %v1896, 32
        %v1971 = vpop.permute.xlu0 %1970
        %1972 = vrot.lane.b32.xlu0 %v1897, 32
        %v1973 = vpop.permute.xlu0 %1972
        %1974 = vrot.lane.b32.xlu0 %v1898, 32
        %v1975 = vpop.permute.xlu0 %1974
        %1976 = vrot.lane.b32.xlu0 %v1899, 32
        %v1977 = vpop.permute.xlu0 %1976
        %1978 = vrot.lane.b32.xlu0 %v1900, 32
        %v1979 = vpop.permute.xlu0 %1978
        %1980 = vrot.lane.b32.xlu0 %v1901, 32
        %v1981 = vpop.permute.xlu0 %1980
        %1982 = vrot.lane.b32.xlu0 %v1902, 32
        %v1983 = vpop.permute.xlu0 %1982
        %1984 = vrot.lane.b32.xlu0 %v1903, 32
        %v1985 = vpop.permute.xlu0 %1984
        %1986 = vrot.lane.b32.xlu0 %v1904, 32
        %v1987 = vpop.permute.xlu0 %1986
        %1988 = vrot.lane.b32.xlu0 %v1905, 32
        %v1989 = vpop.permute.xlu0 %1988
        %1990 = vrot.lane.b32.xlu0 %v1906, 32
        %v1991 = vpop.permute.xlu0 %1990
        %1992 = vrot.lane.b32.xlu0 %v1907, 32
        %v1993 = vpop.permute.xlu0 %1992
        %1994 = vrot.lane.b32.xlu0 %v1908, 32
        %v1995 = vpop.permute.xlu0 %1994
        %1996 = vrot.lane.b32.xlu0 %v1909, 32
        %v1997 = vpop.permute.xlu0 %1996
        %1998 = vrot.lane.b32.xlu0 %v1910, 32
        %v1999 = vpop.permute.xlu0 %1998
        %2000 = vrot.lane.b32.xlu0 %v1911, 32
        %v2001 = vpop.permute.xlu0 %2000
        %2002 = vrot.lane.b32.xlu0 %v1912, 32
        %v2003 = vpop.permute.xlu0 %2002
        %2004 = vrot.lane.b32.xlu0 %v1913, 32
        %v2005 = vpop.permute.xlu0 %2004
        %2006 = vrot.lane.b32.xlu0 %v1914, 32
        %v2007 = vpop.permute.xlu0 %2006
        %2008 = vrot.lane.b32.xlu0 %v1915, 32
        %v2009 = vpop.permute.xlu0 %2008
        %2010 = vrot.lane.b32.xlu0 %v1916, 32
        %v2011 = vpop.permute.xlu0 %2010
        %2012 = vrot.lane.b32.xlu0 %v1917, 32
        %v2013 = vpop.permute.xlu0 %2012
        %2078 = vrot.lane.b32.xlu0 %v1694, 64
        %v2079 = vpop.permute.xlu0 %2078
        %2080 = vrot.lane.b32.xlu0 %v1695, 64
        %v2081 = vpop.permute.xlu0 %2080
        %2082 = vrot.lane.b32.xlu0 %v1696, 64
        %v2083 = vpop.permute.xlu0 %2082
        %2084 = vrot.lane.b32.xlu0 %v1697, 64
        %v2085 = vpop.permute.xlu0 %2084
        %2086 = vrot.lane.b32.xlu0 %v1698, 64
        %v2087 = vpop.permute.xlu0 %2086
        %2088 = vrot.lane.b32.xlu0 %v1699, 64
        %v2089 = vpop.permute.xlu0 %2088
        %2090 = vrot.lane.b32.xlu0 %v1700, 64
        %v2091 = vpop.permute.xlu0 %2090
        %2092 = vrot.lane.b32.xlu0 %v1701, 64
        %v2093 = vpop.permute.xlu0 %2092
        %2094 = vrot.lane.b32.xlu0 %v1702, 64
        %v2095 = vpop.permute.xlu0 %2094
        %2096 = vrot.lane.b32.xlu0 %v1703, 64
        %v2097 = vpop.permute.xlu0 %2096
        %2098 = vrot.lane.b32.xlu0 %v1704, 64
        %v2099 = vpop.permute.xlu0 %2098
        %2100 = vrot.lane.b32.xlu0 %v1705, 64
        %v2101 = vpop.permute.xlu0 %2100
        %2102 = vrot.lane.b32.xlu0 %v1706, 64
        %v2103 = vpop.permute.xlu0 %2102
        %2104 = vrot.lane.b32.xlu0 %v1707, 64
        %v2105 = vpop.permute.xlu0 %2104
        %2106 = vrot.lane.b32.xlu0 %v1708, 64
        %v2107 = vpop.permute.xlu0 %2106
        %2108 = vrot.lane.b32.xlu0 %v1709, 64
        %v2109 = vpop.permute.xlu0 %2108
        %2110 = vrot.lane.b32.xlu0 %v1710, 64
        %v2111 = vpop.permute.xlu0 %2110
        %2112 = vrot.lane.b32.xlu0 %v1711, 64
        %v2113 = vpop.permute.xlu0 %2112
        %2114 = vrot.lane.b32.xlu0 %v1712, 64
        %v2115 = vpop.permute.xlu0 %2114
        %2116 = vrot.lane.b32.xlu0 %v1713, 64
        %v2117 = vpop.permute.xlu0 %2116
        %2118 = vrot.lane.b32.xlu0 %v1714, 64
        %v2119 = vpop.permute.xlu0 %2118
        %2120 = vrot.lane.b32.xlu0 %v1715, 64
        %v2121 = vpop.permute.xlu0 %2120
        %2122 = vrot.lane.b32.xlu0 %v1716, 64
        %v2123 = vpop.permute.xlu0 %2122
        %2124 = vrot.lane.b32.xlu0 %v1717, 64
        %v2125 = vpop.permute.xlu0 %2124
        %2126 = vrot.lane.b32.xlu0 %v1718, 64
        %v2127 = vpop.permute.xlu0 %2126
        %2128 = vrot.lane.b32.xlu0 %v1719, 64
        %v2129 = vpop.permute.xlu0 %2128
        %2130 = vrot.lane.b32.xlu0 %v1720, 64
        %v2131 = vpop.permute.xlu0 %2130
        %2132 = vrot.lane.b32.xlu0 %v1721, 64
        %v2133 = vpop.permute.xlu0 %2132
        %2134 = vrot.lane.b32.xlu0 %v1722, 64
        %v2135 = vpop.permute.xlu0 %2134
        %2136 = vrot.lane.b32.xlu0 %v1723, 64
        %v2137 = vpop.permute.xlu0 %2136
        %2138 = vrot.lane.b32.xlu0 %v1724, 64
        %v2139 = vpop.permute.xlu0 %2138
        %2140 = vrot.lane.b32.xlu0 %v1725, 64
        %v2141 = vpop.permute.xlu0 %2140
        %vm2174 = vcmask 261120
        %v2175 = vsel %vm2174, %v1790, %v1951
        %v2176 = vsel %vm2174, %v1791, %v1953
        %v2177 = vsel %vm2174, %v1792, %v1955
        %v2178 = vsel %vm2174, %v1793, %v1957
        %v2179 = vsel %vm2174, %v1794, %v1959
        %v2180 = vsel %vm2174, %v1795, %v1961
        %v2181 = vsel %vm2174, %v1796, %v1963
        %v2182 = vsel %vm2174, %v1797, %v1965
        %v2183 = vsel %vm2174, %v1798, %v1967
        %v2184 = vsel %vm2174, %v1799, %v1969
        %v2185 = vsel %vm2174, %v1800, %v1971
        %v2186 = vsel %vm2174, %v1801, %v1973
        %v2187 = vsel %vm2174, %v1802, %v1975
        %v2188 = vsel %vm2174, %v1803, %v1977
        %v2189 = vsel %vm2174, %v1804, %v1979
        %v2190 = vsel %vm2174, %v1805, %v1981
        %v2191 = vsel %vm2174, %v1806, %v1983
        %v2192 = vsel %vm2174, %v1807, %v1985
        %v2193 = vsel %vm2174, %v1808, %v1987
        %v2194 = vsel %vm2174, %v1809, %v1989
        %v2195 = vsel %vm2174, %v1810, %v1991
        %v2196 = vsel %vm2174, %v1811, %v1993
        %v2197 = vsel %vm2174, %v1812, %v1995
        %v2198 = vsel %vm2174, %v1813, %v1997
        %v2199 = vsel %vm2174, %v1814, %v1999
        %v2200 = vsel %vm2174, %v1815, %v2001
        %v2201 = vsel %vm2174, %v1816, %v2003
        %v2202 = vsel %vm2174, %v1817, %v2005
        %v2203 = vsel %vm2174, %v1818, %v2007
        %v2204 = vsel %vm2174, %v1819, %v2009
        %v2205 = vsel %vm2174, %v1820, %v2011
        %v2206 = vsel %vm2174, %v1821, %v2013
        %vm2207 = vcmask 523264
        %v2208 = vsel %vm2207, %v2175, %v2079
        %v2209 = vsel %vm2207, %v2176, %v2081
        %v2210 = vsel %vm2207, %v2177, %v2083
        %v2211 = vsel %vm2207, %v2178, %v2085
        %v2212 = vsel %vm2207, %v2179, %v2087
        %v2213 = vsel %vm2207, %v2180, %v2089
        %v2214 = vsel %vm2207, %v2181, %v2091
        %v2215 = vsel %vm2207, %v2182, %v2093
        %v2216 = vsel %vm2207, %v2183, %v2095
        %v2217 = vsel %vm2207, %v2184, %v2097
        %v2218 = vsel %vm2207, %v2185, %v2099
        %v2219 = vsel %vm2207, %v2186, %v2101
        %v2220 = vsel %vm2207, %v2187, %v2103
        %v2221 = vsel %vm2207, %v2188, %v2105
        %v2222 = vsel %vm2207, %v2189, %v2107
        %v2223 = vsel %vm2207, %v2190, %v2109
        %v2224 = vsel %vm2207, %v2191, %v2111
        %v2225 = vsel %vm2207, %v2192, %v2113
        %v2226 = vsel %vm2207, %v2193, %v2115
        %v2227 = vsel %vm2207, %v2194, %v2117
        %v2228 = vsel %vm2207, %v2195, %v2119
        %v2229 = vsel %vm2207, %v2196, %v2121
        %v2230 = vsel %vm2207, %v2197, %v2123
        %v2231 = vsel %vm2207, %v2198, %v2125
        %v2232 = vsel %vm2207, %v2199, %v2127
        %v2233 = vsel %vm2207, %v2200, %v2129
        %v2234 = vsel %vm2207, %v2201, %v2131
        %v2235 = vsel %vm2207, %v2202, %v2133
        %v2236 = vsel %vm2207, %v2203, %v2135
        %v2237 = vsel %vm2207, %v2204, %v2137
        %v2238 = vsel %vm2207, %v2205, %v2139
        %v2239 = vsel %vm2207, %v2206, %v2141
        %v2240 = vpack.c.bf16 %v2209, %v2208
        %v2241 = vpack.c.bf16 %v2211, %v2210
        %v2242 = vpack.c.bf16 %v2213, %v2212
        %v2243 = vpack.c.bf16 %v2215, %v2214
        %v2244 = vpack.c.bf16 %v2217, %v2216
        %v2245 = vpack.c.bf16 %v2219, %v2218
        %v2246 = vpack.c.bf16 %v2221, %v2220
        %v2247 = vpack.c.bf16 %v2223, %v2222
        %v2248 = vpack.c.bf16 %v2225, %v2224
        %v2249 = vpack.c.bf16 %v2227, %v2226
        %v2250 = vpack.c.bf16 %v2229, %v2228
        %v2251 = vpack.c.bf16 %v2231, %v2230
        %v2252 = vpack.c.bf16 %v2233, %v2232
        %v2253 = vpack.c.bf16 %v2235, %v2234
        %v2254 = vpack.c.bf16 %v2237, %v2236
        %v2255 = vpack.c.bf16 %v2239, %v2238
        %v2256 = vld [vmem:[#allocation10] sm:$0xf]
        %v2257 = vld [vmem:[#allocation10 + $0x4] sm:$0xf]
        %v2258 = vld [vmem:[#allocation10 + $0x8] sm:$0xf]
        %v2259 = vld [vmem:[#allocation10 + $0xc] sm:$0xf]
        %v2260 = vld [vmem:[#allocation10 + $0x10] sm:$0xf]
        %v2261 = vld [vmem:[#allocation10 + $0x14] sm:$0xf]
        %v2262 = vld [vmem:[#allocation10 + $0x18] sm:$0xf]
        %v2263 = vld [vmem:[#allocation10 + $0x1c] sm:$0xf]
        %v2264 = vld [vmem:[#allocation10 + $0x20] sm:$0xf]
        %v2265 = vld [vmem:[#allocation10 + $0x24] sm:$0xf]
        %v2266 = vld [vmem:[#allocation10 + $0x28] sm:$0xf]
        %v2267 = vld [vmem:[#allocation10 + $0x2c] sm:$0xf]
        %v2268 = vld [vmem:[#allocation11] sm:$0x1]
        %v2270 = vlaneseq
        %v2271 = vshrl.u32 %v2270, 7
        %v2272 = vsub.s32 0, %v2271
        %v2273 = vrot.slane %v2268, %v2272
        %v2287 = vunpack.c.l.b16 %v2256
        %v2288 = vunpack.c.l.b16 %v2257
        %v2289 = vunpack.c.l.b16 %v2258
        %v2290 = vunpack.c.l.b16 %v2259
        %v2291 = vunpack.c.l.b16 %v2260
        %v2292 = vunpack.c.l.b16 %v2261
        %v2293 = vunpack.c.l.b16 %v2262
        %v2294 = vunpack.c.l.b16 %v2263
        %v2295 = vunpack.c.l.b16 %v2264
        %v2296 = vunpack.c.l.b16 %v2265
        %v2297 = vunpack.c.l.b16 %v2266
        %v2298 = vunpack.c.l.b16 %v2267
        %v2299 = vpack.c.b16 %v2288, %v2287
        %v2300 = vpack.c.b16 %v2290, %v2289
        %v2301 = vpack.c.b16 %v2292, %v2291
        %v2302 = vpack.c.b16 %v2294, %v2293
        %v2303 = vpack.c.b16 %v2296, %v2295
        %v2304 = vpack.c.b16 %v2298, %v2297
        %vm2311 = vcmask 785408
        %v2313 = vsel %vm2311, %v2240, 0
        %v2316 = vsel %vm2311, %v2241, 0
        %v2319 = vsel %vm2311, %v2242, 0
        %v2322 = vsel %vm2311, %v2243, 0
        %v2325 = vsel %vm2311, %v2244, 0
        %v2328 = vsel %vm2311, %v2245, 0
        %v2331 = vsel %vm2311, %v2246, 0
        %v2334 = vsel %vm2311, %v2247, 0
        %v2337 = vsel %vm2311, %v2248, 0
        %v2340 = vsel %vm2311, %v2249, 0
        %v2343 = vsel %vm2311, %v2250, 0
        %v2346 = vsel %vm2311, %v2251, 0
        %v2349 = vsel %vm2311, %v2252, 0
        %v2352 = vsel %vm2311, %v2253, 0
        %v2355 = vsel %vm2311, %v2254, 0
        %v2358 = vsel %vm2311, %v2255, 0
        %2360 = vmatprep.subr.bf16.mxu0 0
        %2361 = vmatpush1.bf16.msra.mxu0 %v2299
        %2362 = vmatprep.subr.bf16.mxu0 0
        %2363 = vmatpush1.bf16.msra.mxu0 %v2300
        %2364 = vmatprep.subr.bf16.mxu0 0
        %2365 = vmatpush1.bf16.msra.mxu0 %v2301
        %2366 = vmatprep.subr.bf16.mxu0 0
        %2367 = vmatpush1.bf16.msra.mxu0 %v2302
        %2368 = vmatprep.subr.bf16.mxu0 0
        %2369 = vmatpush1.bf16.msra.mxu0 %v2303
        %2370 = vmatprep.subr.bf16.mxu0 0
        %2371 = vmatpush1.bf16.msra.mxu0 %v2304
        %2372 = vmatprep.subr.bf16.mxu0 0
        %2373 = vmatpush1.bf16.msra.mxu0 0
        %2374 = vmatprep.subr.bf16.mxu0 0
        %2375 = vmatpush1.bf16.msra.mxu0 0
        %2376 = vmatprep.subr.bf16.mxu0 0
        %2377 = vmatpush1.bf16.msra.mxu0 0
        %2378 = vmatprep.subr.bf16.mxu0 0
        %2379 = vmatpush1.bf16.msra.mxu0 0
        %2380 = vmatprep.subr.bf16.mxu0 0
        %2381 = vmatpush1.bf16.msra.mxu0 0
        %2382 = vmatprep.subr.bf16.mxu0 0
        %2383 = vmatpush1.bf16.msra.mxu0 0
        %2384 = vmatprep.subr.bf16.mxu0 0
        %2385 = vmatpush1.bf16.msra.mxu0 0
        %2386 = vmatprep.subr.bf16.mxu0 0
        %2387 = vmatpush1.bf16.msra.mxu0 0
        %2388 = vmatprep.subr.bf16.mxu0 0
        %2389 = vmatpush1.bf16.msra.mxu0 0
        %2390 = vmatprep.subr.bf16.mxu0 0
        %2391 = vmatpush1.bf16.msra.mxu0 0
        %2392 = vmatprep.mubr.bf16.mxu0 0
        %2393 = vmatmul.mubr.bf16.gmra.mrb[0].mxu0 %v2313
        %v2394 = vpop.f32.mrb[0].mxu0
        %v2395 = vadd.f32 %v2273, %v2394
        %v2396 = vpop.f32.mrb[0].mxu0
        %v2397 = vpop.f32.mrb[0].mxu0
        %v2398 = vadd.f32 %v2273, %v2397
        %v2399 = vpop.f32.mrb[0].mxu0
        %2400 = vmatprep.mubr.bf16.mxu0 0
        %2401 = vmatmul.mubr.bf16.gmra.mrb[0].mxu0 %v2316
        %v2402 = vpop.f32.mrb[0].mxu0
        %v2403 = vadd.f32 %v2273, %v2402
        %v2404 = vpop.f32.mrb[0].mxu0
        %v2405 = vpop.f32.mrb[0].mxu0
        %v2406 = vadd.f32 %v2273, %v2405
        %v2407 = vpop.f32.mrb[0].mxu0
        %2408 = vmatprep.mubr.bf16.mxu0 0
        %2409 = vmatmul.mubr.bf16.gmra.mrb[0].mxu0 %v2319
        %v2410 = vpop.f32.mrb[0].mxu0
        %v2411 = vadd.f32 %v2273, %v2410
        %v2412 = vpop.f32.mrb[0].mxu0
        %v2413 = vpop.f32.mrb[0].mxu0
        %v2414 = vadd.f32 %v2273, %v2413
        %v2415 = vpop.f32.mrb[0].mxu0
        %2416 = vmatprep.mubr.bf16.mxu0 0
        %2417 = vmatmul.mubr.bf16.gmra.mrb[0].mxu0 %v2322
        %v2418 = vpop.f32.mrb[0].mxu0
        %v2419 = vadd.f32 %v2273, %v2418
        %v2420 = vpop.f32.mrb[0].mxu0
        %v2421 = vpop.f32.mrb[0].mxu0
        %v2422 = vadd.f32 %v2273, %v2421
        %v2423 = vpop.f32.mrb[0].mxu0
        %2424 = vmatprep.mubr.bf16.mxu0 0
        %2425 = vmatmul.mubr.bf16.gmra.mrb[0].mxu0 %v2325
        %v2426 = vpop.f32.mrb[0].mxu0
        %v2427 = vadd.f32 %v2273, %v2426
        %v2428 = vpop.f32.mrb[0].mxu0
        %v2429 = vpop.f32.mrb[0].mxu0
        %v2430 = vadd.f32 %v2273, %v2429
        %v2431 = vpop.f32.mrb[0].mxu0
        %2432 = vmatprep.mubr.bf16.mxu0 0
        %2433 = vmatmul.mubr.bf16.gmra.mrb[0].mxu0 %v2328
        %v2434 = vpop.f32.mrb[0].mxu0
        %v2435 = vadd.f32 %v2273, %v2434
        %v2436 = vpop.f32.mrb[0].mxu0
        %v2437 = vpop.f32.mrb[0].mxu0
        %v2438 = vadd.f32 %v2273, %v2437
        %v2439 = vpop.f32.mrb[0].mxu0
        %2440 = vmatprep.mubr.bf16.mxu0 0
        %2441 = vmatmul.mubr.bf16.gmra.mrb[0].mxu0 %v2331
        %v2442 = vpop.f32.mrb[0].mxu0
        %v2443 = vadd.f32 %v2273, %v2442
        %v2444 = vpop.f32.mrb[0].mxu0
        %v2445 = vpop.f32.mrb[0].mxu0
        %v2446 = vadd.f32 %v2273, %v2445
        %v2447 = vpop.f32.mrb[0].mxu0
        %2448 = vmatprep.mubr.bf16.mxu0 0
        %2449 = vmatmul.mubr.bf16.gmra.mrb[0].mxu0 %v2334
        %v2450 = vpop.f32.mrb[0].mxu0
        %v2451 = vadd.f32 %v2273, %v2450
        %v2452 = vpop.f32.mrb[0].mxu0
        %v2453 = vpop.f32.mrb[0].mxu0
        %v2454 = vadd.f32 %v2273, %v2453
        %v2455 = vpop.f32.mrb[0].mxu0
        %2456 = vmatprep.mubr.bf16.mxu0 0
        %2457 = vmatmul.mubr.bf16.gmra.mrb[0].mxu0 %v2337
        %v2458 = vpop.f32.mrb[0].mxu0
        %v2459 = vadd.f32 %v2273, %v2458
        %v2460 = vpop.f32.mrb[0].mxu0
        %v2461 = vpop.f32.mrb[0].mxu0
        %v2462 = vadd.f32 %v2273, %v2461
        %v2463 = vpop.f32.mrb[0].mxu0
        %2464 = vmatprep.mubr.bf16.mxu0 0
        %2465 = vmatmul.mubr.bf16.gmra.mrb[0].mxu0 %v2340
        %v2466 = vpop.f32.mrb[0].mxu0
        %v2467 = vadd.f32 %v2273, %v2466
        %v2468 = vpop.f32.mrb[0].mxu0
        %v2469 = vpop.f32.mrb[0].mxu0
        %v2470 = vadd.f32 %v2273, %v2469
        %v2471 = vpop.f32.mrb[0].mxu0
        %2472 = vmatprep.mubr.bf16.mxu0 0
        %2473 = vmatmul.mubr.bf16.gmra.mrb[0].mxu0 %v2343
        %v2474 = vpop.f32.mrb[0].mxu0
        %v2475 = vadd.f32 %v2273, %v2474
        %v2476 = vpop.f32.mrb[0].mxu0
        %v2477 = vpop.f32.mrb[0].mxu0
        %v2478 = vadd.f32 %v2273, %v2477
        %v2479 = vpop.f32.mrb[0].mxu0
        %2480 = vmatprep.mubr.bf16.mxu0 0
        %2481 = vmatmul.mubr.bf16.gmra.mrb[0].mxu0 %v2346
        %v2482 = vpop.f32.mrb[0].mxu0
        %v2483 = vadd.f32 %v2273, %v2482
        %v2484 = vpop.f32.mrb[0].mxu0
        %v2485 = vpop.f32.mrb[0].mxu0
        %v2486 = vadd.f32 %v2273, %v2485
        %v2487 = vpop.f32.mrb[0].mxu0
        %2488 = vmatprep.mubr.bf16.mxu0 0
        %2489 = vmatmul.mubr.bf16.gmra.mrb[0].mxu0 %v2349
        %v2490 = vpop.f32.mrb[0].mxu0
        %v2491 = vadd.f32 %v2273, %v2490
        %v2492 = vpop.f32.mrb[0].mxu0
        %v2493 = vpop.f32.mrb[0].mxu0
        %v2494 = vadd.f32 %v2273, %v2493
        %v2495 = vpop.f32.mrb[0].mxu0
        %2496 = vmatprep.mubr.bf16.mxu0 0
        %2497 = vmatmul.mubr.bf16.gmra.mrb[0].mxu0 %v2352
        %v2498 = vpop.f32.mrb[0].mxu0
        %v2499 = vadd.f32 %v2273, %v2498
        %v2500 = vpop.f32.mrb[0].mxu0
        %v2501 = vpop.f32.mrb[0].mxu0
        %v2502 = vadd.f32 %v2273, %v2501
        %v2503 = vpop.f32.mrb[0].mxu0
        %2504 = vmatprep.mubr.bf16.mxu0 0
        %2505 = vmatmul.mubr.bf16.gmra.mrb[0].mxu0 %v2355
        %v2506 = vpop.f32.mrb[0].mxu0
        %v2507 = vadd.f32 %v2273, %v2506
        %v2508 = vpop.f32.mrb[0].mxu0
        %v2509 = vpop.f32.mrb[0].mxu0
        %v2510 = vadd.f32 %v2273, %v2509
        %v2511 = vpop.f32.mrb[0].mxu0
        %2512 = vmatprep.mubr.bf16.mxu0 0
        %2513 = vmatmul.mubr.bf16.gmra.mrb[0].mxu0 %v2358
        %v2514 = vpop.f32.mrb[0].mxu0
        %v2515 = vadd.f32 %v2273, %v2514
        %v2516 = vpop.f32.mrb[0].mxu0
        %v2517 = vpop.f32.mrb[0].mxu0
        %v2518 = vadd.f32 %v2273, %v2517
        %v2519 = vpop.f32.mrb[0].mxu0
        %2520 = vdwg.mxu0
        %v2521 = vmax.f32 %v2395, 0.0
        %v2522 = vmax.f32 %v2398, 0.0
        %v2523 = vmax.f32 %v2403, 0.0
        %v2524 = vmax.f32 %v2406, 0.0
        %v2525 = vmax.f32 %v2411, 0.0
        %v2526 = vmax.f32 %v2414, 0.0
        %v2527 = vmax.f32 %v2419, 0.0
        %v2528 = vmax.f32 %v2422, 0.0
        %v2529 = vmax.f32 %v2427, 0.0
        %v2530 = vmax.f32 %v2430, 0.0
        %v2531 = vmax.f32 %v2435, 0.0
        %v2532 = vmax.f32 %v2438, 0.0
        %v2533 = vmax.f32 %v2443, 0.0
        %v2534 = vmax.f32 %v2446, 0.0
        %v2535 = vmax.f32 %v2451, 0.0
        %v2536 = vmax.f32 %v2454, 0.0
        %v2537 = vmax.f32 %v2459, 0.0
        %v2538 = vmax.f32 %v2462, 0.0
        %v2539 = vmax.f32 %v2467, 0.0
        %v2540 = vmax.f32 %v2470, 0.0
        %v2541 = vmax.f32 %v2475, 0.0
        %v2542 = vmax.f32 %v2478, 0.0
        %v2543 = vmax.f32 %v2483, 0.0
        %v2544 = vmax.f32 %v2486, 0.0
        %v2545 = vmax.f32 %v2491, 0.0
        %v2546 = vmax.f32 %v2494, 0.0
        %v2547 = vmax.f32 %v2499, 0.0
        %v2548 = vmax.f32 %v2502, 0.0
        %v2549 = vmax.f32 %v2507, 0.0
        %v2550 = vmax.f32 %v2510, 0.0
        %v2551 = vmax.f32 %v2515, 0.0
        %v2552 = vmax.f32 %v2518, 0.0
        %v2553 = vpack.c.bf16 %v883, %v882
        %v2554 = vpack.c.bf16 %v885, %v884
        %v2555 = vpack.c.bf16 %v887, %v886
        %v2556 = vpack.c.bf16 %v889, %v888
        %v2557 = vpack.c.bf16 %v891, %v890
        %v2558 = vpack.c.bf16 %v893, %v892
        %v2559 = vpack.c.bf16 %v895, %v894
        %v2560 = vpack.c.bf16 %v897, %v896
        %v2561 = vpack.c.bf16 %v899, %v898
        %v2562 = vpack.c.bf16 %v901, %v900
        %v2563 = vpack.c.bf16 %v903, %v902
        %v2564 = vpack.c.bf16 %v905, %v904
        %v2565 = vpack.c.bf16 %v907, %v906
        %v2566 = vpack.c.bf16 %v909, %v908
        %v2567 = vpack.c.bf16 %v911, %v910
        %v2568 = vpack.c.bf16 %v913, %v912
        %v2569 = vld [vmem:[#allocation13] sm:$0xf]
        %v2570 = vld [vmem:[#allocation14] sm:$0x1]
        %v2572 = vlaneseq
        %v2573 = vshrl.u32 %v2572, 7
        %v2574 = vsub.s32 0, %v2573
        %v2575 = vrot.slane %v2570, %v2574
        %v2578 = vsel %vm1379, %v2553, 0
        %v2581 = vsel %vm1379, %v2554, 0
        %v2584 = vsel %vm1379, %v2555, 0
        %v2587 = vsel %vm1379, %v2556, 0
        %v2590 = vsel %vm1379, %v2557, 0
        %v2593 = vsel %vm1379, %v2558, 0
        %v2596 = vsel %vm1379, %v2559, 0
        %v2599 = vsel %vm1379, %v2560, 0
        %v2602 = vsel %vm1379, %v2561, 0
        %v2605 = vsel %vm1379, %v2562, 0
        %v2608 = vsel %vm1379, %v2563, 0
        %v2611 = vsel %vm1379, %v2564, 0
        %v2614 = vsel %vm1379, %v2565, 0
        %v2617 = vsel %vm1379, %v2566, 0
        %v2620 = vsel %vm1379, %v2567, 0
        %v2623 = vsel %vm1379, %v2568, 0
        %v2626 = vsel %vm1529, %v2569, 0
        %2628 = vmatprep.subr.bf16.mxu0 0
        %2629 = vmatpush1.bf16.msra.mxu0 %v2626
        %2630 = vmatprep.subr.bf16.mxu0 0
        %2631 = vmatpush1.bf16.msra.mxu0 0
        %2632 = vmatprep.subr.bf16.mxu0 0
        %2633 = vmatpush1.bf16.msra.mxu0 0
        %2634 = vmatprep.subr.bf16.mxu0 0
        %2635 = vmatpush1.bf16.msra.mxu0 0
        %2636 = vmatprep.subr.bf16.mxu0 0
        %2637 = vmatpush1.bf16.msra.mxu0 0
        %2638 = vmatprep.subr.bf16.mxu0 0
        %2639 = vmatpush1.bf16.msra.mxu0 0
        %2640 = vmatprep.subr.bf16.mxu0 0
        %2641 = vmatpush1.bf16.msra.mxu0 0
        %2642 = vmatprep.subr.bf16.mxu0 0
        %2643 = vmatpush1.bf16.msra.mxu0 0
        %2644 = vmatprep.subr.bf16.mxu0 0
        %2645 = vmatpush1.bf16.msra.mxu0 0
        %2646 = vmatprep.subr.bf16.mxu0 0
        %2647 = vmatpush1.bf16.msra.mxu0 0
        %2648 = vmatprep.subr.bf16.mxu0 0
        %2649 = vmatpush1.bf16.msra.mxu0 0
        %2650 = vmatprep.subr.bf16.mxu0 0
        %2651 = vmatpush1.bf16.msra.mxu0 0
        %2652 = vmatprep.subr.bf16.mxu0 0
        %2653 = vmatpush1.bf16.msra.mxu0 0
        %2654 = vmatprep.subr.bf16.mxu0 0
        %2655 = vmatpush1.bf16.msra.mxu0 0
        %2656 = vmatprep.subr.bf16.mxu0 0
        %2657 = vmatpush1.bf16.msra.mxu0 0
        %2658 = vmatprep.subr.bf16.mxu0 0
        %2659 = vmatpush1.bf16.msra.mxu0 0
        %2660 = vmatprep.mubr.bf16.mxu0 0
        %2661 = vmatmul.mubr.bf16.gmra.mrb[0].mxu0 %v2578
        %v2662 = vpop.f32.mrb[0].mxu0
        %v2663 = vadd.f32 %v2575, %v2662
        %v2664 = vpop.f32.mrb[0].mxu0
        %v2665 = vpop.f32.mrb[0].mxu0
        %v2666 = vadd.f32 %v2575, %v2665
        %v2667 = vpop.f32.mrb[0].mxu0
        %2668 = vmatprep.mubr.bf16.mxu0 0
        %2669 = vmatmul.mubr.bf16.gmra.mrb[0].mxu0 %v2581
        %v2670 = vpop.f32.mrb[0].mxu0
        %v2671 = vadd.f32 %v2575, %v2670
        %v2672 = vpop.f32.mrb[0].mxu0
        %v2673 = vpop.f32.mrb[0].mxu0
        %v2674 = vadd.f32 %v2575, %v2673
        %v2675 = vpop.f32.mrb[0].mxu0
        %2676 = vmatprep.mubr.bf16.mxu0 0
        %2677 = vmatmul.mubr.bf16.gmra.mrb[0].mxu0 %v2584
        %v2678 = vpop.f32.mrb[0].mxu0
        %v2679 = vadd.f32 %v2575, %v2678
        %v2680 = vpop.f32.mrb[0].mxu0
        %v2681 = vpop.f32.mrb[0].mxu0
        %v2682 = vadd.f32 %v2575, %v2681
        %v2683 = vpop.f32.mrb[0].mxu0
        %2684 = vmatprep.mubr.bf16.mxu0 0
        %2685 = vmatmul.mubr.bf16.gmra.mrb[0].mxu0 %v2587
        %v2686 = vpop.f32.mrb[0].mxu0
        %v2687 = vadd.f32 %v2575, %v2686
        %v2688 = vpop.f32.mrb[0].mxu0
        %v2689 = vpop.f32.mrb[0].mxu0
        %v2690 = vadd.f32 %v2575, %v2689
        %v2691 = vpop.f32.mrb[0].mxu0
        %2692 = vmatprep.mubr.bf16.mxu0 0
        %2693 = vmatmul.mubr.bf16.gmra.mrb[0].mxu0 %v2590
        %v2694 = vpop.f32.mrb[0].mxu0
        %v2695 = vadd.f32 %v2575, %v2694
        %v2696 = vpop.f32.mrb[0].mxu0
        %v2697 = vpop.f32.mrb[0].mxu0
        %v2698 = vadd.f32 %v2575, %v2697
        %v2699 = vpop.f32.mrb[0].mxu0
        %2700 = vmatprep.mubr.bf16.mxu0 0
        %2701 = vmatmul.mubr.bf16.gmra.mrb[0].mxu0 %v2593
        %v2702 = vpop.f32.mrb[0].mxu0
        %v2703 = vadd.f32 %v2575, %v2702
        %v2704 = vpop.f32.mrb[0].mxu0
        %v2705 = vpop.f32.mrb[0].mxu0
        %v2706 = vadd.f32 %v2575, %v2705
        %v2707 = vpop.f32.mrb[0].mxu0
        %2708 = vmatprep.mubr.bf16.mxu0 0
        %2709 = vmatmul.mubr.bf16.gmra.mrb[0].mxu0 %v2596
        %v2710 = vpop.f32.mrb[0].mxu0
        %v2711 = vadd.f32 %v2575, %v2710
        %v2712 = vpop.f32.mrb[0].mxu0
        %v2713 = vpop.f32.mrb[0].mxu0
        %v2714 = vadd.f32 %v2575, %v2713
        %v2715 = vpop.f32.mrb[0].mxu0
        %2716 = vmatprep.mubr.bf16.mxu0 0
        %2717 = vmatmul.mubr.bf16.gmra.mrb[0].mxu0 %v2599
        %v2718 = vpop.f32.mrb[0].mxu0
        %v2719 = vadd.f32 %v2575, %v2718
        %v2720 = vpop.f32.mrb[0].mxu0
        %v2721 = vpop.f32.mrb[0].mxu0
        %v2722 = vadd.f32 %v2575, %v2721
        %v2723 = vpop.f32.mrb[0].mxu0
        %2724 = vmatprep.mubr.bf16.mxu0 0
        %2725 = vmatmul.mubr.bf16.gmra.mrb[0].mxu0 %v2602
        %v2726 = vpop.f32.mrb[0].mxu0
        %v2727 = vadd.f32 %v2575, %v2726
        %v2728 = vpop.f32.mrb[0].mxu0
        %v2729 = vpop.f32.mrb[0].mxu0
        %v2730 = vadd.f32 %v2575, %v2729
        %v2731 = vpop.f32.mrb[0].mxu0
        %2732 = vmatprep.mubr.bf16.mxu0 0
        %2733 = vmatmul.mubr.bf16.gmra.mrb[0].mxu0 %v2605
        %v2734 = vpop.f32.mrb[0].mxu0
        %v2735 = vadd.f32 %v2575, %v2734
        %v2736 = vpop.f32.mrb[0].mxu0
        %v2737 = vpop.f32.mrb[0].mxu0
        %v2738 = vadd.f32 %v2575, %v2737
        %v2739 = vpop.f32.mrb[0].mxu0
        %2740 = vmatprep.mubr.bf16.mxu0 0
        %2741 = vmatmul.mubr.bf16.gmra.mrb[0].mxu0 %v2608
        %v2742 = vpop.f32.mrb[0].mxu0
        %v2743 = vadd.f32 %v2575, %v2742
        %v2744 = vpop.f32.mrb[0].mxu0
        %v2745 = vpop.f32.mrb[0].mxu0
        %v2746 = vadd.f32 %v2575, %v2745
        %v2747 = vpop.f32.mrb[0].mxu0
        %2748 = vmatprep.mubr.bf16.mxu0 0
        %2749 = vmatmul.mubr.bf16.gmra.mrb[0].mxu0 %v2611
        %v2750 = vpop.f32.mrb[0].mxu0
        %v2751 = vadd.f32 %v2575, %v2750
        %v2752 = vpop.f32.mrb[0].mxu0
        %v2753 = vpop.f32.mrb[0].mxu0
        %v2754 = vadd.f32 %v2575, %v2753
        %v2755 = vpop.f32.mrb[0].mxu0
        %2756 = vmatprep.mubr.bf16.mxu0 0
        %2757 = vmatmul.mubr.bf16.gmra.mrb[0].mxu0 %v2614
        %v2758 = vpop.f32.mrb[0].mxu0
        %v2759 = vadd.f32 %v2575, %v2758
        %v2760 = vpop.f32.mrb[0].mxu0
        %v2761 = vpop.f32.mrb[0].mxu0
        %v2762 = vadd.f32 %v2575, %v2761
        %v2763 = vpop.f32.mrb[0].mxu0
        %2764 = vmatprep.mubr.bf16.mxu0 0
        %2765 = vmatmul.mubr.bf16.gmra.mrb[0].mxu0 %v2617
        %v2766 = vpop.f32.mrb[0].mxu0
        %v2767 = vadd.f32 %v2575, %v2766
        %v2768 = vpop.f32.mrb[0].mxu0
        %v2769 = vpop.f32.mrb[0].mxu0
        %v2770 = vadd.f32 %v2575, %v2769
        %v2771 = vpop.f32.mrb[0].mxu0
        %2772 = vmatprep.mubr.bf16.mxu0 0
        %2773 = vmatmul.mubr.bf16.gmra.mrb[0].mxu0 %v2620
        %v2774 = vpop.f32.mrb[0].mxu0
        %v2775 = vadd.f32 %v2575, %v2774
        %v2776 = vpop.f32.mrb[0].mxu0
        %v2777 = vpop.f32.mrb[0].mxu0
        %v2778 = vadd.f32 %v2575, %v2777
        %v2779 = vpop.f32.mrb[0].mxu0
        %2780 = vmatprep.mubr.bf16.mxu0 0
        %2781 = vmatmul.mubr.bf16.gmra.mrb[0].mxu0 %v2623
        %v2782 = vpop.f32.mrb[0].mxu0
        %v2783 = vadd.f32 %v2575, %v2782
        %v2784 = vpop.f32.mrb[0].mxu0
        %v2785 = vpop.f32.mrb[0].mxu0
        %v2786 = vadd.f32 %v2575, %v2785
        %v2787 = vpop.f32.mrb[0].mxu0
        %2788 = vdwg.mxu0
        %v2789 = vadd.f32 %v2521, %v2663
        %v2790 = vadd.f32 %v2522, %v2666
        %v2791 = vadd.f32 %v2523, %v2671
        %v2792 = vadd.f32 %v2524, %v2674
        %v2793 = vadd.f32 %v2525, %v2679
        %v2794 = vadd.f32 %v2526, %v2682
        %v2795 = vadd.f32 %v2527, %v2687
        %v2796 = vadd.f32 %v2528, %v2690
        %v2797 = vadd.f32 %v2529, %v2695
        %v2798 = vadd.f32 %v2530, %v2698
        %v2799 = vadd.f32 %v2531, %v2703
        %v2800 = vadd.f32 %v2532, %v2706
        %v2801 = vadd.f32 %v2533, %v2711
        %v2802 = vadd.f32 %v2534, %v2714
        %v2803 = vadd.f32 %v2535, %v2719
        %v2804 = vadd.f32 %v2536, %v2722
        %v2805 = vadd.f32 %v2537, %v2727
        %v2806 = vadd.f32 %v2538, %v2730
        %v2807 = vadd.f32 %v2539, %v2735
        %v2808 = vadd.f32 %v2540, %v2738
        %v2809 = vadd.f32 %v2541, %v2743
        %v2810 = vadd.f32 %v2542, %v2746
        %v2811 = vadd.f32 %v2543, %v2751
        %v2812 = vadd.f32 %v2544, %v2754
        %v2813 = vadd.f32 %v2545, %v2759
        %v2814 = vadd.f32 %v2546, %v2762
        %v2815 = vadd.f32 %v2547, %v2767
        %v2816 = vadd.f32 %v2548, %v2770
        %v2817 = vadd.f32 %v2549, %v2775
        %v2818 = vadd.f32 %v2550, %v2778
        %v2819 = vadd.f32 %v2551, %v2783
        %v2820 = vadd.f32 %v2552, %v2786
        %v2821 = vmax.f32 %v2789, 0.0
        %v2822 = vmax.f32 %v2790, 0.0
        %v2823 = vmax.f32 %v2791, 0.0
        %v2824 = vmax.f32 %v2792, 0.0
        %v2825 = vmax.f32 %v2793, 0.0
        %v2826 = vmax.f32 %v2794, 0.0
        %v2827 = vmax.f32 %v2795, 0.0
        %v2828 = vmax.f32 %v2796, 0.0
        %v2829 = vmax.f32 %v2797, 0.0
        %v2830 = vmax.f32 %v2798, 0.0
        %v2831 = vmax.f32 %v2799, 0.0
        %v2832 = vmax.f32 %v2800, 0.0
        %v2833 = vmax.f32 %v2801, 0.0
        %v2834 = vmax.f32 %v2802, 0.0
        %v2835 = vmax.f32 %v2803, 0.0
        %v2836 = vmax.f32 %v2804, 0.0
        %v2837 = vmax.f32 %v2805, 0.0
        %v2838 = vmax.f32 %v2806, 0.0
        %v2839 = vmax.f32 %v2807, 0.0
        %v2840 = vmax.f32 %v2808, 0.0
        %v2841 = vmax.f32 %v2809, 0.0
        %v2842 = vmax.f32 %v2810, 0.0
        %v2843 = vmax.f32 %v2811, 0.0
        %v2844 = vmax.f32 %v2812, 0.0
        %v2845 = vmax.f32 %v2813, 0.0
        %v2846 = vmax.f32 %v2814, 0.0
        %v2847 = vmax.f32 %v2815, 0.0
        %v2848 = vmax.f32 %v2816, 0.0
        %v2849 = vmax.f32 %v2817, 0.0
        %v2850 = vmax.f32 %v2818, 0.0
        %v2851 = vmax.f32 %v2819, 0.0
        %v2852 = vmax.f32 %v2820, 0.0
        %v2853 = vrot.slane %v2821, 4
        %v2854 = vrot.slane %v2822, 4
        %v2855 = vrot.slane %v2823, 4
        %v2856 = vrot.slane %v2824, 4
        %v2857 = vrot.slane %v2825, 4
        %v2858 = vrot.slane %v2826, 4
        %v2859 = vrot.slane %v2827, 4
        %v2860 = vrot.slane %v2828, 4
        %v2861 = vrot.slane %v2829, 4
        %v2862 = vrot.slane %v2830, 4
        %v2863 = vrot.slane %v2831, 4
        %v2864 = vrot.slane %v2832, 4
        %v2865 = vrot.slane %v2833, 4
        %v2866 = vrot.slane %v2834, 4
        %v2867 = vrot.slane %v2835, 4
        %v2868 = vrot.slane %v2836, 4
        %v2869 = vrot.slane %v2837, 4
        %v2870 = vrot.slane %v2838, 4
        %v2871 = vrot.slane %v2839, 4
        %v2872 = vrot.slane %v2840, 4
        %v2873 = vrot.slane %v2841, 4
        %v2874 = vrot.slane %v2842, 4
        %v2875 = vrot.slane %v2843, 4
        %v2876 = vrot.slane %v2844, 4
        %v2877 = vrot.slane %v2845, 4
        %v2878 = vrot.slane %v2846, 4
        %v2879 = vrot.slane %v2847, 4
        %v2880 = vrot.slane %v2848, 4
        %v2881 = vrot.slane %v2849, 4
        %v2882 = vrot.slane %v2850, 4
        %v2883 = vrot.slane %v2851, 4
        %v2884 = vrot.slane %v2852, 4
        %vm2885 = vcmp.lt.s32.totalorder %v915, 4
        %v2886 = vsel %vm2885, %v2883, %v2884
        %v2887 = vsel %vm2885, %v2882, %v2883
        %v2888 = vsel %vm2885, %v2881, %v2882
        %v2889 = vsel %vm2885, %v2880, %v2881
        %v2890 = vsel %vm2885, %v2879, %v2880
        %v2891 = vsel %vm2885, %v2878, %v2879
        %v2892 = vsel %vm2885, %v2877, %v2878
        %v2893 = vsel %vm2885, %v2876, %v2877
        %v2894 = vsel %vm2885, %v2875, %v2876
        %v2895 = vsel %vm2885, %v2874, %v2875
        %v2896 = vsel %vm2885, %v2873, %v2874
        %v2897 = vsel %vm2885, %v2872, %v2873
        %v2898 = vsel %vm2885, %v2871, %v2872
        %v2899 = vsel %vm2885, %v2870, %v2871
        %v2900 = vsel %vm2885, %v2869, %v2870
        %v2901 = vsel %vm2885, %v2868, %v2869
        %v2902 = vsel %vm2885, %v2867, %v2868
        %v2903 = vsel %vm2885, %v2866, %v2867
        %v2904 = vsel %vm2885, %v2865, %v2866
        %v2905 = vsel %vm2885, %v2864, %v2865
        %v2906 = vsel %vm2885, %v2863, %v2864
        %v2907 = vsel %vm2885, %v2862, %v2863
        %v2908 = vsel %vm2885, %v2861, %v2862
        %v2909 = vsel %vm2885, %v2860, %v2861
        %v2910 = vsel %vm2885, %v2859, %v2860
        %v2911 = vsel %vm2885, %v2858, %v2859
        %v2912 = vsel %vm2885, %v2857, %v2858
        %v2913 = vsel %vm2885, %v2856, %v2857
        %v2914 = vsel %vm2885, %v2855, %v2856
        %v2915 = vsel %vm2885, %v2854, %v2855
        %v2916 = vsel %vm2885, %v2853, %v2854
        %v2917 = vsel %vm2885, %v2884, %v2853
        %vm2918 = vcmp.ge.s32.totalorder %v915, 4
        %vm2919 = vcmp.ge.s32.totalorder %v916, 4
        %v2920 = vsel %vm2918, 1, 0
        %v2921 = vsel %vm2919, 1, 0
        %vm2922 = vcmp.eq.s32.totalorder %v2920, 1
        %vm2923 = vcmp.eq.s32.totalorder %v2921, 1
        %v2924 = vsel %vm2922, %v2917, 0.0
        %v2925 = vsel %vm2923, %v2916, 0.0
        %v2926 = vsel %vm2922, %v2915, 0.0
        %v2927 = vsel %vm2923, %v2914, 0.0
        %v2928 = vsel %vm2922, %v2913, 0.0
        %v2929 = vsel %vm2923, %v2912, 0.0
        %v2930 = vsel %vm2922, %v2911, 0.0
        %v2931 = vsel %vm2923, %v2910, 0.0
        %v2932 = vsel %vm2922, %v2909, 0.0
        %v2933 = vsel %vm2923, %v2908, 0.0
        %v2934 = vsel %vm2922, %v2907, 0.0
        %v2935 = vsel %vm2923, %v2906, 0.0
        %v2936 = vsel %vm2922, %v2905, 0.0
        %v2937 = vsel %vm2923, %v2904, 0.0
        %v2938 = vsel %vm2922, %v2903, 0.0
        %v2939 = vsel %vm2923, %v2902, 0.0
        %v2940 = vsel %vm2922, %v2901, 0.0
        %v2941 = vsel %vm2923, %v2900, 0.0
        %v2942 = vsel %vm2922, %v2899, 0.0
        %v2943 = vsel %vm2923, %v2898, 0.0
        %v2944 = vsel %vm2922, %v2897, 0.0
        %v2945 = vsel %vm2923, %v2896, 0.0
        %v2946 = vsel %vm2922, %v2895, 0.0
        %v2947 = vsel %vm2923, %v2894, 0.0
        %v2948 = vsel %vm2922, %v2893, 0.0
        %v2949 = vsel %vm2923, %v2892, 0.0
        %v2950 = vsel %vm2922, %v2891, 0.0
        %v2951 = vsel %vm2923, %v2890, 0.0
        %v2952 = vsel %vm2922, %v2889, 0.0
        %v2953 = vsel %vm2923, %v2888, 0.0
        %v2954 = vsel %vm2922, %v2887, 0.0
        %v2955 = vsel %vm2923, %v2886, 0.0
        %v2956 = vrot.slane %v2821, 6
        %v2957 = vrot.slane %v2822, 6
        %v2958 = vrot.slane %v2823, 6
        %v2959 = vrot.slane %v2824, 6
        %v2960 = vrot.slane %v2825, 6
        %v2961 = vrot.slane %v2826, 6
        %v2962 = vrot.slane %v2827, 6
        %v2963 = vrot.slane %v2828, 6
        %v2964 = vrot.slane %v2829, 6
        %v2965 = vrot.slane %v2830, 6
        %v2966 = vrot.slane %v2831, 6
        %v2967 = vrot.slane %v2832, 6
        %v2968 = vrot.slane %v2833, 6
        %v2969 = vrot.slane %v2834, 6
        %v2970 = vrot.slane %v2835, 6
        %v2971 = vrot.slane %v2836, 6
        %v2972 = vrot.slane %v2837, 6
        %v2973 = vrot.slane %v2838, 6
        %v2974 = vrot.slane %v2839, 6
        %v2975 = vrot.slane %v2840, 6
        %v2976 = vrot.slane %v2841, 6
        %v2977 = vrot.slane %v2842, 6
        %v2978 = vrot.slane %v2843, 6
        %v2979 = vrot.slane %v2844, 6
        %v2980 = vrot.slane %v2845, 6
        %v2981 = vrot.slane %v2846, 6
        %v2982 = vrot.slane %v2847, 6
        %v2983 = vrot.slane %v2848, 6
        %v2984 = vrot.slane %v2849, 6
        %v2985 = vrot.slane %v2850, 6
        %v2986 = vrot.slane %v2851, 6
        %v2987 = vrot.slane %v2852, 6
        %v2988 = vsel %vm949, %v2986, %v2987
        %v2989 = vsel %vm949, %v2985, %v2986
        %v2990 = vsel %vm949, %v2984, %v2985
        %v2991 = vsel %vm949, %v2983, %v2984
        %v2992 = vsel %vm949, %v2982, %v2983
        %v2993 = vsel %vm949, %v2981, %v2982
        %v2994 = vsel %vm949, %v2980, %v2981
        %v2995 = vsel %vm949, %v2979, %v2980
        %v2996 = vsel %vm949, %v2978, %v2979
        %v2997 = vsel %vm949, %v2977, %v2978
        %v2998 = vsel %vm949, %v2976, %v2977
        %v2999 = vsel %vm949, %v2975, %v2976
        %v3000 = vsel %vm949, %v2974, %v2975
        %v3001 = vsel %vm949, %v2973, %v2974
        %v3002 = vsel %vm949, %v2972, %v2973
        %v3003 = vsel %vm949, %v2971, %v2972
        %v3004 = vsel %vm949, %v2970, %v2971
        %v3005 = vsel %vm949, %v2969, %v2970
        %v3006 = vsel %vm949, %v2968, %v2969
        %v3007 = vsel %vm949, %v2967, %v2968
        %v3008 = vsel %vm949, %v2966, %v2967
        %v3009 = vsel %vm949, %v2965, %v2966
        %v3010 = vsel %vm949, %v2964, %v2965
        %v3011 = vsel %vm949, %v2963, %v2964
        %v3012 = vsel %vm949, %v2962, %v2963
        %v3013 = vsel %vm949, %v2961, %v2962
        %v3014 = vsel %vm949, %v2960, %v2961
        %v3015 = vsel %vm949, %v2959, %v2960
        %v3016 = vsel %vm949, %v2958, %v2959
        %v3017 = vsel %vm949, %v2957, %v2958
        %v3018 = vsel %vm949, %v2956, %v2957
        %v3019 = vsel %vm949, %v2987, %v2956
        %v3020 = vsel %vm986, %v3019, 0.0
        %v3021 = vsel %vm987, %v3018, 0.0
        %v3022 = vsel %vm986, %v3017, 0.0
        %v3023 = vsel %vm987, %v3016, 0.0
        %v3024 = vsel %vm986, %v3015, 0.0
        %v3025 = vsel %vm987, %v3014, 0.0
        %v3026 = vsel %vm986, %v3013, 0.0
        %v3027 = vsel %vm987, %v3012, 0.0
        %v3028 = vsel %vm986, %v3011, 0.0
        %v3029 = vsel %vm987, %v3010, 0.0
        %v3030 = vsel %vm986, %v3009, 0.0
        %v3031 = vsel %vm987, %v3008, 0.0
        %v3032 = vsel %vm986, %v3007, 0.0
        %v3033 = vsel %vm987, %v3006, 0.0
        %v3034 = vsel %vm986, %v3005, 0.0
        %v3035 = vsel %vm987, %v3004, 0.0
        %v3036 = vsel %vm986, %v3003, 0.0
        %v3037 = vsel %vm987, %v3002, 0.0
        %v3038 = vsel %vm986, %v3001, 0.0
        %v3039 = vsel %vm987, %v3000, 0.0
        %v3040 = vsel %vm986, %v2999, 0.0
        %v3041 = vsel %vm987, %v2998, 0.0
        %v3042 = vsel %vm986, %v2997, 0.0
        %v3043 = vsel %vm987, %v2996, 0.0
        %v3044 = vsel %vm986, %v2995, 0.0
        %v3045 = vsel %vm987, %v2994, 0.0
        %v3046 = vsel %vm986, %v2993, 0.0
        %v3047 = vsel %vm987, %v2992, 0.0
        %v3048 = vsel %vm986, %v2991, 0.0
        %v3049 = vsel %vm987, %v2990, 0.0
        %v3050 = vsel %vm986, %v2989, 0.0
        %v3051 = vsel %vm987, %v2988, 0.0
        %3084 = vrot.lane.b32.xlu0 %v3020, 32
        %v3085 = vpop.permute.xlu0 %3084
        %3086 = vrot.lane.b32.xlu0 %v3021, 32
        %v3087 = vpop.permute.xlu0 %3086
        %3088 = vrot.lane.b32.xlu0 %v3022, 32
        %v3089 = vpop.permute.xlu0 %3088
        %3090 = vrot.lane.b32.xlu0 %v3023, 32
        %v3091 = vpop.permute.xlu0 %3090
        %3092 = vrot.lane.b32.xlu0 %v3024, 32
        %v3093 = vpop.permute.xlu0 %3092
        %3094 = vrot.lane.b32.xlu0 %v3025, 32
        %v3095 = vpop.permute.xlu0 %3094
        %3096 = vrot.lane.b32.xlu0 %v3026, 32
        %v3097 = vpop.permute.xlu0 %3096
        %3098 = vrot.lane.b32.xlu0 %v3027, 32
        %v3099 = vpop.permute.xlu0 %3098
        %3100 = vrot.lane.b32.xlu0 %v3028, 32
        %v3101 = vpop.permute.xlu0 %3100
        %3102 = vrot.lane.b32.xlu0 %v3029, 32
        %v3103 = vpop.permute.xlu0 %3102
        %3104 = vrot.lane.b32.xlu0 %v3030, 32
        %v3105 = vpop.permute.xlu0 %3104
        %3106 = vrot.lane.b32.xlu0 %v3031, 32
        %v3107 = vpop.permute.xlu0 %3106
        %3108 = vrot.lane.b32.xlu0 %v3032, 32
        %v3109 = vpop.permute.xlu0 %3108
        %3110 = vrot.lane.b32.xlu0 %v3033, 32
        %v3111 = vpop.permute.xlu0 %3110
        %3112 = vrot.lane.b32.xlu0 %v3034, 32
        %v3113 = vpop.permute.xlu0 %3112
        %3114 = vrot.lane.b32.xlu0 %v3035, 32
        %v3115 = vpop.permute.xlu0 %3114
        %3116 = vrot.lane.b32.xlu0 %v3036, 32
        %v3117 = vpop.permute.xlu0 %3116
        %3118 = vrot.lane.b32.xlu0 %v3037, 32
        %v3119 = vpop.permute.xlu0 %3118
        %3120 = vrot.lane.b32.xlu0 %v3038, 32
        %v3121 = vpop.permute.xlu0 %3120
        %3122 = vrot.lane.b32.xlu0 %v3039, 32
        %v3123 = vpop.permute.xlu0 %3122
        %3124 = vrot.lane.b32.xlu0 %v3040, 32
        %v3125 = vpop.permute.xlu0 %3124
        %3126 = vrot.lane.b32.xlu0 %v3041, 32
        %v3127 = vpop.permute.xlu0 %3126
        %3128 = vrot.lane.b32.xlu0 %v3042, 32
        %v3129 = vpop.permute.xlu0 %3128
        %3130 = vrot.lane.b32.xlu0 %v3043, 32
        %v3131 = vpop.permute.xlu0 %3130
        %3132 = vrot.lane.b32.xlu0 %v3044, 32
        %v3133 = vpop.permute.xlu0 %3132
        %3134 = vrot.lane.b32.xlu0 %v3045, 32
        %v3135 = vpop.permute.xlu0 %3134
        %3136 = vrot.lane.b32.xlu0 %v3046, 32
        %v3137 = vpop.permute.xlu0 %3136
        %3138 = vrot.lane.b32.xlu0 %v3047, 32
        %v3139 = vpop.permute.xlu0 %3138
        %3140 = vrot.lane.b32.xlu0 %v3048, 32
        %v3141 = vpop.permute.xlu0 %3140
        %3142 = vrot.lane.b32.xlu0 %v3049, 32
        %v3143 = vpop.permute.xlu0 %3142
        %3144 = vrot.lane.b32.xlu0 %v3050, 32
        %v3145 = vpop.permute.xlu0 %3144
        %3146 = vrot.lane.b32.xlu0 %v3051, 32
        %v3147 = vpop.permute.xlu0 %3146
        %3212 = vrot.lane.b32.xlu0 %v2821, 64
        %v3213 = vpop.permute.xlu0 %3212
        %3214 = vrot.lane.b32.xlu0 %v2822, 64
        %v3215 = vpop.permute.xlu0 %3214
        %3216 = vrot.lane.b32.xlu0 %v2823, 64
        %v3217 = vpop.permute.xlu0 %3216
        %3218 = vrot.lane.b32.xlu0 %v2824, 64
        %v3219 = vpop.permute.xlu0 %3218
        %3220 = vrot.lane.b32.xlu0 %v2825, 64
        %v3221 = vpop.permute.xlu0 %3220
        %3222 = vrot.lane.b32.xlu0 %v2826, 64
        %v3223 = vpop.permute.xlu0 %3222
        %3224 = vrot.lane.b32.xlu0 %v2827, 64
        %v3225 = vpop.permute.xlu0 %3224
        %3226 = vrot.lane.b32.xlu0 %v2828, 64
        %v3227 = vpop.permute.xlu0 %3226
        %3228 = vrot.lane.b32.xlu0 %v2829, 64
        %v3229 = vpop.permute.xlu0 %3228
        %3230 = vrot.lane.b32.xlu0 %v2830, 64
        %v3231 = vpop.permute.xlu0 %3230
        %3232 = vrot.lane.b32.xlu0 %v2831, 64
        %v3233 = vpop.permute.xlu0 %3232
        %3234 = vrot.lane.b32.xlu0 %v2832, 64
        %v3235 = vpop.permute.xlu0 %3234
        %3236 = vrot.lane.b32.xlu0 %v2833, 64
        %v3237 = vpop.permute.xlu0 %3236
        %3238 = vrot.lane.b32.xlu0 %v2834, 64
        %v3239 = vpop.permute.xlu0 %3238
        %3240 = vrot.lane.b32.xlu0 %v2835, 64
        %v3241 = vpop.permute.xlu0 %3240
        %3242 = vrot.lane.b32.xlu0 %v2836, 64
        %v3243 = vpop.permute.xlu0 %3242
        %3244 = vrot.lane.b32.xlu0 %v2837, 64
        %v3245 = vpop.permute.xlu0 %3244
        %3246 = vrot.lane.b32.xlu0 %v2838, 64
        %v3247 = vpop.permute.xlu0 %3246
        %3248 = vrot.lane.b32.xlu0 %v2839, 64
        %v3249 = vpop.permute.xlu0 %3248
        %3250 = vrot.lane.b32.xlu0 %v2840, 64
        %v3251 = vpop.permute.xlu0 %3250
        %3252 = vrot.lane.b32.xlu0 %v2841, 64
        %v3253 = vpop.permute.xlu0 %3252
        %3254 = vrot.lane.b32.xlu0 %v2842, 64
        %v3255 = vpop.permute.xlu0 %3254
        %3256 = vrot.lane.b32.xlu0 %v2843, 64
        %v3257 = vpop.permute.xlu0 %3256
        %3258 = vrot.lane.b32.xlu0 %v2844, 64
        %v3259 = vpop.permute.xlu0 %3258
        %3260 = vrot.lane.b32.xlu0 %v2845, 64
        %v3261 = vpop.permute.xlu0 %3260
        %3262 = vrot.lane.b32.xlu0 %v2846, 64
        %v3263 = vpop.permute.xlu0 %3262
        %3264 = vrot.lane.b32.xlu0 %v2847, 64
        %v3265 = vpop.permute.xlu0 %3264
        %3266 = vrot.lane.b32.xlu0 %v2848, 64
        %v3267 = vpop.permute.xlu0 %3266
        %3268 = vrot.lane.b32.xlu0 %v2849, 64
        %v3269 = vpop.permute.xlu0 %3268
        %3270 = vrot.lane.b32.xlu0 %v2850, 64
        %v3271 = vpop.permute.xlu0 %3270
        %3272 = vrot.lane.b32.xlu0 %v2851, 64
        %v3273 = vpop.permute.xlu0 %3272
        %3274 = vrot.lane.b32.xlu0 %v2852, 64
        %v3275 = vpop.permute.xlu0 %3274
        %v3308 = vsel %vm2174, %v2924, %v3085
        %v3309 = vsel %vm2174, %v2925, %v3087
        %v3310 = vsel %vm2174, %v2926, %v3089
        %v3311 = vsel %vm2174, %v2927, %v3091
        %v3312 = vsel %vm2174, %v2928, %v3093
        %v3313 = vsel %vm2174, %v2929, %v3095
        %v3314 = vsel %vm2174, %v2930, %v3097
        %v3315 = vsel %vm2174, %v2931, %v3099
        %v3316 = vsel %vm2174, %v2932, %v3101
        %v3317 = vsel %vm2174, %v2933, %v3103
        %v3318 = vsel %vm2174, %v2934, %v3105
        %v3319 = vsel %vm2174, %v2935, %v3107
        %v3320 = vsel %vm2174, %v2936, %v3109
        %v3321 = vsel %vm2174, %v2937, %v3111
        %v3322 = vsel %vm2174, %v2938, %v3113
        %v3323 = vsel %vm2174, %v2939, %v3115
        %v3324 = vsel %vm2174, %v2940, %v3117
        %v3325 = vsel %vm2174, %v2941, %v3119
        %v3326 = vsel %vm2174, %v2942, %v3121
        %v3327 = vsel %vm2174, %v2943, %v3123
        %v3328 = vsel %vm2174, %v2944, %v3125
        %v3329 = vsel %vm2174, %v2945, %v3127
        %v3330 = vsel %vm2174, %v2946, %v3129
        %v3331 = vsel %vm2174, %v2947, %v3131
        %v3332 = vsel %vm2174, %v2948, %v3133
        %v3333 = vsel %vm2174, %v2949, %v3135
        %v3334 = vsel %vm2174, %v2950, %v3137
        %v3335 = vsel %vm2174, %v2951, %v3139
        %v3336 = vsel %vm2174, %v2952, %v3141
        %v3337 = vsel %vm2174, %v2953, %v3143
        %v3338 = vsel %vm2174, %v2954, %v3145
        %v3339 = vsel %vm2174, %v2955, %v3147
        %v3340 = vsel %vm2207, %v3308, %v3213
        %v3341 = vsel %vm2207, %v3309, %v3215
        %v3342 = vsel %vm2207, %v3310, %v3217
        %v3343 = vsel %vm2207, %v3311, %v3219
        %v3344 = vsel %vm2207, %v3312, %v3221
        %v3345 = vsel %vm2207, %v3313, %v3223
        %v3346 = vsel %vm2207, %v3314, %v3225
        %v3347 = vsel %vm2207, %v3315, %v3227
        %v3348 = vsel %vm2207, %v3316, %v3229
        %v3349 = vsel %vm2207, %v3317, %v3231
        %v3350 = vsel %vm2207, %v3318, %v3233
        %v3351 = vsel %vm2207, %v3319, %v3235
        %v3352 = vsel %vm2207, %v3320, %v3237
        %v3353 = vsel %vm2207, %v3321, %v3239
        %v3354 = vsel %vm2207, %v3322, %v3241
        %v3355 = vsel %vm2207, %v3323, %v3243
        %v3356 = vsel %vm2207, %v3324, %v3245
        %v3357 = vsel %vm2207, %v3325, %v3247
        %v3358 = vsel %vm2207, %v3326, %v3249
        %v3359 = vsel %vm2207, %v3327, %v3251
        %v3360 = vsel %vm2207, %v3328, %v3253
        %v3361 = vsel %vm2207, %v3329, %v3255
        %v3362 = vsel %vm2207, %v3330, %v3257
        %v3363 = vsel %vm2207, %v3331, %v3259
        %v3364 = vsel %vm2207, %v3332, %v3261
        %v3365 = vsel %vm2207, %v3333, %v3263
        %v3366 = vsel %vm2207, %v3334, %v3265
        %v3367 = vsel %vm2207, %v3335, %v3267
        %v3368 = vsel %vm2207, %v3336, %v3269
        %v3369 = vsel %vm2207, %v3337, %v3271
        %v3370 = vsel %vm2207, %v3338, %v3273
        %v3371 = vsel %vm2207, %v3339, %v3275
        %v3372 = vpack.c.bf16 %v3341, %v3340
        %v3373 = vpack.c.bf16 %v3343, %v3342
        %v3374 = vpack.c.bf16 %v3345, %v3344
        %v3375 = vpack.c.bf16 %v3347, %v3346
        %v3376 = vpack.c.bf16 %v3349, %v3348
        %v3377 = vpack.c.bf16 %v3351, %v3350
        %v3378 = vpack.c.bf16 %v3353, %v3352
        %v3379 = vpack.c.bf16 %v3355, %v3354
        %v3380 = vpack.c.bf16 %v3357, %v3356
        %v3381 = vpack.c.bf16 %v3359, %v3358
        %v3382 = vpack.c.bf16 %v3361, %v3360
        %v3383 = vpack.c.bf16 %v3363, %v3362
        %v3384 = vpack.c.bf16 %v3365, %v3364
        %v3385 = vpack.c.bf16 %v3367, %v3366
        %v3386 = vpack.c.bf16 %v3369, %v3368
        %v3387 = vpack.c.bf16 %v3371, %v3370
        %v3388 = vld [vmem:[%s9] sm:$0xf]
        %v3389 = vld [vmem:[%s9 + $0x4] sm:$0xf]
        %v3390 = vld [vmem:[%s9 + $0x8] sm:$0xf]
        %v3391 = vld [vmem:[%s9 + $0xc] sm:$0xf]
        %v3392 = vld [vmem:[%s9 + $0x10] sm:$0xf]
        %v3393 = vld [vmem:[%s9 + $0x14] sm:$0xf]
        %v3394 = vld [vmem:[%s9 + $0x18] sm:$0xf]
        %v3395 = vld [vmem:[%s9 + $0x1c] sm:$0xf]
        %v3396 = vld [vmem:[%s9 + $0x20] sm:$0xf]
        %v3397 = vld [vmem:[%s9 + $0x24] sm:$0xf]
        %v3398 = vld [vmem:[%s9 + $0x28] sm:$0xf]
        %v3399 = vld [vmem:[%s9 + $0x2c] sm:$0xf]
        %v3400 = vld [vmem:[#allocation16] sm:$0x1]
        %v3402 = vlaneseq
        %v3403 = vshrl.u32 %v3402, 7
        %v3404 = vsub.s32 0, %v3403
        %v3405 = vrot.slane %v3400, %v3404
        %v3419 = vunpack.c.l.b16 %v3388
        %v3420 = vunpack.c.l.b16 %v3389
        %v3421 = vunpack.c.l.b16 %v3390
        %v3422 = vunpack.c.l.b16 %v3391
        %v3423 = vunpack.c.l.b16 %v3392
        %v3424 = vunpack.c.l.b16 %v3393
        %v3425 = vunpack.c.l.b16 %v3394
        %v3426 = vunpack.c.l.b16 %v3395
        %v3427 = vunpack.c.l.b16 %v3396
        %v3428 = vunpack.c.l.b16 %v3397
        %v3429 = vunpack.c.l.b16 %v3398
        %v3430 = vunpack.c.l.b16 %v3399
        %v3431 = vpack.c.b16 %v3420, %v3419
        %v3432 = vpack.c.b16 %v3422, %v3421
        %v3433 = vpack.c.b16 %v3424, %v3423
        %v3434 = vpack.c.b16 %v3426, %v3425
        %v3435 = vpack.c.b16 %v3428, %v3427
        %v3436 = vpack.c.b16 %v3430, %v3429
        %v3444 = vsel %vm2311, %v3372, 0
        %v3447 = vsel %vm2311, %v3373, 0
        %v3450 = vsel %vm2311, %v3374, 0
        %v3453 = vsel %vm2311, %v3375, 0
        %v3456 = vsel %vm2311, %v3376, 0
        %v3459 = vsel %vm2311, %v3377, 0
        %v3462 = vsel %vm2311, %v3378, 0
        %v3465 = vsel %vm2311, %v3379, 0
        %v3468 = vsel %vm2311, %v3380, 0
        %v3471 = vsel %vm2311, %v3381, 0
        %v3474 = vsel %vm2311, %v3382, 0
        %v3477 = vsel %vm2311, %v3383, 0
        %v3480 = vsel %vm2311, %v3384, 0
        %v3483 = vsel %vm2311, %v3385, 0
        %v3486 = vsel %vm2311, %v3386, 0
        %v3489 = vsel %vm2311, %v3387, 0
        %3491 = vmatprep.subr.bf16.mxu0 0
        %3492 = vmatpush1.bf16.msra.mxu0 %v3431
        %3493 = vmatprep.subr.bf16.mxu0 0
        %3494 = vmatpush1.bf16.msra.mxu0 %v3432
        %3495 = vmatprep.subr.bf16.mxu0 0
        %3496 = vmatpush1.bf16.msra.mxu0 %v3433
        %3497 = vmatprep.subr.bf16.mxu0 0
        %3498 = vmatpush1.bf16.msra.mxu0 %v3434
        %3499 = vmatprep.subr.bf16.mxu0 0
        %3500 = vmatpush1.bf16.msra.mxu0 %v3435
        %3501 = vmatprep.subr.bf16.mxu0 0
        %3502 = vmatpush1.bf16.msra.mxu0 %v3436
        %3503 = vmatprep.subr.bf16.mxu0 0
        %3504 = vmatpush1.bf16.msra.mxu0 0
        %3505 = vmatprep.subr.bf16.mxu0 0
        %3506 = vmatpush1.bf16.msra.mxu0 0
        %3507 = vmatprep.subr.bf16.mxu0 0
        %3508 = vmatpush1.bf16.msra.mxu0 0
        %3509 = vmatprep.subr.bf16.mxu0 0
        %3510 = vmatpush1.bf16.msra.mxu0 0
        %3511 = vmatprep.subr.bf16.mxu0 0
        %3512 = vmatpush1.bf16.msra.mxu0 0
        %3513 = vmatprep.subr.bf16.mxu0 0
        %3514 = vmatpush1.bf16.msra.mxu0 0
        %3515 = vmatprep.subr.bf16.mxu0 0
        %3516 = vmatpush1.bf16.msra.mxu0 0
        %3517 = vmatprep.subr.bf16.mxu0 0
        %3518 = vmatpush1.bf16.msra.mxu0 0
        %3519 = vmatprep.subr.bf16.mxu0 0
        %3520 = vmatpush1.bf16.msra.mxu0 0
        %3521 = vmatprep.subr.bf16.mxu0 0
        %3522 = vmatpush1.bf16.msra.mxu0 0
        %3523 = vmatprep.mubr.bf16.mxu0 0
        %3524 = vmatmul.mubr.bf16.gmra.mrb[0].mxu0 %v3444
        %v3525 = vpop.f32.mrb[0].mxu0
        %v3526 = vadd.f32 %v3405, %v3525
        %v3527 = vpop.f32.mrb[0].mxu0
        %v3528 = vpop.f32.mrb[0].mxu0
        %v3529 = vadd.f32 %v3405, %v3528
        %v3530 = vpop.f32.mrb[0].mxu0
        %3531 = vmatprep.mubr.bf16.mxu0 0
        %3532 = vmatmul.mubr.bf16.gmra.mrb[0].mxu0 %v3447
        %v3533 = vpop.f32.mrb[0].mxu0
        %v3534 = vadd.f32 %v3405, %v3533
        %v3535 = vpop.f32.mrb[0].mxu0
        %v3536 = vpop.f32.mrb[0].mxu0
        %v3537 = vadd.f32 %v3405, %v3536
        %v3538 = vpop.f32.mrb[0].mxu0
        %3539 = vmatprep.mubr.bf16.mxu0 0
        %3540 = vmatmul.mubr.bf16.gmra.mrb[0].mxu0 %v3450
        %v3541 = vpop.f32.mrb[0].mxu0
        %v3542 = vadd.f32 %v3405, %v3541
        %v3543 = vpop.f32.mrb[0].mxu0
        %v3544 = vpop.f32.mrb[0].mxu0
        %v3545 = vadd.f32 %v3405, %v3544
        %v3546 = vpop.f32.mrb[0].mxu0
        %3547 = vmatprep.mubr.bf16.mxu0 0
        %3548 = vmatmul.mubr.bf16.gmra.mrb[0].mxu0 %v3453
        %v3549 = vpop.f32.mrb[0].mxu0
        %v3550 = vadd.f32 %v3405, %v3549
        %v3551 = vpop.f32.mrb[0].mxu0
        %v3552 = vpop.f32.mrb[0].mxu0
        %v3553 = vadd.f32 %v3405, %v3552
        %v3554 = vpop.f32.mrb[0].mxu0
        %3555 = vmatprep.mubr.bf16.mxu0 0
        %3556 = vmatmul.mubr.bf16.gmra.mrb[0].mxu0 %v3456
        %v3557 = vpop.f32.mrb[0].mxu0
        %v3558 = vadd.f32 %v3405, %v3557
        %v3559 = vpop.f32.mrb[0].mxu0
        %v3560 = vpop.f32.mrb[0].mxu0
        %v3561 = vadd.f32 %v3405, %v3560
        %v3562 = vpop.f32.mrb[0].mxu0
        %3563 = vmatprep.mubr.bf16.mxu0 0
        %3564 = vmatmul.mubr.bf16.gmra.mrb[0].mxu0 %v3459
        %v3565 = vpop.f32.mrb[0].mxu0
        %v3566 = vadd.f32 %v3405, %v3565
        %v3567 = vpop.f32.mrb[0].mxu0
        %v3568 = vpop.f32.mrb[0].mxu0
        %v3569 = vadd.f32 %v3405, %v3568
        %v3570 = vpop.f32.mrb[0].mxu0
        %3571 = vmatprep.mubr.bf16.mxu0 0
        %3572 = vmatmul.mubr.bf16.gmra.mrb[0].mxu0 %v3462
        %v3573 = vpop.f32.mrb[0].mxu0
        %v3574 = vadd.f32 %v3405, %v3573
        %v3575 = vpop.f32.mrb[0].mxu0
        %v3576 = vpop.f32.mrb[0].mxu0
        %v3577 = vadd.f32 %v3405, %v3576
        %v3578 = vpop.f32.mrb[0].mxu0
        %3579 = vmatprep.mubr.bf16.mxu0 0
        %3580 = vmatmul.mubr.bf16.gmra.mrb[0].mxu0 %v3465
        %v3581 = vpop.f32.mrb[0].mxu0
        %v3582 = vadd.f32 %v3405, %v3581
        %v3583 = vpop.f32.mrb[0].mxu0
        %v3584 = vpop.f32.mrb[0].mxu0
        %v3585 = vadd.f32 %v3405, %v3584
        %v3586 = vpop.f32.mrb[0].mxu0
        %3587 = vmatprep.mubr.bf16.mxu0 0
        %3588 = vmatmul.mubr.bf16.gmra.mrb[0].mxu0 %v3468
        %v3589 = vpop.f32.mrb[0].mxu0
        %v3590 = vadd.f32 %v3405, %v3589
        %v3591 = vpop.f32.mrb[0].mxu0
        %v3592 = vpop.f32.mrb[0].mxu0
        %v3593 = vadd.f32 %v3405, %v3592
        %v3594 = vpop.f32.mrb[0].mxu0
        %3595 = vmatprep.mubr.bf16.mxu0 0
        %3596 = vmatmul.mubr.bf16.gmra.mrb[0].mxu0 %v3471
        %v3597 = vpop.f32.mrb[0].mxu0
        %v3598 = vadd.f32 %v3405, %v3597
        %v3599 = vpop.f32.mrb[0].mxu0
        %v3600 = vpop.f32.mrb[0].mxu0
        %v3601 = vadd.f32 %v3405, %v3600
        %v3602 = vpop.f32.mrb[0].mxu0
        %3603 = vmatprep.mubr.bf16.mxu0 0
        %3604 = vmatmul.mubr.bf16.gmra.mrb[0].mxu0 %v3474
        %v3605 = vpop.f32.mrb[0].mxu0
        %v3606 = vadd.f32 %v3405, %v3605
        %v3607 = vpop.f32.mrb[0].mxu0
        %v3608 = vpop.f32.mrb[0].mxu0
        %v3609 = vadd.f32 %v3405, %v3608
        %v3610 = vpop.f32.mrb[0].mxu0
        %3611 = vmatprep.mubr.bf16.mxu0 0
        %3612 = vmatmul.mubr.bf16.gmra.mrb[0].mxu0 %v3477
        %v3613 = vpop.f32.mrb[0].mxu0
        %v3614 = vadd.f32 %v3405, %v3613
        %v3615 = vpop.f32.mrb[0].mxu0
        %v3616 = vpop.f32.mrb[0].mxu0
        %v3617 = vadd.f32 %v3405, %v3616
        %v3618 = vpop.f32.mrb[0].mxu0
        %3619 = vmatprep.mubr.bf16.mxu0 0
        %3620 = vmatmul.mubr.bf16.gmra.mrb[0].mxu0 %v3480
        %v3621 = vpop.f32.mrb[0].mxu0
        %v3622 = vadd.f32 %v3405, %v3621
        %v3623 = vpop.f32.mrb[0].mxu0
        %v3624 = vpop.f32.mrb[0].mxu0
        %v3625 = vadd.f32 %v3405, %v3624
        %v3626 = vpop.f32.mrb[0].mxu0
        %3627 = vmatprep.mubr.bf16.mxu0 0
        %3628 = vmatmul.mubr.bf16.gmra.mrb[0].mxu0 %v3483
        %v3629 = vpop.f32.mrb[0].mxu0
        %v3630 = vadd.f32 %v3405, %v3629
        %v3631 = vpop.f32.mrb[0].mxu0
        %v3632 = vpop.f32.mrb[0].mxu0
        %v3633 = vadd.f32 %v3405, %v3632
        %v3634 = vpop.f32.mrb[0].mxu0
        %3635 = vmatprep.mubr.bf16.mxu0 0
        %3636 = vmatmul.mubr.bf16.gmra.mrb[0].mxu0 %v3486
        %v3637 = vpop.f32.mrb[0].mxu0
        %v3638 = vadd.f32 %v3405, %v3637
        %v3639 = vpop.f32.mrb[0].mxu0
        %v3640 = vpop.f32.mrb[0].mxu0
        %v3641 = vadd.f32 %v3405, %v3640
        %v3642 = vpop.f32.mrb[0].mxu0
        %3643 = vmatprep.mubr.bf16.mxu0 0
        %3644 = vmatmul.mubr.bf16.gmra.mrb[0].mxu0 %v3489
        %v3645 = vpop.f32.mrb[0].mxu0
        %v3646 = vadd.f32 %v3405, %v3645
        %v3647 = vpop.f32.mrb[0].mxu0
        %v3648 = vpop.f32.mrb[0].mxu0
        %v3649 = vadd.f32 %v3405, %v3648
        %v3650 = vpop.f32.mrb[0].mxu0
        %3651 = vdwg.mxu0
        %v3652 = vmax.f32 %v3526, 0.0
        %v3653 = vmax.f32 %v3529, 0.0
        %v3654 = vmax.f32 %v3534, 0.0
        %v3655 = vmax.f32 %v3537, 0.0
        %v3656 = vmax.f32 %v3542, 0.0
        %v3657 = vmax.f32 %v3545, 0.0
        %v3658 = vmax.f32 %v3550, 0.0
        %v3659 = vmax.f32 %v3553, 0.0
        %v3660 = vmax.f32 %v3558, 0.0
        %v3661 = vmax.f32 %v3561, 0.0
        %v3662 = vmax.f32 %v3566, 0.0
        %v3663 = vmax.f32 %v3569, 0.0
        %v3664 = vmax.f32 %v3574, 0.0
        %v3665 = vmax.f32 %v3577, 0.0
        %v3666 = vmax.f32 %v3582, 0.0
        %v3667 = vmax.f32 %v3585, 0.0
        %v3668 = vmax.f32 %v3590, 0.0
        %v3669 = vmax.f32 %v3593, 0.0
        %v3670 = vmax.f32 %v3598, 0.0
        %v3671 = vmax.f32 %v3601, 0.0
        %v3672 = vmax.f32 %v3606, 0.0
        %v3673 = vmax.f32 %v3609, 0.0
        %v3674 = vmax.f32 %v3614, 0.0
        %v3675 = vmax.f32 %v3617, 0.0
        %v3676 = vmax.f32 %v3622, 0.0
        %v3677 = vmax.f32 %v3625, 0.0
        %v3678 = vmax.f32 %v3630, 0.0
        %v3679 = vmax.f32 %v3633, 0.0
        %v3680 = vmax.f32 %v3638, 0.0
        %v3681 = vmax.f32 %v3641, 0.0
        %v3682 = vmax.f32 %v3646, 0.0
        %v3683 = vmax.f32 %v3649, 0.0
        %v3684 = vrot.slane %v3652, 4
        %v3685 = vrot.slane %v3653, 4
        %v3686 = vrot.slane %v3654, 4
        %v3687 = vrot.slane %v3655, 4
        %v3688 = vrot.slane %v3656, 4
        %v3689 = vrot.slane %v3657, 4
        %v3690 = vrot.slane %v3658, 4
        %v3691 = vrot.slane %v3659, 4
        %v3692 = vrot.slane %v3660, 4
        %v3693 = vrot.slane %v3661, 4
        %v3694 = vrot.slane %v3662, 4
        %v3695 = vrot.slane %v3663, 4
        %v3696 = vrot.slane %v3664, 4
        %v3697 = vrot.slane %v3665, 4
        %v3698 = vrot.slane %v3666, 4
        %v3699 = vrot.slane %v3667, 4
        %v3700 = vrot.slane %v3668, 4
        %v3701 = vrot.slane %v3669, 4
        %v3702 = vrot.slane %v3670, 4
        %v3703 = vrot.slane %v3671, 4
        %v3704 = vrot.slane %v3672, 4
        %v3705 = vrot.slane %v3673, 4
        %v3706 = vrot.slane %v3674, 4
        %v3707 = vrot.slane %v3675, 4
        %v3708 = vrot.slane %v3676, 4
        %v3709 = vrot.slane %v3677, 4
        %v3710 = vrot.slane %v3678, 4
        %v3711 = vrot.slane %v3679, 4
        %v3712 = vrot.slane %v3680, 4
        %v3713 = vrot.slane %v3681, 4
        %v3714 = vrot.slane %v3682, 4
        %v3715 = vrot.slane %v3683, 4
        %v3716 = vsel %vm2885, %v3714, %v3715
        %v3717 = vsel %vm2885, %v3713, %v3714
        %v3718 = vsel %vm2885, %v3712, %v3713
        %v3719 = vsel %vm2885, %v3711, %v3712
        %v3720 = vsel %vm2885, %v3710, %v3711
        %v3721 = vsel %vm2885, %v3709, %v3710
        %v3722 = vsel %vm2885, %v3708, %v3709
        %v3723 = vsel %vm2885, %v3707, %v3708
        %v3724 = vsel %vm2885, %v3706, %v3707
        %v3725 = vsel %vm2885, %v3705, %v3706
        %v3726 = vsel %vm2885, %v3704, %v3705
        %v3727 = vsel %vm2885, %v3703, %v3704
        %v3728 = vsel %vm2885, %v3702, %v3703
        %v3729 = vsel %vm2885, %v3701, %v3702
        %v3730 = vsel %vm2885, %v3700, %v3701
        %v3731 = vsel %vm2885, %v3699, %v3700
        %v3732 = vsel %vm2885, %v3698, %v3699
        %v3733 = vsel %vm2885, %v3697, %v3698
        %v3734 = vsel %vm2885, %v3696, %v3697
        %v3735 = vsel %vm2885, %v3695, %v3696
        %v3736 = vsel %vm2885, %v3694, %v3695
        %v3737 = vsel %vm2885, %v3693, %v3694
        %v3738 = vsel %vm2885, %v3692, %v3693
        %v3739 = vsel %vm2885, %v3691, %v3692
        %v3740 = vsel %vm2885, %v3690, %v3691
        %v3741 = vsel %vm2885, %v3689, %v3690
        %v3742 = vsel %vm2885, %v3688, %v3689
        %v3743 = vsel %vm2885, %v3687, %v3688
        %v3744 = vsel %vm2885, %v3686, %v3687
        %v3745 = vsel %vm2885, %v3685, %v3686
        %v3746 = vsel %vm2885, %v3684, %v3685
        %v3747 = vsel %vm2885, %v3715, %v3684
        %v3748 = vsel %vm2922, %v3747, 0.0
        %v3749 = vsel %vm2923, %v3746, 0.0
        %v3750 = vsel %vm2922, %v3745, 0.0
        %v3751 = vsel %vm2923, %v3744, 0.0
        %v3752 = vsel %vm2922, %v3743, 0.0
        %v3753 = vsel %vm2923, %v3742, 0.0
        %v3754 = vsel %vm2922, %v3741, 0.0
        %v3755 = vsel %vm2923, %v3740, 0.0
        %v3756 = vsel %vm2922, %v3739, 0.0
        %v3757 = vsel %vm2923, %v3738, 0.0
        %v3758 = vsel %vm2922, %v3737, 0.0
        %v3759 = vsel %vm2923, %v3736, 0.0
        %v3760 = vsel %vm2922, %v3735, 0.0
        %v3761 = vsel %vm2923, %v3734, 0.0
        %v3762 = vsel %vm2922, %v3733, 0.0
        %v3763 = vsel %vm2923, %v3732, 0.0
        %v3764 = vsel %vm2922, %v3731, 0.0
        %v3765 = vsel %vm2923, %v3730, 0.0
        %v3766 = vsel %vm2922, %v3729, 0.0
        %v3767 = vsel %vm2923, %v3728, 0.0
        %v3768 = vsel %vm2922, %v3727, 0.0
        %v3769 = vsel %vm2923, %v3726, 0.0
        %v3770 = vsel %vm2922, %v3725, 0.0
        %v3771 = vsel %vm2923, %v3724, 0.0
        %v3772 = vsel %vm2922, %v3723, 0.0
        %v3773 = vsel %vm2923, %v3722, 0.0
        %v3774 = vsel %vm2922, %v3721, 0.0
        %v3775 = vsel %vm2923, %v3720, 0.0
        %v3776 = vsel %vm2922, %v3719, 0.0
        %v3777 = vsel %vm2923, %v3718, 0.0
        %v3778 = vsel %vm2922, %v3717, 0.0
        %v3779 = vsel %vm2923, %v3716, 0.0
        %v3780 = vrot.slane %v3652, 6
        %v3781 = vrot.slane %v3653, 6
        %v3782 = vrot.slane %v3654, 6
        %v3783 = vrot.slane %v3655, 6
        %v3784 = vrot.slane %v3656, 6
        %v3785 = vrot.slane %v3657, 6
        %v3786 = vrot.slane %v3658, 6
        %v3787 = vrot.slane %v3659, 6
        %v3788 = vrot.slane %v3660, 6
        %v3789 = vrot.slane %v3661, 6
        %v3790 = vrot.slane %v3662, 6
        %v3791 = vrot.slane %v3663, 6
        %v3792 = vrot.slane %v3664, 6
        %v3793 = vrot.slane %v3665, 6
        %v3794 = vrot.slane %v3666, 6
        %v3795 = vrot.slane %v3667, 6
        %v3796 = vrot.slane %v3668, 6
        %v3797 = vrot.slane %v3669, 6
        %v3798 = vrot.slane %v3670, 6
        %v3799 = vrot.slane %v3671, 6
        %v3800 = vrot.slane %v3672, 6
        %v3801 = vrot.slane %v3673, 6
        %v3802 = vrot.slane %v3674, 6
        %v3803 = vrot.slane %v3675, 6
        %v3804 = vrot.slane %v3676, 6
        %v3805 = vrot.slane %v3677, 6
        %v3806 = vrot.slane %v3678, 6
        %v3807 = vrot.slane %v3679, 6
        %v3808 = vrot.slane %v3680, 6
        %v3809 = vrot.slane %v3681, 6
        %v3810 = vrot.slane %v3682, 6
        %v3811 = vrot.slane %v3683, 6
        %v3812 = vsel %vm949, %v3810, %v3811
        %v3813 = vsel %vm949, %v3809, %v3810
        %v3814 = vsel %vm949, %v3808, %v3809
        %v3815 = vsel %vm949, %v3807, %v3808
        %v3816 = vsel %vm949, %v3806, %v3807
        %v3817 = vsel %vm949, %v3805, %v3806
        %v3818 = vsel %vm949, %v3804, %v3805
        %v3819 = vsel %vm949, %v3803, %v3804
        %v3820 = vsel %vm949, %v3802, %v3803
        %v3821 = vsel %vm949, %v3801, %v3802
        %v3822 = vsel %vm949, %v3800, %v3801
        %v3823 = vsel %vm949, %v3799, %v3800
        %v3824 = vsel %vm949, %v3798, %v3799
        %v3825 = vsel %vm949, %v3797, %v3798
        %v3826 = vsel %vm949, %v3796, %v3797
        %v3827 = vsel %vm949, %v3795, %v3796
        %v3828 = vsel %vm949, %v3794, %v3795
        %v3829 = vsel %vm949, %v3793, %v3794
        %v3830 = vsel %vm949, %v3792, %v3793
        %v3831 = vsel %vm949, %v3791, %v3792
        %v3832 = vsel %vm949, %v3790, %v3791
        %v3833 = vsel %vm949, %v3789, %v3790
        %v3834 = vsel %vm949, %v3788, %v3789
        %v3835 = vsel %vm949, %v3787, %v3788
        %v3836 = vsel %vm949, %v3786, %v3787
        %v3837 = vsel %vm949, %v3785, %v3786
        %v3838 = vsel %vm949, %v3784, %v3785
        %v3839 = vsel %vm949, %v3783, %v3784
        %v3840 = vsel %vm949, %v3782, %v3783
        %v3841 = vsel %vm949, %v3781, %v3782
        %v3842 = vsel %vm949, %v3780, %v3781
        %v3843 = vsel %vm949, %v3811, %v3780
        %v3844 = vsel %vm986, %v3843, 0.0
        %v3845 = vsel %vm987, %v3842, 0.0
        %v3846 = vsel %vm986, %v3841, 0.0
        %v3847 = vsel %vm987, %v3840, 0.0
        %v3848 = vsel %vm986, %v3839, 0.0
        %v3849 = vsel %vm987, %v3838, 0.0
        %v3850 = vsel %vm986, %v3837, 0.0
        %v3851 = vsel %vm987, %v3836, 0.0
        %v3852 = vsel %vm986, %v3835, 0.0
        %v3853 = vsel %vm987, %v3834, 0.0
        %v3854 = vsel %vm986, %v3833, 0.0
        %v3855 = vsel %vm987, %v3832, 0.0
        %v3856 = vsel %vm986, %v3831, 0.0
        %v3857 = vsel %vm987, %v3830, 0.0
        %v3858 = vsel %vm986, %v3829, 0.0
        %v3859 = vsel %vm987, %v3828, 0.0
        %v3860 = vsel %vm986, %v3827, 0.0
        %v3861 = vsel %vm987, %v3826, 0.0
        %v3862 = vsel %vm986, %v3825, 0.0
        %v3863 = vsel %vm987, %v3824, 0.0
        %v3864 = vsel %vm986, %v3823, 0.0
        %v3865 = vsel %vm987, %v3822, 0.0
        %v3866 = vsel %vm986, %v3821, 0.0
        %v3867 = vsel %vm987, %v3820, 0.0
        %v3868 = vsel %vm986, %v3819, 0.0
        %v3869 = vsel %vm987, %v3818, 0.0
        %v3870 = vsel %vm986, %v3817, 0.0
        %v3871 = vsel %vm987, %v3816, 0.0
        %v3872 = vsel %vm986, %v3815, 0.0
        %v3873 = vsel %vm987, %v3814, 0.0
        %v3874 = vsel %vm986, %v3813, 0.0
        %v3875 = vsel %vm987, %v3812, 0.0
        %3908 = vrot.lane.b32.xlu0 %v3844, 32
        %v3909 = vpop.permute.xlu0 %3908
        %3910 = vrot.lane.b32.xlu0 %v3845, 32
        %v3911 = vpop.permute.xlu0 %3910
        %3912 = vrot.lane.b32.xlu0 %v3846, 32
        %v3913 = vpop.permute.xlu0 %3912
        %3914 = vrot.lane.b32.xlu0 %v3847, 32
        %v3915 = vpop.permute.xlu0 %3914
        %3916 = vrot.lane.b32.xlu0 %v3848, 32
        %v3917 = vpop.permute.xlu0 %3916
        %3918 = vrot.lane.b32.xlu0 %v3849, 32
        %v3919 = vpop.permute.xlu0 %3918
        %3920 = vrot.lane.b32.xlu0 %v3850, 32
        %v3921 = vpop.permute.xlu0 %3920
        %3922 = vrot.lane.b32.xlu0 %v3851, 32
        %v3923 = vpop.permute.xlu0 %3922
        %3924 = vrot.lane.b32.xlu0 %v3852, 32
        %v3925 = vpop.permute.xlu0 %3924
        %3926 = vrot.lane.b32.xlu0 %v3853, 32
        %v3927 = vpop.permute.xlu0 %3926
        %3928 = vrot.lane.b32.xlu0 %v3854, 32
        %v3929 = vpop.permute.xlu0 %3928
        %3930 = vrot.lane.b32.xlu0 %v3855, 32
        %v3931 = vpop.permute.xlu0 %3930
        %3932 = vrot.lane.b32.xlu0 %v3856, 32
        %v3933 = vpop.permute.xlu0 %3932
        %3934 = vrot.lane.b32.xlu0 %v3857, 32
        %v3935 = vpop.permute.xlu0 %3934
        %3936 = vrot.lane.b32.xlu0 %v3858, 32
        %v3937 = vpop.permute.xlu0 %3936
        %3938 = vrot.lane.b32.xlu0 %v3859, 32
        %v3939 = vpop.permute.xlu0 %3938
        %3940 = vrot.lane.b32.xlu0 %v3860, 32
        %v3941 = vpop.permute.xlu0 %3940
        %3942 = vrot.lane.b32.xlu0 %v3861, 32
        %v3943 = vpop.permute.xlu0 %3942
        %3944 = vrot.lane.b32.xlu0 %v3862, 32
        %v3945 = vpop.permute.xlu0 %3944
        %3946 = vrot.lane.b32.xlu0 %v3863, 32
        %v3947 = vpop.permute.xlu0 %3946
        %3948 = vrot.lane.b32.xlu0 %v3864, 32
        %v3949 = vpop.permute.xlu0 %3948
        %3950 = vrot.lane.b32.xlu0 %v3865, 32
        %v3951 = vpop.permute.xlu0 %3950
        %3952 = vrot.lane.b32.xlu0 %v3866, 32
        %v3953 = vpop.permute.xlu0 %3952
        %3954 = vrot.lane.b32.xlu0 %v3867, 32
        %v3955 = vpop.permute.xlu0 %3954
        %3956 = vrot.lane.b32.xlu0 %v3868, 32
        %v3957 = vpop.permute.xlu0 %3956
        %3958 = vrot.lane.b32.xlu0 %v3869, 32
        %v3959 = vpop.permute.xlu0 %3958
        %3960 = vrot.lane.b32.xlu0 %v3870, 32
        %v3961 = vpop.permute.xlu0 %3960
        %3962 = vrot.lane.b32.xlu0 %v3871, 32
        %v3963 = vpop.permute.xlu0 %3962
        %3964 = vrot.lane.b32.xlu0 %v3872, 32
        %v3965 = vpop.permute.xlu0 %3964
        %3966 = vrot.lane.b32.xlu0 %v3873, 32
        %v3967 = vpop.permute.xlu0 %3966
        %3968 = vrot.lane.b32.xlu0 %v3874, 32
        %v3969 = vpop.permute.xlu0 %3968
        %3970 = vrot.lane.b32.xlu0 %v3875, 32
        %v3971 = vpop.permute.xlu0 %3970
        %4036 = vrot.lane.b32.xlu0 %v3652, 64
        %v4037 = vpop.permute.xlu0 %4036
        %4038 = vrot.lane.b32.xlu0 %v3653, 64
        %v4039 = vpop.permute.xlu0 %4038
        %4040 = vrot.lane.b32.xlu0 %v3654, 64
        %v4041 = vpop.permute.xlu0 %4040
        %4042 = vrot.lane.b32.xlu0 %v3655, 64
        %v4043 = vpop.permute.xlu0 %4042
        %4044 = vrot.lane.b32.xlu0 %v3656, 64
        %v4045 = vpop.permute.xlu0 %4044
        %4046 = vrot.lane.b32.xlu0 %v3657, 64
        %v4047 = vpop.permute.xlu0 %4046
        %4048 = vrot.lane.b32.xlu0 %v3658, 64
        %v4049 = vpop.permute.xlu0 %4048
        %4050 = vrot.lane.b32.xlu0 %v3659, 64
        %v4051 = vpop.permute.xlu0 %4050
        %4052 = vrot.lane.b32.xlu0 %v3660, 64
        %v4053 = vpop.permute.xlu0 %4052
        %4054 = vrot.lane.b32.xlu0 %v3661, 64
        %v4055 = vpop.permute.xlu0 %4054
        %4056 = vrot.lane.b32.xlu0 %v3662, 64
        %v4057 = vpop.permute.xlu0 %4056
        %4058 = vrot.lane.b32.xlu0 %v3663, 64
        %v4059 = vpop.permute.xlu0 %4058
        %4060 = vrot.lane.b32.xlu0 %v3664, 64
        %v4061 = vpop.permute.xlu0 %4060
        %4062 = vrot.lane.b32.xlu0 %v3665, 64
        %v4063 = vpop.permute.xlu0 %4062
        %4064 = vrot.lane.b32.xlu0 %v3666, 64
        %v4065 = vpop.permute.xlu0 %4064
        %4066 = vrot.lane.b32.xlu0 %v3667, 64
        %v4067 = vpop.permute.xlu0 %4066
        %4068 = vrot.lane.b32.xlu0 %v3668, 64
        %v4069 = vpop.permute.xlu0 %4068
        %4070 = vrot.lane.b32.xlu0 %v3669, 64
        %v4071 = vpop.permute.xlu0 %4070
        %4072 = vrot.lane.b32.xlu0 %v3670, 64
        %v4073 = vpop.permute.xlu0 %4072
        %4074 = vrot.lane.b32.xlu0 %v3671, 64
        %v4075 = vpop.permute.xlu0 %4074
        %4076 = vrot.lane.b32.xlu0 %v3672, 64
        %v4077 = vpop.permute.xlu0 %4076
        %4078 = vrot.lane.b32.xlu0 %v3673, 64
        %v4079 = vpop.permute.xlu0 %4078
        %4080 = vrot.lane.b32.xlu0 %v3674, 64
        %v4081 = vpop.permute.xlu0 %4080
        %4082 = vrot.lane.b32.xlu0 %v3675, 64
        %v4083 = vpop.permute.xlu0 %4082
        %4084 = vrot.lane.b32.xlu0 %v3676, 64
        %v4085 = vpop.permute.xlu0 %4084
        %4086 = vrot.lane.b32.xlu0 %v3677, 64
        %v4087 = vpop.permute.xlu0 %4086
        %4088 = vrot.lane.b32.xlu0 %v3678, 64
        %v4089 = vpop.permute.xlu0 %4088
        %4090 = vrot.lane.b32.xlu0 %v3679, 64
        %v4091 = vpop.permute.xlu0 %4090
        %4092 = vrot.lane.b32.xlu0 %v3680, 64
        %v4093 = vpop.permute.xlu0 %4092
        %4094 = vrot.lane.b32.xlu0 %v3681, 64
        %v4095 = vpop.permute.xlu0 %4094
        %4096 = vrot.lane.b32.xlu0 %v3682, 64
        %v4097 = vpop.permute.xlu0 %4096
        %4098 = vrot.lane.b32.xlu0 %v3683, 64
        %v4099 = vpop.permute.xlu0 %4098
        %v4132 = vsel %vm2174, %v3748, %v3909
        %v4133 = vsel %vm2174, %v3749, %v3911
        %v4134 = vsel %vm2174, %v3750, %v3913
        %v4135 = vsel %vm2174, %v3751, %v3915
        %v4136 = vsel %vm2174, %v3752, %v3917
        %v4137 = vsel %vm2174, %v3753, %v3919
        %v4138 = vsel %vm2174, %v3754, %v3921
        %v4139 = vsel %vm2174, %v3755, %v3923
        %v4140 = vsel %vm2174, %v3756, %v3925
        %v4141 = vsel %vm2174, %v3757, %v3927
        %v4142 = vsel %vm2174, %v3758, %v3929
        %v4143 = vsel %vm2174, %v3759, %v3931
        %v4144 = vsel %vm2174, %v3760, %v3933
        %v4145 = vsel %vm2174, %v3761, %v3935
        %v4146 = vsel %vm2174, %v3762, %v3937
        %v4147 = vsel %vm2174, %v3763, %v3939
        %v4148 = vsel %vm2174, %v3764, %v3941
        %v4149 = vsel %vm2174, %v3765, %v3943
        %v4150 = vsel %vm2174, %v3766, %v3945
        %v4151 = vsel %vm2174, %v3767, %v3947
        %v4152 = vsel %vm2174, %v3768, %v3949
        %v4153 = vsel %vm2174, %v3769, %v3951
        %v4154 = vsel %vm2174, %v3770, %v3953
        %v4155 = vsel %vm2174, %v3771, %v3955
        %v4156 = vsel %vm2174, %v3772, %v3957
        %v4157 = vsel %vm2174, %v3773, %v3959
        %v4158 = vsel %vm2174, %v3774, %v3961
        %v4159 = vsel %vm2174, %v3775, %v3963
        %v4160 = vsel %vm2174, %v3776, %v3965
        %v4161 = vsel %vm2174, %v3777, %v3967
        %v4162 = vsel %vm2174, %v3778, %v3969
        %v4163 = vsel %vm2174, %v3779, %v3971
        %v4164 = vsel %vm2207, %v4132, %v4037
        %v4165 = vsel %vm2207, %v4133, %v4039
        %v4166 = vsel %vm2207, %v4134, %v4041
        %v4167 = vsel %vm2207, %v4135, %v4043
        %v4168 = vsel %vm2207, %v4136, %v4045
        %v4169 = vsel %vm2207, %v4137, %v4047
        %v4170 = vsel %vm2207, %v4138, %v4049
        %v4171 = vsel %vm2207, %v4139, %v4051
        %v4172 = vsel %vm2207, %v4140, %v4053
        %v4173 = vsel %vm2207, %v4141, %v4055
        %v4174 = vsel %vm2207, %v4142, %v4057
        %v4175 = vsel %vm2207, %v4143, %v4059
        %v4176 = vsel %vm2207, %v4144, %v4061
        %v4177 = vsel %vm2207, %v4145, %v4063
        %v4178 = vsel %vm2207, %v4146, %v4065
        %v4179 = vsel %vm2207, %v4147, %v4067
        %v4180 = vsel %vm2207, %v4148, %v4069
        %v4181 = vsel %vm2207, %v4149, %v4071
        %v4182 = vsel %vm2207, %v4150, %v4073
        %v4183 = vsel %vm2207, %v4151, %v4075
        %v4184 = vsel %vm2207, %v4152, %v4077
        %v4185 = vsel %vm2207, %v4153, %v4079
        %v4186 = vsel %vm2207, %v4154, %v4081
        %v4187 = vsel %vm2207, %v4155, %v4083
        %v4188 = vsel %vm2207, %v4156, %v4085
        %v4189 = vsel %vm2207, %v4157, %v4087
        %v4190 = vsel %vm2207, %v4158, %v4089
        %v4191 = vsel %vm2207, %v4159, %v4091
        %v4192 = vsel %vm2207, %v4160, %v4093
        %v4193 = vsel %vm2207, %v4161, %v4095
        %v4194 = vsel %vm2207, %v4162, %v4097
        %v4195 = vsel %vm2207, %v4163, %v4099
        %v4196 = vpack.c.bf16 %v4165, %v4164
        %v4197 = vpack.c.bf16 %v4167, %v4166
        %v4198 = vpack.c.bf16 %v4169, %v4168
        %v4199 = vpack.c.bf16 %v4171, %v4170
        %v4200 = vpack.c.bf16 %v4173, %v4172
        %v4201 = vpack.c.bf16 %v4175, %v4174
        %v4202 = vpack.c.bf16 %v4177, %v4176
        %v4203 = vpack.c.bf16 %v4179, %v4178
        %v4204 = vpack.c.bf16 %v4181, %v4180
        %v4205 = vpack.c.bf16 %v4183, %v4182
        %v4206 = vpack.c.bf16 %v4185, %v4184
        %v4207 = vpack.c.bf16 %v4187, %v4186
        %v4208 = vpack.c.bf16 %v4189, %v4188
        %v4209 = vpack.c.bf16 %v4191, %v4190
        %v4210 = vpack.c.bf16 %v4193, %v4192
        %v4211 = vpack.c.bf16 %v4195, %v4194
        %v4212 = vld [vmem:[%s11] sm:$0xf]
        %v4213 = vld [vmem:[%s11 + $0x4] sm:$0xf]
        %v4214 = vld [vmem:[%s11 + $0x8] sm:$0xf]
        %v4215 = vld [vmem:[%s11 + $0xc] sm:$0xf]
        %v4216 = vld [vmem:[%s11 + $0x10] sm:$0xf]
        %v4217 = vld [vmem:[%s11 + $0x14] sm:$0xf]
        %v4218 = vld [vmem:[%s11 + $0x18] sm:$0xf]
        %v4219 = vld [vmem:[%s11 + $0x1c] sm:$0xf]
        %v4220 = vld [vmem:[%s11 + $0x20] sm:$0xf]
        %v4221 = vld [vmem:[%s11 + $0x24] sm:$0xf]
        %v4222 = vld [vmem:[%s11 + $0x28] sm:$0xf]
        %v4223 = vld [vmem:[%s11 + $0x2c] sm:$0xf]
        %v4224 = vld [vmem:[#allocation17] sm:$0x1]
        %v4226 = vlaneseq
        %v4227 = vshrl.u32 %v4226, 7
        %v4228 = vsub.s32 0, %v4227
        %v4229 = vrot.slane %v4224, %v4228
        %v4243 = vunpack.c.l.b16 %v4212
        %v4244 = vunpack.c.l.b16 %v4213
        %v4245 = vunpack.c.l.b16 %v4214
        %v4246 = vunpack.c.l.b16 %v4215
        %v4247 = vunpack.c.l.b16 %v4216
        %v4248 = vunpack.c.l.b16 %v4217
        %v4249 = vunpack.c.l.b16 %v4218
        %v4250 = vunpack.c.l.b16 %v4219
        %v4251 = vunpack.c.l.b16 %v4220
        %v4252 = vunpack.c.l.b16 %v4221
        %v4253 = vunpack.c.l.b16 %v4222
        %v4254 = vunpack.c.l.b16 %v4223
        %v4255 = vpack.c.b16 %v4244, %v4243
        %v4256 = vpack.c.b16 %v4246, %v4245
        %v4257 = vpack.c.b16 %v4248, %v4247
        %v4258 = vpack.c.b16 %v4250, %v4249
        %v4259 = vpack.c.b16 %v4252, %v4251
        %v4260 = vpack.c.b16 %v4254, %v4253
        %v4268 = vsel %vm2311, %v4196, 0
        %v4271 = vsel %vm2311, %v4197, 0
        %v4274 = vsel %vm2311, %v4198, 0
        %v4277 = vsel %vm2311, %v4199, 0
        %v4280 = vsel %vm2311, %v4200, 0
        %v4283 = vsel %vm2311, %v4201, 0
        %v4286 = vsel %vm2311, %v4202, 0
        %v4289 = vsel %vm2311, %v4203, 0
        %v4292 = vsel %vm2311, %v4204, 0
        %v4295 = vsel %vm2311, %v4205, 0
        %v4298 = vsel %vm2311, %v4206, 0
        %v4301 = vsel %vm2311, %v4207, 0
        %v4304 = vsel %vm2311, %v4208, 0
        %v4307 = vsel %vm2311, %v4209, 0
        %v4310 = vsel %vm2311, %v4210, 0
        %v4313 = vsel %vm2311, %v4211, 0
        %4315 = vmatprep.subr.bf16.mxu0 0
        %4316 = vmatpush1.bf16.msra.mxu0 %v4255
        %4317 = vmatprep.subr.bf16.mxu0 0
        %4318 = vmatpush1.bf16.msra.mxu0 %v4256
        %4319 = vmatprep.subr.bf16.mxu0 0
        %4320 = vmatpush1.bf16.msra.mxu0 %v4257
        %4321 = vmatprep.subr.bf16.mxu0 0
        %4322 = vmatpush1.bf16.msra.mxu0 %v4258
        %4323 = vmatprep.subr.bf16.mxu0 0
        %4324 = vmatpush1.bf16.msra.mxu0 %v4259
        %4325 = vmatprep.subr.bf16.mxu0 0
        %4326 = vmatpush1.bf16.msra.mxu0 %v4260
        %4327 = vmatprep.subr.bf16.mxu0 0
        %4328 = vmatpush1.bf16.msra.mxu0 0
        %4329 = vmatprep.subr.bf16.mxu0 0
        %4330 = vmatpush1.bf16.msra.mxu0 0
        %4331 = vmatprep.subr.bf16.mxu0 0
        %4332 = vmatpush1.bf16.msra.mxu0 0
        %4333 = vmatprep.subr.bf16.mxu0 0
        %4334 = vmatpush1.bf16.msra.mxu0 0
        %4335 = vmatprep.subr.bf16.mxu0 0
        %4336 = vmatpush1.bf16.msra.mxu0 0
        %4337 = vmatprep.subr.bf16.mxu0 0
        %4338 = vmatpush1.bf16.msra.mxu0 0
        %4339 = vmatprep.subr.bf16.mxu0 0
        %4340 = vmatpush1.bf16.msra.mxu0 0
        %4341 = vmatprep.subr.bf16.mxu0 0
        %4342 = vmatpush1.bf16.msra.mxu0 0
        %4343 = vmatprep.subr.bf16.mxu0 0
        %4344 = vmatpush1.bf16.msra.mxu0 0
        %4345 = vmatprep.subr.bf16.mxu0 0
        %4346 = vmatpush1.bf16.msra.mxu0 0
        %4347 = vmatprep.mubr.bf16.mxu0 0
        %4348 = vmatmul.mubr.bf16.gmra.mrb[0].mxu0 %v4268
        %v4349 = vpop.f32.mrb[0].mxu0
        %v4350 = vadd.f32 %v4229, %v4349
        %v4351 = vpop.f32.mrb[0].mxu0
        %v4352 = vpop.f32.mrb[0].mxu0
        %v4353 = vadd.f32 %v4229, %v4352
        %v4354 = vpop.f32.mrb[0].mxu0
        %4355 = vmatprep.mubr.bf16.mxu0 0
        %4356 = vmatmul.mubr.bf16.gmra.mrb[0].mxu0 %v4271
        %v4357 = vpop.f32.mrb[0].mxu0
        %v4358 = vadd.f32 %v4229, %v4357
        %v4359 = vpop.f32.mrb[0].mxu0
        %v4360 = vpop.f32.mrb[0].mxu0
        %v4361 = vadd.f32 %v4229, %v4360
        %v4362 = vpop.f32.mrb[0].mxu0
        %4363 = vmatprep.mubr.bf16.mxu0 0
        %4364 = vmatmul.mubr.bf16.gmra.mrb[0].mxu0 %v4274
        %v4365 = vpop.f32.mrb[0].mxu0
        %v4366 = vadd.f32 %v4229, %v4365
        %v4367 = vpop.f32.mrb[0].mxu0
        %v4368 = vpop.f32.mrb[0].mxu0
        %v4369 = vadd.f32 %v4229, %v4368
        %v4370 = vpop.f32.mrb[0].mxu0
        %4371 = vmatprep.mubr.bf16.mxu0 0
        %4372 = vmatmul.mubr.bf16.gmra.mrb[0].mxu0 %v4277
        %v4373 = vpop.f32.mrb[0].mxu0
        %v4374 = vadd.f32 %v4229, %v4373
        %v4375 = vpop.f32.mrb[0].mxu0
        %v4376 = vpop.f32.mrb[0].mxu0
        %v4377 = vadd.f32 %v4229, %v4376
        %v4378 = vpop.f32.mrb[0].mxu0
        %4379 = vmatprep.mubr.bf16.mxu0 0
        %4380 = vmatmul.mubr.bf16.gmra.mrb[0].mxu0 %v4280
        %v4381 = vpop.f32.mrb[0].mxu0
        %v4382 = vadd.f32 %v4229, %v4381
        %v4383 = vpop.f32.mrb[0].mxu0
        %v4384 = vpop.f32.mrb[0].mxu0
        %v4385 = vadd.f32 %v4229, %v4384
        %v4386 = vpop.f32.mrb[0].mxu0
        %4387 = vmatprep.mubr.bf16.mxu0 0
        %4388 = vmatmul.mubr.bf16.gmra.mrb[0].mxu0 %v4283
        %v4389 = vpop.f32.mrb[0].mxu0
        %v4390 = vadd.f32 %v4229, %v4389
        %v4391 = vpop.f32.mrb[0].mxu0
        %v4392 = vpop.f32.mrb[0].mxu0
        %v4393 = vadd.f32 %v4229, %v4392
        %v4394 = vpop.f32.mrb[0].mxu0
        %4395 = vmatprep.mubr.bf16.mxu0 0
        %4396 = vmatmul.mubr.bf16.gmra.mrb[0].mxu0 %v4286
        %v4397 = vpop.f32.mrb[0].mxu0
        %v4398 = vadd.f32 %v4229, %v4397
        %v4399 = vpop.f32.mrb[0].mxu0
        %v4400 = vpop.f32.mrb[0].mxu0
        %v4401 = vadd.f32 %v4229, %v4400
        %v4402 = vpop.f32.mrb[0].mxu0
        %4403 = vmatprep.mubr.bf16.mxu0 0
        %4404 = vmatmul.mubr.bf16.gmra.mrb[0].mxu0 %v4289
        %v4405 = vpop.f32.mrb[0].mxu0
        %v4406 = vadd.f32 %v4229, %v4405
        %v4407 = vpop.f32.mrb[0].mxu0
        %v4408 = vpop.f32.mrb[0].mxu0
        %v4409 = vadd.f32 %v4229, %v4408
        %v4410 = vpop.f32.mrb[0].mxu0
        %4411 = vmatprep.mubr.bf16.mxu0 0
        %4412 = vmatmul.mubr.bf16.gmra.mrb[0].mxu0 %v4292
        %v4413 = vpop.f32.mrb[0].mxu0
        %v4414 = vadd.f32 %v4229, %v4413
        %v4415 = vpop.f32.mrb[0].mxu0
        %v4416 = vpop.f32.mrb[0].mxu0
        %v4417 = vadd.f32 %v4229, %v4416
        %v4418 = vpop.f32.mrb[0].mxu0
        %4419 = vmatprep.mubr.bf16.mxu0 0
        %4420 = vmatmul.mubr.bf16.gmra.mrb[0].mxu0 %v4295
        %v4421 = vpop.f32.mrb[0].mxu0
        %v4422 = vadd.f32 %v4229, %v4421
        %v4423 = vpop.f32.mrb[0].mxu0
        %v4424 = vpop.f32.mrb[0].mxu0
        %v4425 = vadd.f32 %v4229, %v4424
        %v4426 = vpop.f32.mrb[0].mxu0
        %4427 = vmatprep.mubr.bf16.mxu0 0
        %4428 = vmatmul.mubr.bf16.gmra.mrb[0].mxu0 %v4298
        %v4429 = vpop.f32.mrb[0].mxu0
        %v4430 = vadd.f32 %v4229, %v4429
        %v4431 = vpop.f32.mrb[0].mxu0
        %v4432 = vpop.f32.mrb[0].mxu0
        %v4433 = vadd.f32 %v4229, %v4432
        %v4434 = vpop.f32.mrb[0].mxu0
        %4435 = vmatprep.mubr.bf16.mxu0 0
        %4436 = vmatmul.mubr.bf16.gmra.mrb[0].mxu0 %v4301
        %v4437 = vpop.f32.mrb[0].mxu0
        %v4438 = vadd.f32 %v4229, %v4437
        %v4439 = vpop.f32.mrb[0].mxu0
        %v4440 = vpop.f32.mrb[0].mxu0
        %v4441 = vadd.f32 %v4229, %v4440
        %v4442 = vpop.f32.mrb[0].mxu0
        %4443 = vmatprep.mubr.bf16.mxu0 0
        %4444 = vmatmul.mubr.bf16.gmra.mrb[0].mxu0 %v4304
        %v4445 = vpop.f32.mrb[0].mxu0
        %v4446 = vadd.f32 %v4229, %v4445
        %v4447 = vpop.f32.mrb[0].mxu0
        %v4448 = vpop.f32.mrb[0].mxu0
        %v4449 = vadd.f32 %v4229, %v4448
        %v4450 = vpop.f32.mrb[0].mxu0
        %4451 = vmatprep.mubr.bf16.mxu0 0
        %4452 = vmatmul.mubr.bf16.gmra.mrb[0].mxu0 %v4307
        %v4453 = vpop.f32.mrb[0].mxu0
        %v4454 = vadd.f32 %v4229, %v4453
        %v4455 = vpop.f32.mrb[0].mxu0
        %v4456 = vpop.f32.mrb[0].mxu0
        %v4457 = vadd.f32 %v4229, %v4456
        %v4458 = vpop.f32.mrb[0].mxu0
        %4459 = vmatprep.mubr.bf16.mxu0 0
        %4460 = vmatmul.mubr.bf16.gmra.mrb[0].mxu0 %v4310
        %v4461 = vpop.f32.mrb[0].mxu0
        %v4462 = vadd.f32 %v4229, %v4461
        %v4463 = vpop.f32.mrb[0].mxu0
        %v4464 = vpop.f32.mrb[0].mxu0
        %v4465 = vadd.f32 %v4229, %v4464
        %v4466 = vpop.f32.mrb[0].mxu0
        %4467 = vmatprep.mubr.bf16.mxu0 0
        %4468 = vmatmul.mubr.bf16.gmra.mrb[0].mxu0 %v4313
        %v4469 = vpop.f32.mrb[0].mxu0
        %v4470 = vadd.f32 %v4229, %v4469
        %v4471 = vpop.f32.mrb[0].mxu0
        %v4472 = vpop.f32.mrb[0].mxu0
        %v4473 = vadd.f32 %v4229, %v4472
        %v4474 = vpop.f32.mrb[0].mxu0
        %4475 = vdwg.mxu0
        %v4476 = vmax.f32 %v4350, 0.0
        %v4477 = vmax.f32 %v4353, 0.0
        %v4478 = vmax.f32 %v4358, 0.0
        %v4479 = vmax.f32 %v4361, 0.0
        %v4480 = vmax.f32 %v4366, 0.0
        %v4481 = vmax.f32 %v4369, 0.0
        %v4482 = vmax.f32 %v4374, 0.0
        %v4483 = vmax.f32 %v4377, 0.0
        %v4484 = vmax.f32 %v4382, 0.0
        %v4485 = vmax.f32 %v4385, 0.0
        %v4486 = vmax.f32 %v4390, 0.0
        %v4487 = vmax.f32 %v4393, 0.0
        %v4488 = vmax.f32 %v4398, 0.0
        %v4489 = vmax.f32 %v4401, 0.0
        %v4490 = vmax.f32 %v4406, 0.0
        %v4491 = vmax.f32 %v4409, 0.0
        %v4492 = vmax.f32 %v4414, 0.0
        %v4493 = vmax.f32 %v4417, 0.0
        %v4494 = vmax.f32 %v4422, 0.0
        %v4495 = vmax.f32 %v4425, 0.0
        %v4496 = vmax.f32 %v4430, 0.0
        %v4497 = vmax.f32 %v4433, 0.0
        %v4498 = vmax.f32 %v4438, 0.0
        %v4499 = vmax.f32 %v4441, 0.0
        %v4500 = vmax.f32 %v4446, 0.0
        %v4501 = vmax.f32 %v4449, 0.0
        %v4502 = vmax.f32 %v4454, 0.0
        %v4503 = vmax.f32 %v4457, 0.0
        %v4504 = vmax.f32 %v4462, 0.0
        %v4505 = vmax.f32 %v4465, 0.0
        %v4506 = vmax.f32 %v4470, 0.0
        %v4507 = vmax.f32 %v4473, 0.0
        %v4508 = vadd.f32 %v4476, %v2821
        %v4509 = vadd.f32 %v4477, %v2822
        %v4510 = vadd.f32 %v4478, %v2823
        %v4511 = vadd.f32 %v4479, %v2824
        %v4512 = vadd.f32 %v4480, %v2825
        %v4513 = vadd.f32 %v4481, %v2826
        %v4514 = vadd.f32 %v4482, %v2827
        %v4515 = vadd.f32 %v4483, %v2828
        %v4516 = vadd.f32 %v4484, %v2829
        %v4517 = vadd.f32 %v4485, %v2830
        %v4518 = vadd.f32 %v4486, %v2831
        %v4519 = vadd.f32 %v4487, %v2832
        %v4520 = vadd.f32 %v4488, %v2833
        %v4521 = vadd.f32 %v4489, %v2834
        %v4522 = vadd.f32 %v4490, %v2835
        %v4523 = vadd.f32 %v4491, %v2836
        %v4524 = vadd.f32 %v4492, %v2837
        %v4525 = vadd.f32 %v4493, %v2838
        %v4526 = vadd.f32 %v4494, %v2839
        %v4527 = vadd.f32 %v4495, %v2840
        %v4528 = vadd.f32 %v4496, %v2841
        %v4529 = vadd.f32 %v4497, %v2842
        %v4530 = vadd.f32 %v4498, %v2843
        %v4531 = vadd.f32 %v4499, %v2844
        %v4532 = vadd.f32 %v4500, %v2845
        %v4533 = vadd.f32 %v4501, %v2846
        %v4534 = vadd.f32 %v4502, %v2847
        %v4535 = vadd.f32 %v4503, %v2848
        %v4536 = vadd.f32 %v4504, %v2849
        %v4537 = vadd.f32 %v4505, %v2850
        %v4538 = vadd.f32 %v4506, %v2851
        %v4539 = vadd.f32 %v4507, %v2852
        %v4540 = vmax.f32 %v4508, 0.0
        %v4541 = vmax.f32 %v4509, 0.0
        %v4542 = vmax.f32 %v4510, 0.0
        %v4543 = vmax.f32 %v4511, 0.0
        %v4544 = vmax.f32 %v4512, 0.0
        %v4545 = vmax.f32 %v4513, 0.0
        %v4546 = vmax.f32 %v4514, 0.0
        %v4547 = vmax.f32 %v4515, 0.0
        %v4548 = vmax.f32 %v4516, 0.0
        %v4549 = vmax.f32 %v4517, 0.0
        %v4550 = vmax.f32 %v4518, 0.0
        %v4551 = vmax.f32 %v4519, 0.0
        %v4552 = vmax.f32 %v4520, 0.0
        %v4553 = vmax.f32 %v4521, 0.0
        %v4554 = vmax.f32 %v4522, 0.0
        %v4555 = vmax.f32 %v4523, 0.0
        %v4556 = vmax.f32 %v4524, 0.0
        %v4557 = vmax.f32 %v4525, 0.0
        %v4558 = vmax.f32 %v4526, 0.0
        %v4559 = vmax.f32 %v4527, 0.0
        %v4560 = vmax.f32 %v4528, 0.0
        %v4561 = vmax.f32 %v4529, 0.0
        %v4562 = vmax.f32 %v4530, 0.0
        %v4563 = vmax.f32 %v4531, 0.0
        %v4564 = vmax.f32 %v4532, 0.0
        %v4565 = vmax.f32 %v4533, 0.0
        %v4566 = vmax.f32 %v4534, 0.0
        %v4567 = vmax.f32 %v4535, 0.0
        %v4568 = vmax.f32 %v4536, 0.0
        %v4569 = vmax.f32 %v4537, 0.0
        %v4570 = vmax.f32 %v4538, 0.0
        %v4571 = vmax.f32 %v4539, 0.0
        %v4572 = vld [vmem:[#allocation19] sm:$0x1]
        %v4573 = vpack.c.bf16 %v4541, %v4540
        %v4574 = vpack.c.bf16 %v4543, %v4542
        %v4575 = vpack.c.bf16 %v4545, %v4544
        %v4576 = vpack.c.bf16 %v4547, %v4546
        %v4577 = vpack.c.bf16 %v4549, %v4548
        %v4578 = vpack.c.bf16 %v4551, %v4550
        %v4579 = vpack.c.bf16 %v4553, %v4552
        %v4580 = vpack.c.bf16 %v4555, %v4554
        %v4581 = vpack.c.bf16 %v4557, %v4556
        %v4582 = vpack.c.bf16 %v4559, %v4558
        %v4583 = vpack.c.bf16 %v4561, %v4560
        %v4584 = vpack.c.bf16 %v4563, %v4562
        %v4585 = vpack.c.bf16 %v4565, %v4564
        %v4586 = vpack.c.bf16 %v4567, %v4566
        %v4587 = vpack.c.bf16 %v4569, %v4568
        %v4588 = vpack.c.bf16 %v4571, %v4570
        %v4589 = vld [vmem:[#allocation2] sm:$0x1]
        %4591 = vset.pattern.permute.xlu0 0
        %4592 = vperm.xlu0 %4591, %v4589
        %v4593 = vpop.permute.xlu0 %4592
        %v4595 = vlaneseq
        %v4596 = vshrl.u32 %v4595, 7
        %v4597 = vsub.s32 0, %v4596
        %v4598 = vrot.slane %v4593, %v4597
        %v4600 = vsel %vm2174, %v4572, 0
        %v4603 = vsel %vm2174, %v4573, 0
        %v4606 = vsel %vm2174, %v4574, 0
        %v4609 = vsel %vm2174, %v4575, 0
        %v4612 = vsel %vm2174, %v4576, 0
        %v4615 = vsel %vm2174, %v4577, 0
        %v4618 = vsel %vm2174, %v4578, 0
        %v4621 = vsel %vm2174, %v4579, 0
        %v4624 = vsel %vm2174, %v4580, 0
        %v4627 = vsel %vm2174, %v4581, 0
        %v4630 = vsel %vm2174, %v4582, 0
        %v4633 = vsel %vm2174, %v4583, 0
        %v4636 = vsel %vm2174, %v4584, 0
        %v4639 = vsel %vm2174, %v4585, 0
        %v4642 = vsel %vm2174, %v4586, 0
        %v4645 = vsel %vm2174, %v4587, 0
        %v4648 = vsel %vm2174, %v4588, 0
        %4650 = vmatprep.subr.bf16.mxu0 0
        %4651 = vmatpush1.bf16.xpose.msra.mxu0 %v4603
        %4652 = vmatprep.subr.bf16.mxu0 0
        %4653 = vmatpush1.bf16.xpose.msra.mxu0 %v4606
        %4654 = vmatprep.subr.bf16.mxu0 0
        %4655 = vmatpush1.bf16.xpose.msra.mxu0 %v4609
        %4656 = vmatprep.subr.bf16.mxu0 0
        %4657 = vmatpush1.bf16.xpose.msra.mxu0 %v4612
        %4658 = vmatprep.subr.bf16.mxu0 0
        %4659 = vmatpush1.bf16.xpose.msra.mxu0 %v4615
        %4660 = vmatprep.subr.bf16.mxu0 0
        %4661 = vmatpush1.bf16.xpose.msra.mxu0 %v4618
        %4662 = vmatprep.subr.bf16.mxu0 0
        %4663 = vmatpush1.bf16.xpose.msra.mxu0 %v4621
        %4664 = vmatprep.subr.bf16.mxu0 0
        %4665 = vmatpush1.bf16.xpose.msra.mxu0 %v4624
        %4666 = vmatprep.subr.bf16.mxu0 0
        %4667 = vmatpush1.bf16.xpose.msra.mxu0 %v4627
        %4668 = vmatprep.subr.bf16.mxu0 0
        %4669 = vmatpush1.bf16.xpose.msra.mxu0 %v4630
        %4670 = vmatprep.subr.bf16.mxu0 0
        %4671 = vmatpush1.bf16.xpose.msra.mxu0 %v4633
        %4672 = vmatprep.subr.bf16.mxu0 0
        %4673 = vmatpush1.bf16.xpose.msra.mxu0 %v4636
        %4674 = vmatprep.subr.bf16.mxu0 0
        %4675 = vmatpush1.bf16.xpose.msra.mxu0 %v4639
        %4676 = vmatprep.subr.bf16.mxu0 0
        %4677 = vmatpush1.bf16.xpose.msra.mxu0 %v4642
        %4678 = vmatprep.subr.bf16.mxu0 0
        %4679 = vmatpush1.bf16.xpose.msra.mxu0 %v4645
        %4680 = vmatprep.subr.bf16.mxu0 0
        %4681 = vmatpush1.bf16.xpose.msra.mxu0 %v4648
        %4682 = vmatprep.mubr.bf16.mxu0 0
        %4683 = vmatmul.mubr.bf16.gmra.mrb[0].mxu0 %v4600
        %v4684 = vpop.f32.mrb[0].mxu0
        %v4685 = vadd.f32 %v4598, %v4684
        %v4686 = vpop.f32.mrb[0].mxu0
        %v4687 = vadd.f32 %v4598, %v4686
        %v4688 = vpop.f32.mrb[0].mxu0
        %v4689 = vpop.f32.mrb[0].mxu0
        %4690 = vdwg.mxu0
        %v4693 = vcombine.low %v4685, %v4687
        %v4695 = vunpack.c.l.s4 1966171168
        %v4696 = vunpack.c.0.s8 %v4695
        %v4697 = vlaneseq
        %v4698 = vshrl.u32 %v4697, 7
        %v4699 = vsub.s32 %v4696, %v4698
        %v4700 = vrot.slane %v4693, %v4699
        %v4702 = vunpack.c.l.s4 1966171168
        %v4703 = vunpack.c.0.s8 %v4702
        %v4704 = vlaneseq
        %v4705 = vshrl.u32 %v4704, 7
        %v4706 = vsub.s32 %v4703, %v4705
        %v4707 = vrot.slane %v4700, %v4706
        %v4709 = vlaneseq
        %vm4710 = vcmp.ge.s32.totalorder %v4709, 0
        %vm4711 = vcmp.lt.s32.totalorder %v4709, 256
        %vm4712 = vmand %vm4710, %vm4711
        %4713 = vst.msk [vmem:[%s642] sm:$0x3] %vm4712, %v4707
        %p4714 = scmp.lt.s32.totalorder %s34, 1
        %s4715 = scalar_select %p4714, %s34, 1
        %s4716 = smul.addr %s4715, 2
        %s4717 = scalar_lea.vmem %s15, %s4716
        // Predicated region
        $region125: #{_lambda_.1} parent=79 // pred_check
          %p4718 = pneg %p372
        $region126: #{_lambda_.1} parent=79 // pred_check_branch
          %4720 = sbr.rel (%p4718) target = $region128
        $region127: #{_lambda_.1} parent=79 // pred_region
          _
        $region128: #{_lambda_.1} parent=79 // pred_fallthru
          _
      $region80: #{_lambda_.1} parent=5 // pred_fallthru
        _
      %p4721 = scmp.le.s32.totalorder 2, %s29
      // Predicated region
      $region129: #{_lambda_.1} parent=5 // pred_check
        %p4722 = pneg %p4721
      $region130: #{_lambda_.1} parent=5 // pred_check_branch
        %4724 = sbr.rel (%p4722) target = $region132
      $region131: #{_lambda_.1} parent=5 // pred_region
        %s4725 = ssub.s32 %s29, 2
        // Predicated region
        $region133: #{_lambda_.1} parent=131 // pred_check
          %p4726 = pneg %p378
        $region134: #{_lambda_.1} parent=131 // pred_check_branch
          %4728 = sbr.rel (%p4726) target = $region136
        $region135: #{_lambda_.1} parent=131 // pred_region
          %p4729 = scmp.lt.s32.totalorder %s35, 1
          %s4730 = scalar_select %p4729, %s35, 1
          %s4731 = smul.addr %s4730, 2
          %s4732 = scalar_lea.vmem %s15, %s4731
        $region136: #{_lambda_.1} parent=131 // pred_fallthru
          _
      $region132: #{_lambda_.1} parent=5 // pred_fallthru
        _
    $region6: #{_lambda_.1} parent=1 // loop_footer
      %s33 = sadd.s32 1, %s29
    $region7: #{_lambda_.1} parent=1 // loop_footer_branch
      %28 = sbr.rel target = $region3
    $region8: #{_lambda_.1} parent=1 // loop_exit
      _
    %4733 = vsyncpa [#allocation4], 1
    %s4734 = scalar_lea.sflag [#allocation4], 1
    %4735 = vsyncpa %s4734, 1
    %4736 = vsyncpa [#allocation6], 1
    %4737 = vsyncpa [#allocation9], 1
    %4738 = vsyncpa [#allocation12], 1
    %4739 = vsyncpa [#allocation15], 1
    %4740 = vsyncpa [#allocation18], 1

</llo_original>
